<compile_context>
chip_gen: v7x
topology: tpu7x:2x2x1
jax: 0.10.0
libtpu: 0.0.40
codegen_flags: <defaults>
</compile_context>

<pallas_src>
import functools

import jax
import jax.numpy as jnp
from jax import lax
from jax.experimental import pallas as pl
from jax.experimental.pallas import tpu as pltpu


# tap t = kh*3 + kw  ->  spatial offset (dh, dw) = (kh-1, kw-1)
_TAPS = tuple((kh - 1, kw - 1) for kh in range(3) for kw in range(3))


def _shift(x, dh, dw, W, HW, mask_t):
    """shifted[:, h*W + w] = x[:, (h+dh)*W + (w+dw)], zero outside the image."""
    s = dh * W + dw
    r = x if s == 0 else pltpu.roll(x, (-s) % HW, axis=1)   # XLU lane rotation
    return r if mask_t is None else r * mask_t


# ----------------------------------------------------------------------------- kernel
def cgf_kernel(de_ref, dx_ref, rgb_ref,
               w1de_ref, w1dx_ref, w2_ref, mask_ref,
               scale1_ref, shift1_ref, b2_ref,
               wmask_ref, wcm1_ref, ln_g_ref, ln_b_ref, wcm2_ref,
               o_ref, *, W, approx):
    HW = o_ref.shape[1]
    cdt = w1de_ref.dtype                     # MXU compute dtype (bf16 or f32)

    # 9 border-valid tap masks, precomputed in the wrapper (f32), cast once per tap.
    masks_f32 = mask_ref[...]                # (9, HW)
    mask_list = [None if (dh == 0 and dw == 0)
                 else masks_f32[t:t + 1, :].astype(cdt)
                 for t, (dh, dw) in enumerate(_TAPS)]

    de = de_ref[...].astype(cdt)             # (C, HW) activations in compute dtype
    dx = dx_ref[...].astype(cdt)             # (C, HW)

    # ---- conv1 (2C->2C): 9 per-tap accumulated MXU matmuls; weight pre-split per
    #      input half so the channel concat is never materialized.
    acc1 = None
    for t, (dh, dw) in enumerate(_TAPS):
        sa = _shift(de, dh, dw, W, HW, mask_list[t])
        sb = _shift(dx, dh, dw, W, HW, mask_list[t])
        term = (jnp.dot(w1de_ref[t], sa, preferred_element_type=jnp.float32)
                + jnp.dot(w1dx_ref[t], sb, preferred_element_type=jnp.float32))
        acc1 = term if acc1 is None else acc1 + term         # f32 (2C, HW)

    # folded eval-BN (+ conv1 bias) and ReLU
    g1 = jnp.maximum(acc1 * scale1_ref[...] + shift1_ref[...], 0.0)   # f32 (2C, HW)
    g1c = g1.astype(cdt)

    # ---- conv2 (2C->C): per-tap accumulated MXU matmuls
    acc2 = None
    for t, (dh, dw) in enumerate(_TAPS):
        sx = _shift(g1c, dh, dw, W, HW, mask_list[t])
        term = jnp.dot(w2_ref[t], sx, preferred_element_type=jnp.float32)
        acc2 = term if acc2 is None else acc2 + term
    depth = acc2 + b2_ref[...]                               # f32 (C, HW)

    # ---- DAM spatial pool (routed through the otherwise-idle MXU, kept f32)
    logits = jnp.dot(wmask_ref[...], depth,
                     preferred_element_type=jnp.float32)     # (1, HW)
    m = jnp.max(logits, axis=1, keepdims=True)
    e = jnp.exp(logits - m)
    denom = jnp.sum(e, axis=1, keepdims=True)                # (1, 1)
    # ctx = depth @ softmax(logits)^T  ==  (depth @ e^T) * (1/denom)
    ctx_un = lax.dot_general(depth, e, (((1,), (1,)), ((), ())),
                             preferred_element_type=jnp.float32)      # (C, 1)
    inv_denom = pl.reciprocal(denom, approx=True) if approx else 1.0 / denom
    ctx = ctx_un * inv_denom

    # ---- channel_mul_conv: 1x1 -> LayerNorm(C) -> ReLU -> 1x1 -> sigmoid  (f32)
    t1 = jnp.dot(wcm1_ref[...], ctx, preferred_element_type=jnp.float32)   # (C, 1)
    mu = jnp.mean(t1, axis=0, keepdims=True)
    var = jnp.mean((t1 - mu) ** 2, axis=0, keepdims=True)
    inv_std = lax.rsqrt(var + 1e-5) if approx else 1.0 / jnp.sqrt(var + 1e-5)
    t1 = jnp.maximum((t1 - mu) * inv_std * ln_g_ref[...] + ln_b_ref[...], 0.0)
    cmul = jax.nn.sigmoid(jnp.dot(wcm2_ref[...], t1,
                                  preferred_element_type=jnp.float32))     # (C, 1)

    # ---- gating: single fused, lane-dense output store
    o_ref[...] = jax.nn.sigmoid(rgb_ref[...] * jax.nn.sigmoid(depth * cmul))


# ----------------------------------------------------------------------------- wrapper
def complementary_gated_fusion(from_depth_estimation, from_rgb,
                               from_depth_extraction, p,
                               matmul_dtype=jnp.bfloat16):
    """Inputs are NCHW float32 (PyTorch convention); output is NCHW float32."""
    B, C, H, W = from_depth_estimation.shape
    C2, HW = 2 * C, H * W
    mdt = matmul_dtype

    # NCHW -> (B, C, H*W): free reshape, no transpose / pad / concat in HBM.
    de2 = from_depth_estimation.reshape(B, C, HW)
    dx2 = from_depth_extraction.reshape(B, C, HW)
    rgb2 = from_rgb.reshape(B, C, HW)

    # conv weights per 3x3 tap: (Cout, Cin, 3, 3) -> (9, Cout, Cin).  conv1's input
    # channels are split into depth_estimation / depth_extraction halves so the
    # kernel never builds the channel concat.
    w1_taps = jnp.transpose(p['w1'], (2, 3, 0, 1)).reshape(9, C2, C2)
    w1_de = w1_taps[:, :, :C].astype(mdt)
    w1_dx = w1_taps[:, :, C:].astype(mdt)
    w2_taps = jnp.transpose(p['w2'], (2, 3, 0, 1)).reshape(9, C, C2).astype(mdt)

    # fold eval-mode BN + conv1 bias into a per-channel scale/shift (kept f32)
    bn_eps = 1e-5
    scale1_flat = p['bn_gamma'] / jnp.sqrt(p['bn_var'] + bn_eps)
    shift1_flat = p['bn_beta'] + (p['b1'] - p['bn_mean']) * scale1_flat
    scale1 = scale1_flat.reshape(C2, 1)
    shift1 = shift1_flat.reshape(C2, 1)
    b2 = p['b2'].reshape(C, 1)
    wmask_row = p['w_mask'].reshape(1, C)        # conv_mask (1,C,1,1) -> (1,C)
    wcm1 = p['w_cm1'][:, :, 0, 0]                # (C, C)
    wcm2 = p['w_cm2'][:, :, 0, 0]                # (C, C)
    ln_g = p['ln_gamma'].reshape(C, 1)
    ln_b = p['ln_beta'].reshape(C, 1)

    # border-valid masks for the 9 taps: computed ONCE here (reused by both convs
    # and every grid step) and passed as a (9, HW) constant input.
    pos = jnp.arange(HW, dtype=jnp.int32)
    hh, ww = pos // W, pos % W
    masks = jnp.stack(
        [((hh + dh >= 0) & (hh + dh < H) & (ww + dw >= 0) & (ww + dw < W))
         for dh, dw in _TAPS]).astype(jnp.float32)                      # (9, HW)

    def const(shape):
        nd = len(shape)
        # TODO(synk): at production sizes mark these pipeline_mode=pl.Buffered(1)
        #             (block index never changes, double-buffering them wastes VMEM).
        return pl.BlockSpec(shape, lambda b: (0,) * nd)

    kernel = functools.partial(cgf_kernel, W=W,
                               approx=(mdt == jnp.bfloat16))

    out_flat = pl.pallas_call(
        kernel,
        out_shape=jax.ShapeDtypeStruct((B, C, HW), jnp.float32),
        grid_spec=pltpu.PrefetchScalarGridSpec(
            num_scalar_prefetch=0,
            grid=(B,),
            in_specs=[
                pl.BlockSpec((None, C, HW), lambda b: (b, 0, 0)),   # depth_est
                pl.BlockSpec((None, C, HW), lambda b: (b, 0, 0)),   # depth_ext
                pl.BlockSpec((None, C, HW), lambda b: (b, 0, 0)),   # rgb
                const((9, C2, C)),          # conv1 weights, depth_est half
                const((9, C2, C)),          # conv1 weights, depth_ext half
                const((9, C, C2)),          # conv2 weights
                const((9, HW)),             # per-tap border masks
                const((C2, 1)),             # folded BN scale
                const((C2, 1)),             # folded BN shift (+ conv1 bias)
                const((C, 1)),              # conv2 bias
                const((1, C)),              # conv_mask weight (1x1)
                const((C, C)),              # channel_mul conv #1 (1x1)
                const((C, 1)),              # LayerNorm gamma
                const((C, 1)),              # LayerNorm beta
                const((C, C)),              # channel_mul conv #2 (1x1)
            ],
            out_specs=pl.BlockSpec((None, C, HW), lambda b: (b, 0, 0)),
        ),
        compiler_params=pltpu.CompilerParams(
            dimension_semantics=("parallel",)),   # batch axis -> megacore on v7x
    )(de2, dx2, rgb2, w1_de, w1_dx, w2_taps, masks, scale1, shift1, b2,
      wmask_row, wcm1, ln_g, ln_b, wcm2)

    return out_flat.reshape(B, C, H, W)           # back to NCHW (free reshape)


# ----------------------------------------------------------------------------- pure-JAX reference
def reference(from_depth_estimation, from_rgb, from_depth_extraction, p):
    to_nhwc = lambda x: jnp.transpose(x, (0, 2, 3, 1))

    def conv3x3(x, w):
        return jax.lax.conv_general_dilated(
            x, jnp.transpose(w, (2, 3, 1, 0)), (1, 1), 'SAME',
            dimension_numbers=('NHWC', 'HWIO', 'NHWC'))

    comp = jnp.concatenate([to_nhwc(from_depth_estimation),
                            to_nhwc(from_depth_extraction)], axis=-1)
    y1 = conv3x3(comp, p['w1']) + p['b1']
    y1 = (y1 - p['bn_mean']) / jnp.sqrt(p['bn_var'] + 1e-5) * p['bn_gamma'] + p['bn_beta']
    y1 = jnp.maximum(y1, 0.0)
    depth = conv3x3(y1, p['w2']) + p['b2']                                  # (B,H,W,C)
    B, H, W, C = depth.shape
    logits = jnp.einsum('bhwc,c->bhw', depth, p['w_mask'].reshape(-1))
    attn = jax.nn.softmax(logits.reshape(B, -1), axis=-1).reshape(B, H, W, 1)
    ctx = jnp.sum(depth * attn, axis=(1, 2))                                # (B,C)
    t1 = ctx @ p['w_cm1'][:, :, 0, 0].T
    mu = jnp.mean(t1, axis=-1, keepdims=True)
    var = jnp.mean((t1 - mu) ** 2, axis=-1, keepdims=True)
    t1 = (t1 - mu) / jnp.sqrt(var + 1e-5) * p['ln_gamma'] + p['ln_beta']
    t1 = jnp.maximum(t1, 0.0)
    cmul = jax.nn.sigmoid(t1 @ p['w_cm2'][:, :, 0, 0].T)                    # (B,C)
    out1 = jax.nn.sigmoid(depth * cmul[:, None, None, :])
    out = jax.nn.sigmoid(to_nhwc(from_rgb) * out1)
    return jnp.transpose(out, (0, 3, 1, 2))


# ----------------------------------------------------------------------------- main
if __name__ == "__main__":
    B, C, H, W = 2, 4, 16, 16
    C2 = 2 * C

    keys = jax.random.split(jax.random.PRNGKey(0), 16)
    params = {
        'w1':       0.2 * jax.random.normal(keys[0], (C2, C2, 3, 3), jnp.float32),
        'b1':       0.1 * jax.random.normal(keys[1], (C2,), jnp.float32),
        'bn_gamma': 1.0 + 0.1 * jax.random.normal(keys[2], (C2,), jnp.float32),
        'bn_beta':  0.1 * jax.random.normal(keys[3], (C2,), jnp.float32),
        'bn_mean':  0.1 * jax.random.normal(keys[4], (C2,), jnp.float32),
        'bn_var':   1.0 + 0.1 * jnp.abs(jax.random.normal(keys[5], (C2,), jnp.float32)),
        'w2':       0.2 * jax.random.normal(keys[6], (C, C2, 3, 3), jnp.float32),
        'b2':       0.1 * jax.random.normal(keys[7], (C,), jnp.float32),
        'w_mask':   0.2 * jax.random.normal(keys[8], (1, C, 1, 1), jnp.float32),
        'w_cm1':    0.2 * jax.random.normal(keys[9], (C, C, 1, 1), jnp.float32),
        'ln_gamma': 1.0 + 0.1 * jax.random.normal(keys[10], (C,), jnp.float32),
        'ln_beta':  0.1 * jax.random.normal(keys[11], (C,), jnp.float32),
        'w_cm2':    0.2 * jax.random.normal(keys[12], (C, C, 1, 1), jnp.float32),
    }

    from_depth_estimation = jax.random.normal(keys[13], (B, C, H, W), jnp.float32)
    from_rgb               = jax.random.normal(keys[14], (B, C, H, W), jnp.float32)
    from_depth_extraction  = jax.random.normal(keys[15], (B, C, H, W), jnp.float32)

    y_ref = reference(from_depth_estimation, from_rgb, from_depth_extraction, params)

    # strict f32-MXU path: must match the pure-JAX reference tightly
    y_f32 = complementary_gated_fusion(from_depth_estimation, from_rgb,
                                       from_depth_extraction, params,
                                       matmul_dtype=jnp.float32)
    y_f32 = jax.block_until_ready(y_f32)
    assert y_f32.shape == (B, C, H, W)
    assert jnp.allclose(y_f32, y_ref, atol=1e-4, rtol=1e-4), \
        f"f32 max abs diff {jnp.max(jnp.abs(y_f32 - y_ref))}"

    # fast path: bf16 MXU operands (f32 accumulation) + approx EUP reciprocal/rsqrt
    y_bf16 = complementary_gated_fusion(from_depth_estimation, from_rgb,
                                        from_depth_extraction, params,
                                        matmul_dtype=jnp.bfloat16)
    y_bf16 = jax.block_until_ready(y_bf16)
    assert jnp.allclose(y_bf16, y_ref, atol=3e-2, rtol=3e-2), \
        f"bf16 max abs diff {jnp.max(jnp.abs(y_bf16 - y_ref))}"

    print("KERNEL_OK")
</pallas_src>

<mosaic_0001>
module attributes {stable_mosaic.version = 11 : i64} {
  func.func @cgf_kernel(%arg0: i32, %arg1: memref<1x4x256xf32, #tpu.memory_space<vmem>>, %arg2: memref<1x4x256xf32, #tpu.memory_space<vmem>>, %arg3: memref<1x4x256xf32, #tpu.memory_space<vmem>>, %arg4: memref<9x8x4xf32, #tpu.memory_space<vmem>>, %arg5: memref<9x8x4xf32, #tpu.memory_space<vmem>>, %arg6: memref<9x4x8xf32, #tpu.memory_space<vmem>>, %arg7: memref<9x256xf32, #tpu.memory_space<vmem>>, %arg8: memref<8x1xf32, #tpu.memory_space<vmem>>, %arg9: memref<8x1xf32, #tpu.memory_space<vmem>>, %arg10: memref<4x1xf32, #tpu.memory_space<vmem>>, %arg11: memref<1x4xf32, #tpu.memory_space<vmem>>, %arg12: memref<4x4xf32, #tpu.memory_space<vmem>>, %arg13: memref<4x1xf32, #tpu.memory_space<vmem>>, %arg14: memref<4x1xf32, #tpu.memory_space<vmem>>, %arg15: memref<4x4xf32, #tpu.memory_space<vmem>>, %arg16: memref<1x4x256xf32, #tpu.memory_space<vmem>>) attributes {dimension_semantics = [#tpu.dimension_semantics<parallel>], iteration_bounds = array<i64: 2>, scalar_prefetch = 0 : i64, scratch_operands = 0 : i64, tpu.core_type = #tpu.core_type<tc>, window_params = [{transform_indices = @transform_0, window_bounds = array<i64: 1, 4, 256>}, {transform_indices = @transform_1, window_bounds = array<i64: 1, 4, 256>}, {transform_indices = @transform_2, window_bounds = array<i64: 1, 4, 256>}, {pipeline_mode = #tpu.pipeline_mode<synchronous>, transform_indices = @transform_3, window_bounds = array<i64: 9, 8, 4>}, {pipeline_mode = #tpu.pipeline_mode<synchronous>, transform_indices = @transform_4, window_bounds = array<i64: 9, 8, 4>}, {pipeline_mode = #tpu.pipeline_mode<synchronous>, transform_indices = @transform_5, window_bounds = array<i64: 9, 4, 8>}, {pipeline_mode = #tpu.pipeline_mode<synchronous>, transform_indices = @transform_6, window_bounds = array<i64: 9, 256>}, {pipeline_mode = #tpu.pipeline_mode<synchronous>, transform_indices = @transform_7, window_bounds = array<i64: 8, 1>}, {pipeline_mode = #tpu.pipeline_mode<synchronous>, transform_indices = @transform_8, window_bounds = array<i64: 8, 1>}, {pipeline_mode = #tpu.pipeline_mode<synchronous>, transform_indices = @transform_9, window_bounds = array<i64: 4, 1>}, {pipeline_mode = #tpu.pipeline_mode<synchronous>, transform_indices = @transform_10, window_bounds = array<i64: 1, 4>}, {pipeline_mode = #tpu.pipeline_mode<synchronous>, transform_indices = @transform_11, window_bounds = array<i64: 4, 4>}, {pipeline_mode = #tpu.pipeline_mode<synchronous>, transform_indices = @transform_12, window_bounds = array<i64: 4, 1>}, {pipeline_mode = #tpu.pipeline_mode<synchronous>, transform_indices = @transform_13, window_bounds = array<i64: 4, 1>}, {pipeline_mode = #tpu.pipeline_mode<synchronous>, transform_indices = @transform_14, window_bounds = array<i64: 4, 4>}, {transform_indices = @transform_15, window_bounds = array<i64: 1, 4, 256>}]} {
    %c0 = arith.constant 0 : index
    %c0_0 = arith.constant 0 : index
    %0 = vector.load %arg7[%c0, %c0_0] : memref<9x256xf32, #tpu.memory_space<vmem>>, vector<9x256xf32>
    %1 = vector.extract_strided_slice %0 {offsets = [0, 0], sizes = [1, 256], strides = [1, 1]} : vector<9x256xf32> to vector<1x256xf32>
    %2 = vector.extract_strided_slice %0 {offsets = [1, 0], sizes = [1, 256], strides = [1, 1]} : vector<9x256xf32> to vector<1x256xf32>
    %3 = vector.extract_strided_slice %0 {offsets = [2, 0], sizes = [1, 256], strides = [1, 1]} : vector<9x256xf32> to vector<1x256xf32>
    %4 = vector.extract_strided_slice %0 {offsets = [3, 0], sizes = [1, 256], strides = [1, 1]} : vector<9x256xf32> to vector<1x256xf32>
    %5 = vector.extract_strided_slice %0 {offsets = [5, 0], sizes = [1, 256], strides = [1, 1]} : vector<9x256xf32> to vector<1x256xf32>
    %6 = vector.extract_strided_slice %0 {offsets = [6, 0], sizes = [1, 256], strides = [1, 1]} : vector<9x256xf32> to vector<1x256xf32>
    %7 = vector.extract_strided_slice %0 {offsets = [7, 0], sizes = [1, 256], strides = [1, 1]} : vector<9x256xf32> to vector<1x256xf32>
    %8 = vector.extract_strided_slice %0 {offsets = [8, 0], sizes = [1, 256], strides = [1, 1]} : vector<9x256xf32> to vector<1x256xf32>
    %c0_1 = arith.constant 0 : index
    %c0_2 = arith.constant 0 : index
    %c0_3 = arith.constant 0 : index
    %9 = vector.load %arg1[%c0_1, %c0_2, %c0_3] : memref<1x4x256xf32, #tpu.memory_space<vmem>>, vector<1x4x256xf32>
    %10 = vector.shape_cast %9 : vector<1x4x256xf32> to vector<4x256xf32>
    %c0_4 = arith.constant 0 : index
    %c0_5 = arith.constant 0 : index
    %c0_6 = arith.constant 0 : index
    %11 = vector.load %arg2[%c0_4, %c0_5, %c0_6] : memref<1x4x256xf32, #tpu.memory_space<vmem>>, vector<1x4x256xf32>
    %12 = vector.shape_cast %11 : vector<1x4x256xf32> to vector<4x256xf32>
    %c17_i32 = arith.constant 17 : i32
    %13 = tpu.dynamic_rotate %10 by %c17_i32 dim 1 : vector<4x256xf32>, i32 -> vector<4x256xf32>
    %14 = vector.broadcast %1 : vector<1x256xf32> to vector<4x256xf32>
    %15 = arith.mulf %13, %14 : vector<4x256xf32>
    %c17_i32_7 = arith.constant 17 : i32
    %16 = tpu.dynamic_rotate %12 by %c17_i32_7 dim 1 : vector<4x256xf32>, i32 -> vector<4x256xf32>
    %17 = vector.broadcast %1 : vector<1x256xf32> to vector<4x256xf32>
    %18 = arith.mulf %16, %17 : vector<4x256xf32>
    %c0_8 = arith.constant 0 : index
    %c0_9 = arith.constant 0 : index
    %c0_10 = arith.constant 0 : index
    %19 = vector.load %arg4[%c0_8, %c0_9, %c0_10] : memref<9x8x4xf32, #tpu.memory_space<vmem>>, vector<1x8x4xf32>
    %20 = vector.shape_cast %19 : vector<1x8x4xf32> to vector<8x4xf32>
    %cst = arith.constant dense<0.000000e+00> : vector<8x256xf32>
    %21 = tpu.matmul %20, %15, %cst {dimension_numbers = #tpu.dot_dimension_numbers<[1], [0], [0], [1], [0, 0, 1, 1], [], []>} : vector<8x4xf32>, vector<4x256xf32>, vector<8x256xf32> -> vector<8x256xf32>
    %c0_11 = arith.constant 0 : index
    %c0_12 = arith.constant 0 : index
    %c0_13 = arith.constant 0 : index
    %22 = vector.load %arg5[%c0_11, %c0_12, %c0_13] : memref<9x8x4xf32, #tpu.memory_space<vmem>>, vector<1x8x4xf32>
    %23 = vector.shape_cast %22 : vector<1x8x4xf32> to vector<8x4xf32>
    %cst_14 = arith.constant dense<0.000000e+00> : vector<8x256xf32>
    %24 = tpu.matmul %23, %18, %cst_14 {dimension_numbers = #tpu.dot_dimension_numbers<[1], [0], [0], [1], [0, 0, 1, 1], [], []>} : vector<8x4xf32>, vector<4x256xf32>, vector<8x256xf32> -> vector<8x256xf32>
    %25 = arith.addf %21, %24 : vector<8x256xf32>
    %c16_i32 = arith.constant 16 : i32
    %26 = tpu.dynamic_rotate %10 by %c16_i32 dim 1 : vector<4x256xf32>, i32 -> vector<4x256xf32>
    %27 = vector.broadcast %2 : vector<1x256xf32> to vector<4x256xf32>
    %28 = arith.mulf %26, %27 : vector<4x256xf32>
    %c16_i32_15 = arith.constant 16 : i32
    %29 = tpu.dynamic_rotate %12 by %c16_i32_15 dim 1 : vector<4x256xf32>, i32 -> vector<4x256xf32>
    %30 = vector.broadcast %2 : vector<1x256xf32> to vector<4x256xf32>
    %31 = arith.mulf %29, %30 : vector<4x256xf32>
    %c1 = arith.constant 1 : index
    %c0_16 = arith.constant 0 : index
    %c0_17 = arith.constant 0 : index
    %32 = vector.load %arg4[%c1, %c0_16, %c0_17] : memref<9x8x4xf32, #tpu.memory_space<vmem>>, vector<1x8x4xf32>
    %33 = vector.shape_cast %32 : vector<1x8x4xf32> to vector<8x4xf32>
    %cst_18 = arith.constant dense<0.000000e+00> : vector<8x256xf32>
    %34 = tpu.matmul %33, %28, %cst_18 {dimension_numbers = #tpu.dot_dimension_numbers<[1], [0], [0], [1], [0, 0, 1, 1], [], []>} : vector<8x4xf32>, vector<4x256xf32>, vector<8x256xf32> -> vector<8x256xf32>
    %c1_19 = arith.constant 1 : index
    %c0_20 = arith.constant 0 : index
    %c0_21 = arith.constant 0 : index
    %35 = vector.load %arg5[%c1_19, %c0_20, %c0_21] : memref<9x8x4xf32, #tpu.memory_space<vmem>>, vector<1x8x4xf32>
    %36 = vector.shape_cast %35 : vector<1x8x4xf32> to vector<8x4xf32>
    %cst_22 = arith.constant dense<0.000000e+00> : vector<8x256xf32>
    %37 = tpu.matmul %36, %31, %cst_22 {dimension_numbers = #tpu.dot_dimension_numbers<[1], [0], [0], [1], [0, 0, 1, 1], [], []>} : vector<8x4xf32>, vector<4x256xf32>, vector<8x256xf32> -> vector<8x256xf32>
    %38 = arith.addf %34, %37 : vector<8x256xf32>
    %39 = arith.addf %25, %38 : vector<8x256xf32>
    %c15_i32 = arith.constant 15 : i32
    %40 = tpu.dynamic_rotate %10 by %c15_i32 dim 1 : vector<4x256xf32>, i32 -> vector<4x256xf32>
    %41 = vector.broadcast %3 : vector<1x256xf32> to vector<4x256xf32>
    %42 = arith.mulf %40, %41 : vector<4x256xf32>
    %c15_i32_23 = arith.constant 15 : i32
    %43 = tpu.dynamic_rotate %12 by %c15_i32_23 dim 1 : vector<4x256xf32>, i32 -> vector<4x256xf32>
    %44 = vector.broadcast %3 : vector<1x256xf32> to vector<4x256xf32>
    %45 = arith.mulf %43, %44 : vector<4x256xf32>
    %c2 = arith.constant 2 : index
    %c0_24 = arith.constant 0 : index
    %c0_25 = arith.constant 0 : index
    %46 = vector.load %arg4[%c2, %c0_24, %c0_25] : memref<9x8x4xf32, #tpu.memory_space<vmem>>, vector<1x8x4xf32>
    %47 = vector.shape_cast %46 : vector<1x8x4xf32> to vector<8x4xf32>
    %cst_26 = arith.constant dense<0.000000e+00> : vector<8x256xf32>
    %48 = tpu.matmul %47, %42, %cst_26 {dimension_numbers = #tpu.dot_dimension_numbers<[1], [0], [0], [1], [0, 0, 1, 1], [], []>} : vector<8x4xf32>, vector<4x256xf32>, vector<8x256xf32> -> vector<8x256xf32>
    %c2_27 = arith.constant 2 : index
    %c0_28 = arith.constant 0 : index
    %c0_29 = arith.constant 0 : index
    %49 = vector.load %arg5[%c2_27, %c0_28, %c0_29] : memref<9x8x4xf32, #tpu.memory_space<vmem>>, vector<1x8x4xf32>
    %50 = vector.shape_cast %49 : vector<1x8x4xf32> to vector<8x4xf32>
    %cst_30 = arith.constant dense<0.000000e+00> : vector<8x256xf32>
    %51 = tpu.matmul %50, %45, %cst_30 {dimension_numbers = #tpu.dot_dimension_numbers<[1], [0], [0], [1], [0, 0, 1, 1], [], []>} : vector<8x4xf32>, vector<4x256xf32>, vector<8x256xf32> -> vector<8x256xf32>
    %52 = arith.addf %48, %51 : vector<8x256xf32>
    %53 = arith.addf %39, %52 : vector<8x256xf32>
    %c1_i32 = arith.constant 1 : i32
    %54 = tpu.dynamic_rotate %10 by %c1_i32 dim 1 : vector<4x256xf32>, i32 -> vector<4x256xf32>
    %55 = vector.broadcast %4 : vector<1x256xf32> to vector<4x256xf32>
    %56 = arith.mulf %54, %55 : vector<4x256xf32>
    %c1_i32_31 = arith.constant 1 : i32
    %57 = tpu.dynamic_rotate %12 by %c1_i32_31 dim 1 : vector<4x256xf32>, i32 -> vector<4x256xf32>
    %58 = vector.broadcast %4 : vector<1x256xf32> to vector<4x256xf32>
    %59 = arith.mulf %57, %58 : vector<4x256xf32>
    %c3 = arith.constant 3 : index
    %c0_32 = arith.constant 0 : index
    %c0_33 = arith.constant 0 : index
    %60 = vector.load %arg4[%c3, %c0_32, %c0_33] : memref<9x8x4xf32, #tpu.memory_space<vmem>>, vector<1x8x4xf32>
    %61 = vector.shape_cast %60 : vector<1x8x4xf32> to vector<8x4xf32>
    %cst_34 = arith.constant dense<0.000000e+00> : vector<8x256xf32>
    %62 = tpu.matmul %61, %56, %cst_34 {dimension_numbers = #tpu.dot_dimension_numbers<[1], [0], [0], [1], [0, 0, 1, 1], [], []>} : vector<8x4xf32>, vector<4x256xf32>, vector<8x256xf32> -> vector<8x256xf32>
    %c3_35 = arith.constant 3 : index
    %c0_36 = arith.constant 0 : index
    %c0_37 = arith.constant 0 : index
    %63 = vector.load %arg5[%c3_35, %c0_36, %c0_37] : memref<9x8x4xf32, #tpu.memory_space<vmem>>, vector<1x8x4xf32>
    %64 = vector.shape_cast %63 : vector<1x8x4xf32> to vector<8x4xf32>
    %cst_38 = arith.constant dense<0.000000e+00> : vector<8x256xf32>
    %65 = tpu.matmul %64, %59, %cst_38 {dimension_numbers = #tpu.dot_dimension_numbers<[1], [0], [0], [1], [0, 0, 1, 1], [], []>} : vector<8x4xf32>, vector<4x256xf32>, vector<8x256xf32> -> vector<8x256xf32>
    %66 = arith.addf %62, %65 : vector<8x256xf32>
    %67 = arith.addf %53, %66 : vector<8x256xf32>
    %c4 = arith.constant 4 : index
    %c0_39 = arith.constant 0 : index
    %c0_40 = arith.constant 0 : index
    %68 = vector.load %arg4[%c4, %c0_39, %c0_40] : memref<9x8x4xf32, #tpu.memory_space<vmem>>, vector<1x8x4xf32>
    %69 = vector.shape_cast %68 : vector<1x8x4xf32> to vector<8x4xf32>
    %cst_41 = arith.constant dense<0.000000e+00> : vector<8x256xf32>
    %70 = tpu.matmul %69, %10, %cst_41 {dimension_numbers = #tpu.dot_dimension_numbers<[1], [0], [0], [1], [0, 0, 1, 1], [], []>} : vector<8x4xf32>, vector<4x256xf32>, vector<8x256xf32> -> vector<8x256xf32>
    %c4_42 = arith.constant 4 : index
    %c0_43 = arith.constant 0 : index
    %c0_44 = arith.constant 0 : index
    %71 = vector.load %arg5[%c4_42, %c0_43, %c0_44] : memref<9x8x4xf32, #tpu.memory_space<vmem>>, vector<1x8x4xf32>
    %72 = vector.shape_cast %71 : vector<1x8x4xf32> to vector<8x4xf32>
    %cst_45 = arith.constant dense<0.000000e+00> : vector<8x256xf32>
    %73 = tpu.matmul %72, %12, %cst_45 {dimension_numbers = #tpu.dot_dimension_numbers<[1], [0], [0], [1], [0, 0, 1, 1], [], []>} : vector<8x4xf32>, vector<4x256xf32>, vector<8x256xf32> -> vector<8x256xf32>
    %74 = arith.addf %70, %73 : vector<8x256xf32>
    %75 = arith.addf %67, %74 : vector<8x256xf32>
    %c255_i32 = arith.constant 255 : i32
    %76 = tpu.dynamic_rotate %10 by %c255_i32 dim 1 : vector<4x256xf32>, i32 -> vector<4x256xf32>
    %77 = vector.broadcast %5 : vector<1x256xf32> to vector<4x256xf32>
    %78 = arith.mulf %76, %77 : vector<4x256xf32>
    %c255_i32_46 = arith.constant 255 : i32
    %79 = tpu.dynamic_rotate %12 by %c255_i32_46 dim 1 : vector<4x256xf32>, i32 -> vector<4x256xf32>
    %80 = vector.broadcast %5 : vector<1x256xf32> to vector<4x256xf32>
    %81 = arith.mulf %79, %80 : vector<4x256xf32>
    %c5 = arith.constant 5 : index
    %c0_47 = arith.constant 0 : index
    %c0_48 = arith.constant 0 : index
    %82 = vector.load %arg4[%c5, %c0_47, %c0_48] : memref<9x8x4xf32, #tpu.memory_space<vmem>>, vector<1x8x4xf32>
    %83 = vector.shape_cast %82 : vector<1x8x4xf32> to vector<8x4xf32>
    %cst_49 = arith.constant dense<0.000000e+00> : vector<8x256xf32>
    %84 = tpu.matmul %83, %78, %cst_49 {dimension_numbers = #tpu.dot_dimension_numbers<[1], [0], [0], [1], [0, 0, 1, 1], [], []>} : vector<8x4xf32>, vector<4x256xf32>, vector<8x256xf32> -> vector<8x256xf32>
    %c5_50 = arith.constant 5 : index
    %c0_51 = arith.constant 0 : index
    %c0_52 = arith.constant 0 : index
    %85 = vector.load %arg5[%c5_50, %c0_51, %c0_52] : memref<9x8x4xf32, #tpu.memory_space<vmem>>, vector<1x8x4xf32>
    %86 = vector.shape_cast %85 : vector<1x8x4xf32> to vector<8x4xf32>
    %cst_53 = arith.constant dense<0.000000e+00> : vector<8x256xf32>
    %87 = tpu.matmul %86, %81, %cst_53 {dimension_numbers = #tpu.dot_dimension_numbers<[1], [0], [0], [1], [0, 0, 1, 1], [], []>} : vector<8x4xf32>, vector<4x256xf32>, vector<8x256xf32> -> vector<8x256xf32>
    %88 = arith.addf %84, %87 : vector<8x256xf32>
    %89 = arith.addf %75, %88 : vector<8x256xf32>
    %c241_i32 = arith.constant 241 : i32
    %90 = tpu.dynamic_rotate %10 by %c241_i32 dim 1 : vector<4x256xf32>, i32 -> vector<4x256xf32>
    %91 = vector.broadcast %6 : vector<1x256xf32> to vector<4x256xf32>
    %92 = arith.mulf %90, %91 : vector<4x256xf32>
    %c241_i32_54 = arith.constant 241 : i32
    %93 = tpu.dynamic_rotate %12 by %c241_i32_54 dim 1 : vector<4x256xf32>, i32 -> vector<4x256xf32>
    %94 = vector.broadcast %6 : vector<1x256xf32> to vector<4x256xf32>
    %95 = arith.mulf %93, %94 : vector<4x256xf32>
    %c6 = arith.constant 6 : index
    %c0_55 = arith.constant 0 : index
    %c0_56 = arith.constant 0 : index
    %96 = vector.load %arg4[%c6, %c0_55, %c0_56] : memref<9x8x4xf32, #tpu.memory_space<vmem>>, vector<1x8x4xf32>
    %97 = vector.shape_cast %96 : vector<1x8x4xf32> to vector<8x4xf32>
    %cst_57 = arith.constant dense<0.000000e+00> : vector<8x256xf32>
    %98 = tpu.matmul %97, %92, %cst_57 {dimension_numbers = #tpu.dot_dimension_numbers<[1], [0], [0], [1], [0, 0, 1, 1], [], []>} : vector<8x4xf32>, vector<4x256xf32>, vector<8x256xf32> -> vector<8x256xf32>
    %c6_58 = arith.constant 6 : index
    %c0_59 = arith.constant 0 : index
    %c0_60 = arith.constant 0 : index
    %99 = vector.load %arg5[%c6_58, %c0_59, %c0_60] : memref<9x8x4xf32, #tpu.memory_space<vmem>>, vector<1x8x4xf32>
    %100 = vector.shape_cast %99 : vector<1x8x4xf32> to vector<8x4xf32>
    %cst_61 = arith.constant dense<0.000000e+00> : vector<8x256xf32>
    %101 = tpu.matmul %100, %95, %cst_61 {dimension_numbers = #tpu.dot_dimension_numbers<[1], [0], [0], [1], [0, 0, 1, 1], [], []>} : vector<8x4xf32>, vector<4x256xf32>, vector<8x256xf32> -> vector<8x256xf32>
    %102 = arith.addf %98, %101 : vector<8x256xf32>
    %103 = arith.addf %89, %102 : vector<8x256xf32>
    %c240_i32 = arith.constant 240 : i32
    %104 = tpu.dynamic_rotate %10 by %c240_i32 dim 1 : vector<4x256xf32>, i32 -> vector<4x256xf32>
    %105 = vector.broadcast %7 : vector<1x256xf32> to vector<4x256xf32>
    %106 = arith.mulf %104, %105 : vector<4x256xf32>
    %c240_i32_62 = arith.constant 240 : i32
    %107 = tpu.dynamic_rotate %12 by %c240_i32_62 dim 1 : vector<4x256xf32>, i32 -> vector<4x256xf32>
    %108 = vector.broadcast %7 : vector<1x256xf32> to vector<4x256xf32>
    %109 = arith.mulf %107, %108 : vector<4x256xf32>
    %c7 = arith.constant 7 : index
    %c0_63 = arith.constant 0 : index
    %c0_64 = arith.constant 0 : index
    %110 = vector.load %arg4[%c7, %c0_63, %c0_64] : memref<9x8x4xf32, #tpu.memory_space<vmem>>, vector<1x8x4xf32>
    %111 = vector.shape_cast %110 : vector<1x8x4xf32> to vector<8x4xf32>
    %cst_65 = arith.constant dense<0.000000e+00> : vector<8x256xf32>
    %112 = tpu.matmul %111, %106, %cst_65 {dimension_numbers = #tpu.dot_dimension_numbers<[1], [0], [0], [1], [0, 0, 1, 1], [], []>} : vector<8x4xf32>, vector<4x256xf32>, vector<8x256xf32> -> vector<8x256xf32>
    %c7_66 = arith.constant 7 : index
    %c0_67 = arith.constant 0 : index
    %c0_68 = arith.constant 0 : index
    %113 = vector.load %arg5[%c7_66, %c0_67, %c0_68] : memref<9x8x4xf32, #tpu.memory_space<vmem>>, vector<1x8x4xf32>
    %114 = vector.shape_cast %113 : vector<1x8x4xf32> to vector<8x4xf32>
    %cst_69 = arith.constant dense<0.000000e+00> : vector<8x256xf32>
    %115 = tpu.matmul %114, %109, %cst_69 {dimension_numbers = #tpu.dot_dimension_numbers<[1], [0], [0], [1], [0, 0, 1, 1], [], []>} : vector<8x4xf32>, vector<4x256xf32>, vector<8x256xf32> -> vector<8x256xf32>
    %116 = arith.addf %112, %115 : vector<8x256xf32>
    %117 = arith.addf %103, %116 : vector<8x256xf32>
    %c239_i32 = arith.constant 239 : i32
    %118 = tpu.dynamic_rotate %10 by %c239_i32 dim 1 : vector<4x256xf32>, i32 -> vector<4x256xf32>
    %119 = vector.broadcast %8 : vector<1x256xf32> to vector<4x256xf32>
    %120 = arith.mulf %118, %119 : vector<4x256xf32>
    %c239_i32_70 = arith.constant 239 : i32
    %121 = tpu.dynamic_rotate %12 by %c239_i32_70 dim 1 : vector<4x256xf32>, i32 -> vector<4x256xf32>
    %122 = vector.broadcast %8 : vector<1x256xf32> to vector<4x256xf32>
    %123 = arith.mulf %121, %122 : vector<4x256xf32>
    %c8 = arith.constant 8 : index
    %c0_71 = arith.constant 0 : index
    %c0_72 = arith.constant 0 : index
    %124 = vector.load %arg4[%c8, %c0_71, %c0_72] : memref<9x8x4xf32, #tpu.memory_space<vmem>>, vector<1x8x4xf32>
    %125 = vector.shape_cast %124 : vector<1x8x4xf32> to vector<8x4xf32>
    %cst_73 = arith.constant dense<0.000000e+00> : vector<8x256xf32>
    %126 = tpu.matmul %125, %120, %cst_73 {dimension_numbers = #tpu.dot_dimension_numbers<[1], [0], [0], [1], [0, 0, 1, 1], [], []>} : vector<8x4xf32>, vector<4x256xf32>, vector<8x256xf32> -> vector<8x256xf32>
    %c8_74 = arith.constant 8 : index
    %c0_75 = arith.constant 0 : index
    %c0_76 = arith.constant 0 : index
    %127 = vector.load %arg5[%c8_74, %c0_75, %c0_76] : memref<9x8x4xf32, #tpu.memory_space<vmem>>, vector<1x8x4xf32>
    %128 = vector.shape_cast %127 : vector<1x8x4xf32> to vector<8x4xf32>
    %cst_77 = arith.constant dense<0.000000e+00> : vector<8x256xf32>
    %129 = tpu.matmul %128, %123, %cst_77 {dimension_numbers = #tpu.dot_dimension_numbers<[1], [0], [0], [1], [0, 0, 1, 1], [], []>} : vector<8x4xf32>, vector<4x256xf32>, vector<8x256xf32> -> vector<8x256xf32>
    %130 = arith.addf %126, %129 : vector<8x256xf32>
    %131 = arith.addf %117, %130 : vector<8x256xf32>
    %c0_78 = arith.constant 0 : index
    %c0_79 = arith.constant 0 : index
    %132 = vector.load %arg8[%c0_78, %c0_79] : memref<8x1xf32, #tpu.memory_space<vmem>>, vector<8x1xf32>
    %133 = vector.broadcast %132 : vector<8x1xf32> to vector<8x256xf32>
    %134 = arith.mulf %131, %133 : vector<8x256xf32>
    %c0_80 = arith.constant 0 : index
    %c0_81 = arith.constant 0 : index
    %135 = vector.load %arg9[%c0_80, %c0_81] : memref<8x1xf32, #tpu.memory_space<vmem>>, vector<8x1xf32>
    %136 = vector.broadcast %135 : vector<8x1xf32> to vector<8x256xf32>
    %137 = arith.addf %134, %136 : vector<8x256xf32>
    %cst_82 = arith.constant 0.000000e+00 : f32
    %138 = vector.broadcast %cst_82 : f32 to vector<8x256xf32>
    %139 = arith.maximumf %137, %138 : vector<8x256xf32>
    %c17_i32_83 = arith.constant 17 : i32
    %140 = tpu.dynamic_rotate %139 by %c17_i32_83 dim 1 : vector<8x256xf32>, i32 -> vector<8x256xf32>
    %141 = vector.broadcast %1 : vector<1x256xf32> to vector<8x256xf32>
    %142 = arith.mulf %140, %141 : vector<8x256xf32>
    %c0_84 = arith.constant 0 : index
    %c0_85 = arith.constant 0 : index
    %c0_86 = arith.constant 0 : index
    %143 = vector.load %arg6[%c0_84, %c0_85, %c0_86] : memref<9x4x8xf32, #tpu.memory_space<vmem>>, vector<1x4x8xf32>
    %144 = vector.shape_cast %143 : vector<1x4x8xf32> to vector<4x8xf32>
    %cst_87 = arith.constant dense<0.000000e+00> : vector<4x256xf32>
    %145 = tpu.matmul %144, %142, %cst_87 {dimension_numbers = #tpu.dot_dimension_numbers<[1], [0], [0], [1], [0, 0, 1, 1], [], []>} : vector<4x8xf32>, vector<8x256xf32>, vector<4x256xf32> -> vector<4x256xf32>
    %c16_i32_88 = arith.constant 16 : i32
    %146 = tpu.dynamic_rotate %139 by %c16_i32_88 dim 1 : vector<8x256xf32>, i32 -> vector<8x256xf32>
    %147 = vector.broadcast %2 : vector<1x256xf32> to vector<8x256xf32>
    %148 = arith.mulf %146, %147 : vector<8x256xf32>
    %c1_89 = arith.constant 1 : index
    %c0_90 = arith.constant 0 : index
    %c0_91 = arith.constant 0 : index
    %149 = vector.load %arg6[%c1_89, %c0_90, %c0_91] : memref<9x4x8xf32, #tpu.memory_space<vmem>>, vector<1x4x8xf32>
    %150 = vector.shape_cast %149 : vector<1x4x8xf32> to vector<4x8xf32>
    %cst_92 = arith.constant dense<0.000000e+00> : vector<4x256xf32>
    %151 = tpu.matmul %150, %148, %cst_92 {dimension_numbers = #tpu.dot_dimension_numbers<[1], [0], [0], [1], [0, 0, 1, 1], [], []>} : vector<4x8xf32>, vector<8x256xf32>, vector<4x256xf32> -> vector<4x256xf32>
    %152 = arith.addf %145, %151 : vector<4x256xf32>
    %c15_i32_93 = arith.constant 15 : i32
    %153 = tpu.dynamic_rotate %139 by %c15_i32_93 dim 1 : vector<8x256xf32>, i32 -> vector<8x256xf32>
    %154 = vector.broadcast %3 : vector<1x256xf32> to vector<8x256xf32>
    %155 = arith.mulf %153, %154 : vector<8x256xf32>
    %c2_94 = arith.constant 2 : index
    %c0_95 = arith.constant 0 : index
    %c0_96 = arith.constant 0 : index
    %156 = vector.load %arg6[%c2_94, %c0_95, %c0_96] : memref<9x4x8xf32, #tpu.memory_space<vmem>>, vector<1x4x8xf32>
    %157 = vector.shape_cast %156 : vector<1x4x8xf32> to vector<4x8xf32>
    %cst_97 = arith.constant dense<0.000000e+00> : vector<4x256xf32>
    %158 = tpu.matmul %157, %155, %cst_97 {dimension_numbers = #tpu.dot_dimension_numbers<[1], [0], [0], [1], [0, 0, 1, 1], [], []>} : vector<4x8xf32>, vector<8x256xf32>, vector<4x256xf32> -> vector<4x256xf32>
    %159 = arith.addf %152, %158 : vector<4x256xf32>
    %c1_i32_98 = arith.constant 1 : i32
    %160 = tpu.dynamic_rotate %139 by %c1_i32_98 dim 1 : vector<8x256xf32>, i32 -> vector<8x256xf32>
    %161 = vector.broadcast %4 : vector<1x256xf32> to vector<8x256xf32>
    %162 = arith.mulf %160, %161 : vector<8x256xf32>
    %c3_99 = arith.constant 3 : index
    %c0_100 = arith.constant 0 : index
    %c0_101 = arith.constant 0 : index
    %163 = vector.load %arg6[%c3_99, %c0_100, %c0_101] : memref<9x4x8xf32, #tpu.memory_space<vmem>>, vector<1x4x8xf32>
    %164 = vector.shape_cast %163 : vector<1x4x8xf32> to vector<4x8xf32>
    %cst_102 = arith.constant dense<0.000000e+00> : vector<4x256xf32>
    %165 = tpu.matmul %164, %162, %cst_102 {dimension_numbers = #tpu.dot_dimension_numbers<[1], [0], [0], [1], [0, 0, 1, 1], [], []>} : vector<4x8xf32>, vector<8x256xf32>, vector<4x256xf32> -> vector<4x256xf32>
    %166 = arith.addf %159, %165 : vector<4x256xf32>
    %c4_103 = arith.constant 4 : index
    %c0_104 = arith.constant 0 : index
    %c0_105 = arith.constant 0 : index
    %167 = vector.load %arg6[%c4_103, %c0_104, %c0_105] : memref<9x4x8xf32, #tpu.memory_space<vmem>>, vector<1x4x8xf32>
    %168 = vector.shape_cast %167 : vector<1x4x8xf32> to vector<4x8xf32>
    %cst_106 = arith.constant dense<0.000000e+00> : vector<4x256xf32>
    %169 = tpu.matmul %168, %139, %cst_106 {dimension_numbers = #tpu.dot_dimension_numbers<[1], [0], [0], [1], [0, 0, 1, 1], [], []>} : vector<4x8xf32>, vector<8x256xf32>, vector<4x256xf32> -> vector<4x256xf32>
    %170 = arith.addf %166, %169 : vector<4x256xf32>
    %c255_i32_107 = arith.constant 255 : i32
    %171 = tpu.dynamic_rotate %139 by %c255_i32_107 dim 1 : vector<8x256xf32>, i32 -> vector<8x256xf32>
    %172 = vector.broadcast %5 : vector<1x256xf32> to vector<8x256xf32>
    %173 = arith.mulf %171, %172 : vector<8x256xf32>
    %c5_108 = arith.constant 5 : index
    %c0_109 = arith.constant 0 : index
    %c0_110 = arith.constant 0 : index
    %174 = vector.load %arg6[%c5_108, %c0_109, %c0_110] : memref<9x4x8xf32, #tpu.memory_space<vmem>>, vector<1x4x8xf32>
    %175 = vector.shape_cast %174 : vector<1x4x8xf32> to vector<4x8xf32>
    %cst_111 = arith.constant dense<0.000000e+00> : vector<4x256xf32>
    %176 = tpu.matmul %175, %173, %cst_111 {dimension_numbers = #tpu.dot_dimension_numbers<[1], [0], [0], [1], [0, 0, 1, 1], [], []>} : vector<4x8xf32>, vector<8x256xf32>, vector<4x256xf32> -> vector<4x256xf32>
    %177 = arith.addf %170, %176 : vector<4x256xf32>
    %c241_i32_112 = arith.constant 241 : i32
    %178 = tpu.dynamic_rotate %139 by %c241_i32_112 dim 1 : vector<8x256xf32>, i32 -> vector<8x256xf32>
    %179 = vector.broadcast %6 : vector<1x256xf32> to vector<8x256xf32>
    %180 = arith.mulf %178, %179 : vector<8x256xf32>
    %c6_113 = arith.constant 6 : index
    %c0_114 = arith.constant 0 : index
    %c0_115 = arith.constant 0 : index
    %181 = vector.load %arg6[%c6_113, %c0_114, %c0_115] : memref<9x4x8xf32, #tpu.memory_space<vmem>>, vector<1x4x8xf32>
    %182 = vector.shape_cast %181 : vector<1x4x8xf32> to vector<4x8xf32>
    %cst_116 = arith.constant dense<0.000000e+00> : vector<4x256xf32>
    %183 = tpu.matmul %182, %180, %cst_116 {dimension_numbers = #tpu.dot_dimension_numbers<[1], [0], [0], [1], [0, 0, 1, 1], [], []>} : vector<4x8xf32>, vector<8x256xf32>, vector<4x256xf32> -> vector<4x256xf32>
    %184 = arith.addf %177, %183 : vector<4x256xf32>
    %c240_i32_117 = arith.constant 240 : i32
    %185 = tpu.dynamic_rotate %139 by %c240_i32_117 dim 1 : vector<8x256xf32>, i32 -> vector<8x256xf32>
    %186 = vector.broadcast %7 : vector<1x256xf32> to vector<8x256xf32>
    %187 = arith.mulf %185, %186 : vector<8x256xf32>
    %c7_118 = arith.constant 7 : index
    %c0_119 = arith.constant 0 : index
    %c0_120 = arith.constant 0 : index
    %188 = vector.load %arg6[%c7_118, %c0_119, %c0_120] : memref<9x4x8xf32, #tpu.memory_space<vmem>>, vector<1x4x8xf32>
    %189 = vector.shape_cast %188 : vector<1x4x8xf32> to vector<4x8xf32>
    %cst_121 = arith.constant dense<0.000000e+00> : vector<4x256xf32>
    %190 = tpu.matmul %189, %187, %cst_121 {dimension_numbers = #tpu.dot_dimension_numbers<[1], [0], [0], [1], [0, 0, 1, 1], [], []>} : vector<4x8xf32>, vector<8x256xf32>, vector<4x256xf32> -> vector<4x256xf32>
    %191 = arith.addf %184, %190 : vector<4x256xf32>
    %c239_i32_122 = arith.constant 239 : i32
    %192 = tpu.dynamic_rotate %139 by %c239_i32_122 dim 1 : vector<8x256xf32>, i32 -> vector<8x256xf32>
    %193 = vector.broadcast %8 : vector<1x256xf32> to vector<8x256xf32>
    %194 = arith.mulf %192, %193 : vector<8x256xf32>
    %c8_123 = arith.constant 8 : index
    %c0_124 = arith.constant 0 : index
    %c0_125 = arith.constant 0 : index
    %195 = vector.load %arg6[%c8_123, %c0_124, %c0_125] : memref<9x4x8xf32, #tpu.memory_space<vmem>>, vector<1x4x8xf32>
    %196 = vector.shape_cast %195 : vector<1x4x8xf32> to vector<4x8xf32>
    %cst_126 = arith.constant dense<0.000000e+00> : vector<4x256xf32>
    %197 = tpu.matmul %196, %194, %cst_126 {dimension_numbers = #tpu.dot_dimension_numbers<[1], [0], [0], [1], [0, 0, 1, 1], [], []>} : vector<4x8xf32>, vector<8x256xf32>, vector<4x256xf32> -> vector<4x256xf32>
    %198 = arith.addf %191, %197 : vector<4x256xf32>
    %c0_127 = arith.constant 0 : index
    %c0_128 = arith.constant 0 : index
    %199 = vector.load %arg10[%c0_127, %c0_128] : memref<4x1xf32, #tpu.memory_space<vmem>>, vector<4x1xf32>
    %200 = vector.broadcast %199 : vector<4x1xf32> to vector<4x256xf32>
    %201 = arith.addf %198, %200 : vector<4x256xf32>
    %c0_129 = arith.constant 0 : index
    %c0_130 = arith.constant 0 : index
    %202 = vector.load %arg11[%c0_129, %c0_130] : memref<1x4xf32, #tpu.memory_space<vmem>>, vector<1x4xf32>
    %cst_131 = arith.constant dense<0.000000e+00> : vector<1x256xf32>
    %203 = tpu.matmul %202, %201, %cst_131 {dimension_numbers = #tpu.dot_dimension_numbers<[1], [0], [0], [1], [0, 0, 1, 1], [], []>} : vector<1x4xf32>, vector<4x256xf32>, vector<1x256xf32> -> vector<1x256xf32>
    %cst_132 = arith.constant dense<0xFF800000> : vector<1xf32>
    %204 = vector.multi_reduction <maximumf>, %203, %cst_132 [1] : vector<1x256xf32> to vector<1xf32>
    %205 = vector.shape_cast %204 : vector<1xf32> to vector<1x1xf32>
    %206 = vector.broadcast %205 : vector<1x1xf32> to vector<1x256xf32>
    %207 = arith.subf %203, %206 : vector<1x256xf32>
    %208 = math.exp %207 : vector<1x256xf32>
    %cst_133 = arith.constant dense<0.000000e+00> : vector<1xf32>
    %209 = vector.multi_reduction <add>, %208, %cst_133 [1] : vector<1x256xf32> to vector<1xf32>
    %210 = vector.shape_cast %209 : vector<1xf32> to vector<1x1xf32>
    %cst_134 = arith.constant dense<0.000000e+00> : vector<4x1xf32>
    %211 = tpu.matmul %201, %208, %cst_134 {dimension_numbers = #tpu.dot_dimension_numbers<[1], [1], [0], [0], [0, 0, 1, 0], [], []>} : vector<4x256xf32>, vector<1x256xf32>, vector<4x1xf32> -> vector<4x1xf32>
    %cst_135 = arith.constant 1.000000e+00 : f32
    %212 = vector.broadcast %cst_135 : f32 to vector<1x1xf32>
    %213 = arith.divf %212, %210 : vector<1x1xf32>
    %214 = vector.broadcast %213 : vector<1x1xf32> to vector<4x1xf32>
    %215 = arith.mulf %211, %214 : vector<4x1xf32>
    %c0_136 = arith.constant 0 : index
    %c0_137 = arith.constant 0 : index
    %216 = vector.load %arg12[%c0_136, %c0_137] : memref<4x4xf32, #tpu.memory_space<vmem>>, vector<4x4xf32>
    %cst_138 = arith.constant dense<0.000000e+00> : vector<4x1xf32>
    %217 = tpu.matmul %216, %215, %cst_138 {dimension_numbers = #tpu.dot_dimension_numbers<[1], [0], [0], [1], [0, 0, 1, 1], [], []>} : vector<4x4xf32>, vector<4x1xf32>, vector<4x1xf32> -> vector<4x1xf32>
    %cst_139 = arith.constant dense<0.000000e+00> : vector<1xf32>
    %218 = vector.multi_reduction <add>, %217, %cst_139 [0] : vector<4x1xf32> to vector<1xf32>
    %219 = vector.shape_cast %218 : vector<1xf32> to vector<1x1xf32>
    %cst_140 = arith.constant 4.000000e+00 : f32
    %220 = vector.broadcast %cst_140 : f32 to vector<1x1xf32>
    %221 = arith.divf %219, %220 : vector<1x1xf32>
    %222 = vector.broadcast %221 : vector<1x1xf32> to vector<4x1xf32>
    %223 = arith.subf %217, %222 : vector<4x1xf32>
    %224 = arith.mulf %223, %223 : vector<4x1xf32>
    %cst_141 = arith.constant dense<0.000000e+00> : vector<1xf32>
    %225 = vector.multi_reduction <add>, %224, %cst_141 [0] : vector<4x1xf32> to vector<1xf32>
    %226 = vector.shape_cast %225 : vector<1xf32> to vector<1x1xf32>
    %cst_142 = arith.constant 4.000000e+00 : f32
    %227 = vector.broadcast %cst_142 : f32 to vector<1x1xf32>
    %228 = arith.divf %226, %227 : vector<1x1xf32>
    %cst_143 = arith.constant 9.99999974E-6 : f32
    %229 = vector.broadcast %cst_143 : f32 to vector<1x1xf32>
    %230 = arith.addf %228, %229 : vector<1x1xf32>
    %231 = math.sqrt %230 : vector<1x1xf32>
    %cst_144 = arith.constant 1.000000e+00 : f32
    %232 = vector.broadcast %cst_144 : f32 to vector<1x1xf32>
    %233 = arith.divf %232, %231 : vector<1x1xf32>
    %234 = vector.broadcast %221 : vector<1x1xf32> to vector<4x1xf32>
    %235 = arith.subf %217, %234 : vector<4x1xf32>
    %236 = vector.broadcast %233 : vector<1x1xf32> to vector<4x1xf32>
    %237 = arith.mulf %235, %236 : vector<4x1xf32>
    %c0_145 = arith.constant 0 : index
    %c0_146 = arith.constant 0 : index
    %238 = vector.load %arg13[%c0_145, %c0_146] : memref<4x1xf32, #tpu.memory_space<vmem>>, vector<4x1xf32>
    %239 = arith.mulf %237, %238 : vector<4x1xf32>
    %c0_147 = arith.constant 0 : index
    %c0_148 = arith.constant 0 : index
    %240 = vector.load %arg14[%c0_147, %c0_148] : memref<4x1xf32, #tpu.memory_space<vmem>>, vector<4x1xf32>
    %241 = arith.addf %239, %240 : vector<4x1xf32>
    %cst_149 = arith.constant 0.000000e+00 : f32
    %242 = vector.broadcast %cst_149 : f32 to vector<4x1xf32>
    %243 = arith.maximumf %241, %242 : vector<4x1xf32>
    %c0_150 = arith.constant 0 : index
    %c0_151 = arith.constant 0 : index
    %244 = vector.load %arg15[%c0_150, %c0_151] : memref<4x4xf32, #tpu.memory_space<vmem>>, vector<4x4xf32>
    %cst_152 = arith.constant dense<0.000000e+00> : vector<4x1xf32>
    %245 = tpu.matmul %244, %243, %cst_152 {dimension_numbers = #tpu.dot_dimension_numbers<[1], [0], [0], [1], [0, 0, 1, 1], [], []>} : vector<4x4xf32>, vector<4x1xf32>, vector<4x1xf32> -> vector<4x1xf32>
    %246 = arith.negf %245 : vector<4x1xf32>
    %247 = math.exp %246 : vector<4x1xf32>
    %cst_153 = arith.constant 1.000000e+00 : f32
    %248 = vector.broadcast %cst_153 : f32 to vector<4x1xf32>
    %249 = arith.addf %248, %247 : vector<4x1xf32>
    %250 = arith.divf %248, %249 : vector<4x1xf32>
    %c0_154 = arith.constant 0 : index
    %c0_155 = arith.constant 0 : index
    %c0_156 = arith.constant 0 : index
    %251 = vector.load %arg3[%c0_154, %c0_155, %c0_156] : memref<1x4x256xf32, #tpu.memory_space<vmem>>, vector<1x4x256xf32>
    %252 = vector.shape_cast %251 : vector<1x4x256xf32> to vector<4x256xf32>
    %253 = vector.broadcast %250 : vector<4x1xf32> to vector<4x256xf32>
    %254 = arith.mulf %201, %253 : vector<4x256xf32>
    %255 = arith.negf %254 : vector<4x256xf32>
    %256 = math.exp %255 : vector<4x256xf32>
    %cst_157 = arith.constant 1.000000e+00 : f32
    %257 = vector.broadcast %cst_157 : f32 to vector<4x256xf32>
    %258 = arith.addf %257, %256 : vector<4x256xf32>
    %259 = arith.divf %257, %258 : vector<4x256xf32>
    %260 = arith.mulf %252, %259 : vector<4x256xf32>
    %261 = arith.negf %260 : vector<4x256xf32>
    %262 = math.exp %261 : vector<4x256xf32>
    %cst_158 = arith.constant 1.000000e+00 : f32
    %263 = vector.broadcast %cst_158 : f32 to vector<4x256xf32>
    %264 = arith.addf %263, %262 : vector<4x256xf32>
    %265 = arith.divf %263, %264 : vector<4x256xf32>
    %c0_159 = arith.constant 0 : index
    %c0_160 = arith.constant 0 : index
    %c0_161 = arith.constant 0 : index
    %266 = vector.load %arg16[%c0_159, %c0_160, %c0_161] : memref<1x4x256xf32, #tpu.memory_space<vmem>>, vector<1x4x256xf32>
    %267 = vector.shape_cast %266 : vector<1x4x256xf32> to vector<4x256xf32>
    %268 = vector.shape_cast %265 : vector<4x256xf32> to vector<1x4x256xf32>
    tpu.vector_store %arg16[%c0_159, %c0_160, %c0_161], %268 {strides = array<i32>} : memref<1x4x256xf32, #tpu.memory_space<vmem>>, vector<1x4x256xf32>,
    return
  }
  func.func @transform_0(%arg0: i32) -> (i32, i32, i32) {
    %c0_i32 = arith.constant 0 : i32
    %c0_i32_0 = arith.constant 0 : i32
    %c0_i32_1 = arith.constant 0 : i32
    return %arg0, %c0_i32, %c0_i32_0 : i32, i32, i32
  }
  func.func @transform_1(%arg0: i32) -> (i32, i32, i32) {
    %c0_i32 = arith.constant 0 : i32
    %c0_i32_0 = arith.constant 0 : i32
    %c0_i32_1 = arith.constant 0 : i32
    return %arg0, %c0_i32, %c0_i32_0 : i32, i32, i32
  }
  func.func @transform_2(%arg0: i32) -> (i32, i32, i32) {
    %c0_i32 = arith.constant 0 : i32
    %c0_i32_0 = arith.constant 0 : i32
    %c0_i32_1 = arith.constant 0 : i32
    return %arg0, %c0_i32, %c0_i32_0 : i32, i32, i32
  }
  func.func @transform_3(%arg0: i32) -> (i32, i32, i32) {
    %c0_i32 = arith.constant 0 : i32
    %c0_i32_0 = arith.constant 0 : i32
    %c0_i32_1 = arith.constant 0 : i32
    %c0_i32_2 = arith.constant 0 : i32
    return %c0_i32, %c0_i32_0, %c0_i32_1 : i32, i32, i32
  }
  func.func @transform_4(%arg0: i32) -> (i32, i32, i32) {
    %c0_i32 = arith.constant 0 : i32
    %c0_i32_0 = arith.constant 0 : i32
    %c0_i32_1 = arith.constant 0 : i32
    %c0_i32_2 = arith.constant 0 : i32
    return %c0_i32, %c0_i32_0, %c0_i32_1 : i32, i32, i32
  }
  func.func @transform_5(%arg0: i32) -> (i32, i32, i32) {
    %c0_i32 = arith.constant 0 : i32
    %c0_i32_0 = arith.constant 0 : i32
    %c0_i32_1 = arith.constant 0 : i32
    %c0_i32_2 = arith.constant 0 : i32
    return %c0_i32, %c0_i32_0, %c0_i32_1 : i32, i32, i32
  }
  func.func @transform_6(%arg0: i32) -> (i32, i32) {
    %c0_i32 = arith.constant 0 : i32
    %c0_i32_0 = arith.constant 0 : i32
    %c0_i32_1 = arith.constant 0 : i32
    return %c0_i32, %c0_i32_0 : i32, i32
  }
  func.func @transform_7(%arg0: i32) -> (i32, i32) {
    %c0_i32 = arith.constant 0 : i32
    %c0_i32_0 = arith.constant 0 : i32
    %c0_i32_1 = arith.constant 0 : i32
    return %c0_i32, %c0_i32_0 : i32, i32
  }
  func.func @transform_8(%arg0: i32) -> (i32, i32) {
    %c0_i32 = arith.constant 0 : i32
    %c0_i32_0 = arith.constant 0 : i32
    %c0_i32_1 = arith.constant 0 : i32
    return %c0_i32, %c0_i32_0 : i32, i32
  }
  func.func @transform_9(%arg0: i32) -> (i32, i32) {
    %c0_i32 = arith.constant 0 : i32
    %c0_i32_0 = arith.constant 0 : i32
    %c0_i32_1 = arith.constant 0 : i32
    return %c0_i32, %c0_i32_0 : i32, i32
  }
  func.func @transform_10(%arg0: i32) -> (i32, i32) {
    %c0_i32 = arith.constant 0 : i32
    %c0_i32_0 = arith.constant 0 : i32
    %c0_i32_1 = arith.constant 0 : i32
    return %c0_i32, %c0_i32_0 : i32, i32
  }
  func.func @transform_11(%arg0: i32) -> (i32, i32) {
    %c0_i32 = arith.constant 0 : i32
    %c0_i32_0 = arith.constant 0 : i32
    %c0_i32_1 = arith.constant 0 : i32
    return %c0_i32, %c0_i32_0 : i32, i32
  }
  func.func @transform_12(%arg0: i32) -> (i32, i32) {
    %c0_i32 = arith.constant 0 : i32
    %c0_i32_0 = arith.constant 0 : i32
    %c0_i32_1 = arith.constant 0 : i32
    return %c0_i32, %c0_i32_0 : i32, i32
  }
  func.func @transform_13(%arg0: i32) -> (i32, i32) {
    %c0_i32 = arith.constant 0 : i32
    %c0_i32_0 = arith.constant 0 : i32
    %c0_i32_1 = arith.constant 0 : i32
    return %c0_i32, %c0_i32_0 : i32, i32
  }
  func.func @transform_14(%arg0: i32) -> (i32, i32) {
    %c0_i32 = arith.constant 0 : i32
    %c0_i32_0 = arith.constant 0 : i32
    %c0_i32_1 = arith.constant 0 : i32
    return %c0_i32, %c0_i32_0 : i32, i32
  }
  func.func @transform_15(%arg0: i32) -> (i32, i32, i32) {
    %c0_i32 = arith.constant 0 : i32
    %c0_i32_0 = arith.constant 0 : i32
    %c0_i32_1 = arith.constant 0 : i32
    return %arg0, %c0_i32, %c0_i32_0 : i32, i32, i32
  }
}

</mosaic_0001>

<llo_original>
// kernel: tpu_custom_call.1
$region0: #{tpu_custom_call.1}
  #allocation0 [shape = 'u32[]', space=smem, size = 0x4, offset = 0x4, fixed_abs, tag = 'smem constant byte address 0x4 - core index']
  #allocation1 [shape = 'u32[144,128]{1,0:T(1,128)}', space=vmem, size = 0x12000, scoped, tag = 'internal scratch']
  %s0 = inlined_call_operand.vmem [shape: f32[2,4,256], index: 0, kind: input, shape index: {}]
  %s1 = inlined_call_operand.vmem [shape: f32[2,4,256], index: 1, kind: input, shape index: {}]
  %s2 = inlined_call_operand.vmem [shape: f32[2,4,256], index: 2, kind: input, shape index: {}]
  %s3 = inlined_call_operand.vmem [shape: f32[9,8,4], index: 3, kind: input, shape index: {}]
  %s4 = inlined_call_operand.vmem [shape: f32[9,8,4], index: 4, kind: input, shape index: {}]
  %s5 = inlined_call_operand.vmem [shape: f32[9,4,8], index: 5, kind: input, shape index: {}]
  %s6 = inlined_call_operand.vmem [shape: f32[9,256], index: 6, kind: input, shape index: {}]
  %s7 = inlined_call_operand.vmem [shape: f32[8,1], index: 7, kind: input, shape index: {}]
  %s8 = inlined_call_operand.vmem [shape: f32[8,1], index: 8, kind: input, shape index: {}]
  %s9 = inlined_call_operand.vmem [shape: f32[4,1], index: 9, kind: input, shape index: {}]
  %s10 = inlined_call_operand.vmem [shape: f32[1,4], index: 10, kind: input, shape index: {}]
  %s11 = inlined_call_operand.vmem [shape: f32[4,4], index: 11, kind: input, shape index: {}]
  %s12 = inlined_call_operand.vmem [shape: f32[4,1], index: 12, kind: input, shape index: {}]
  %s13 = inlined_call_operand.vmem [shape: f32[4,1], index: 13, kind: input, shape index: {}]
  %s14 = inlined_call_operand.vmem [shape: f32[4,4], index: 14, kind: input, shape index: {}]
  %s15 = inlined_call_operand.hbm [shape: f32[2,4,256], index: 15, kind: output, shape index: {}]
  %s16 = sld [smem:[#allocation0]]
  $region93: #{tpu_custom_call.1} parent=0
    _
  %s18 = ssub.s32 1, %s16
  %s19 = scalar_select 0, %s18, %s16
  $region1: #{tpu_custom_call.1} parent=0
    #allocation2 [shape = 'u8[8192]{0}', space=vmem, size = 0x2000, scoped, tag = 'output window, operand 0']
    #allocation3 [shape = 's32[2]{0}', space=sflag, size = 0x8, scoped, tag = 'scoped memory for tpu_custom_call.1']
    %20 = vsyncpa [#allocation3], 0
    %s21 = scalar_lea.sflag [#allocation3], 1
    %22 = vsyncpa %s21, 0
    loop: start=0, step=1, limit=4
    $region2: #{tpu_custom_call.1} parent=1 // loop_pre_header
      _
    $region3: #{tpu_custom_call.1} parent=1 // loop_header
      %s24 = sphi 0, %s28
      %p25 = scmp.ge.s32.totalorder %s24, 4
      %s34 = sphi 0, %s36
      %s37 = sphi 0, %s34
      %s38 = sphi 0, %s37
      %s54 = sphi 0, %s38
      %s60 = sphi 0, %s62
      %s63 = sphi 0, %s60
      %s64 = sphi 0, %s63
      %s80 = sphi 0, %s64
      %s86 = sphi 0, %s88
      %s89 = sphi 0, %s86
      %s90 = sphi 0, %s89
      %s106 = sphi 0, %s90
      %s110 = sphi 0, %s110
      %s112 = sphi 0, %s110
      %s113 = sphi 0, %s112
      %s127 = sphi 0, %s113
      %s131 = sphi 0, %s131
      %s133 = sphi 0, %s131
      %s134 = sphi 0, %s133
      %s148 = sphi 0, %s134
      %s152 = sphi 0, %s152
      %s154 = sphi 0, %s152
      %s155 = sphi 0, %s154
      %s169 = sphi 0, %s155
      %s173 = sphi 0, %s173
      %s175 = sphi 0, %s173
      %s176 = sphi 0, %s175
      %s190 = sphi 0, %s176
      %s194 = sphi 0, %s194
      %s196 = sphi 0, %s194
      %s197 = sphi 0, %s196
      %s211 = sphi 0, %s197
      %s215 = sphi 0, %s215
      %s217 = sphi 0, %s215
      %s218 = sphi 0, %s217
      %s232 = sphi 0, %s218
      %s236 = sphi 0, %s236
      %s238 = sphi 0, %s236
      %s239 = sphi 0, %s238
      %s253 = sphi 0, %s239
      %s257 = sphi 0, %s257
      %s259 = sphi 0, %s257
      %s260 = sphi 0, %s259
      %s274 = sphi 0, %s260
      %s278 = sphi 0, %s278
      %s280 = sphi 0, %s278
      %s281 = sphi 0, %s280
      %s295 = sphi 0, %s281
      %s299 = sphi 0, %s299
      %s301 = sphi 0, %s299
      %s302 = sphi 0, %s301
      %s316 = sphi 0, %s302
      %s320 = sphi 0, %s320
      %s322 = sphi 0, %s320
      %s323 = sphi 0, %s322
      %s337 = sphi 0, %s323
      %s341 = sphi 0, %s341
      %s343 = sphi 0, %s341
      %s344 = sphi 0, %s343
      %s358 = sphi 0, %s344
      %s364 = sphi 0, %s366
      %s367 = sphi 0, %s364
      %s368 = sphi 0, %s367
      %s384 = sphi 0, %s368
    $region4: #{tpu_custom_call.1} parent=1 // loop_header_branch
      %27 = sbr.rel (%p25) target = $region8
    $region5: #{tpu_custom_call.1} parent=1 // loop_body
      %s29 = ssub.s32 %s24, 1
      %s30 = ssub.s32 %s24, 2
      %s31 = sadd.s32 %s24, 1
      %s32 = ssub.s32 %s24, %s31
      %p33 = scmp.eq.s32.totalorder %s32, 0
      %s35 = sadd.s32 %s34, 1
      %s36 = scalar_select %p33, %s34, %s35
      %p39 = pneg %p33
      %p40 = scmp.eq.s32.totalorder %s24, 1
      %p41 = por %p39, %p40
      %p42 = scmp.ne.s32.totalorder %s34, %s37
      %p43 = scmp.eq.s32.totalorder %s24, 0
      %p44 = por %p42, %p43
      %p45 = scmp.ne.s32.totalorder %s34, %s37
      %p46 = scmp.eq.s32.totalorder %s29, 1
      %p47 = por %p45, %p46
      %p48 = scmp.ne.s32.totalorder %s37, %s38
      %p49 = scmp.eq.s32.totalorder %s29, 0
      %p50 = por %p48, %p49
      %p51 = scmp.ne.s32.totalorder %s37, %s38
      %p52 = scmp.eq.s32.totalorder %s30, 1
      %p53 = por %p51, %p52
      %p55 = scmp.ne.s32.totalorder %s38, %s54
      %p56 = scmp.eq.s32.totalorder %s30, 0
      %p57 = por %p55, %p56
      %s58 = ssub.s32 %s24, %s31
      %p59 = scmp.eq.s32.totalorder %s58, 0
      %s61 = sadd.s32 %s60, 1
      %s62 = scalar_select %p59, %s60, %s61
      %p65 = pneg %p59
      %p66 = scmp.eq.s32.totalorder %s24, 1
      %p67 = por %p65, %p66
      %p68 = scmp.ne.s32.totalorder %s60, %s63
      %p69 = scmp.eq.s32.totalorder %s24, 0
      %p70 = por %p68, %p69
      %p71 = scmp.ne.s32.totalorder %s60, %s63
      %p72 = scmp.eq.s32.totalorder %s29, 1
      %p73 = por %p71, %p72
      %p74 = scmp.ne.s32.totalorder %s63, %s64
      %p75 = scmp.eq.s32.totalorder %s29, 0
      %p76 = por %p74, %p75
      %p77 = scmp.ne.s32.totalorder %s63, %s64
      %p78 = scmp.eq.s32.totalorder %s30, 1
      %p79 = por %p77, %p78
      %p81 = scmp.ne.s32.totalorder %s64, %s80
      %p82 = scmp.eq.s32.totalorder %s30, 0
      %p83 = por %p81, %p82
      %s84 = ssub.s32 %s24, %s31
      %p85 = scmp.eq.s32.totalorder %s84, 0
      %s87 = sadd.s32 %s86, 1
      %s88 = scalar_select %p85, %s86, %s87
      %p91 = pneg %p85
      %p92 = scmp.eq.s32.totalorder %s24, 1
      %p93 = por %p91, %p92
      %p94 = scmp.ne.s32.totalorder %s86, %s89
      %p95 = scmp.eq.s32.totalorder %s24, 0
      %p96 = por %p94, %p95
      %p97 = scmp.ne.s32.totalorder %s86, %s89
      %p98 = scmp.eq.s32.totalorder %s29, 1
      %p99 = por %p97, %p98
      %p100 = scmp.ne.s32.totalorder %s89, %s90
      %p101 = scmp.eq.s32.totalorder %s29, 0
      %p102 = por %p100, %p101
      %p103 = scmp.ne.s32.totalorder %s89, %s90
      %p104 = scmp.eq.s32.totalorder %s30, 1
      %p105 = por %p103, %p104
      %p107 = scmp.ne.s32.totalorder %s90, %s106
      %p108 = scmp.eq.s32.totalorder %s30, 0
      %p109 = por %p107, %p108
      %s111 = sadd.s32 %s110, 1
      %p114 = scmp.eq.s32.totalorder %s24, 1
      %p115 = scmp.ne.s32.totalorder %s110, %s112
      %p116 = scmp.eq.s32.totalorder %s24, 0
      %p117 = por %p115, %p116
      %p118 = scmp.ne.s32.totalorder %s110, %s112
      %p119 = scmp.eq.s32.totalorder %s29, 1
      %p120 = por %p118, %p119
      %p121 = scmp.ne.s32.totalorder %s112, %s113
      %p122 = scmp.eq.s32.totalorder %s29, 0
      %p123 = por %p121, %p122
      %p124 = scmp.ne.s32.totalorder %s112, %s113
      %p125 = scmp.eq.s32.totalorder %s30, 1
      %p126 = por %p124, %p125
      %p128 = scmp.ne.s32.totalorder %s113, %s127
      %p129 = scmp.eq.s32.totalorder %s30, 0
      %p130 = por %p128, %p129
      %s132 = sadd.s32 %s131, 1
      %p135 = scmp.eq.s32.totalorder %s24, 1
      %p136 = scmp.ne.s32.totalorder %s131, %s133
      %p137 = scmp.eq.s32.totalorder %s24, 0
      %p138 = por %p136, %p137
      %p139 = scmp.ne.s32.totalorder %s131, %s133
      %p140 = scmp.eq.s32.totalorder %s29, 1
      %p141 = por %p139, %p140
      %p142 = scmp.ne.s32.totalorder %s133, %s134
      %p143 = scmp.eq.s32.totalorder %s29, 0
      %p144 = por %p142, %p143
      %p145 = scmp.ne.s32.totalorder %s133, %s134
      %p146 = scmp.eq.s32.totalorder %s30, 1
      %p147 = por %p145, %p146
      %p149 = scmp.ne.s32.totalorder %s134, %s148
      %p150 = scmp.eq.s32.totalorder %s30, 0
      %p151 = por %p149, %p150
      %s153 = sadd.s32 %s152, 1
      %p156 = scmp.eq.s32.totalorder %s24, 1
      %p157 = scmp.ne.s32.totalorder %s152, %s154
      %p158 = scmp.eq.s32.totalorder %s24, 0
      %p159 = por %p157, %p158
      %p160 = scmp.ne.s32.totalorder %s152, %s154
      %p161 = scmp.eq.s32.totalorder %s29, 1
      %p162 = por %p160, %p161
      %p163 = scmp.ne.s32.totalorder %s154, %s155
      %p164 = scmp.eq.s32.totalorder %s29, 0
      %p165 = por %p163, %p164
      %p166 = scmp.ne.s32.totalorder %s154, %s155
      %p167 = scmp.eq.s32.totalorder %s30, 1
      %p168 = por %p166, %p167
      %p170 = scmp.ne.s32.totalorder %s155, %s169
      %p171 = scmp.eq.s32.totalorder %s30, 0
      %p172 = por %p170, %p171
      %s174 = sadd.s32 %s173, 1
      %p177 = scmp.eq.s32.totalorder %s24, 1
      %p178 = scmp.ne.s32.totalorder %s173, %s175
      %p179 = scmp.eq.s32.totalorder %s24, 0
      %p180 = por %p178, %p179
      %p181 = scmp.ne.s32.totalorder %s173, %s175
      %p182 = scmp.eq.s32.totalorder %s29, 1
      %p183 = por %p181, %p182
      %p184 = scmp.ne.s32.totalorder %s175, %s176
      %p185 = scmp.eq.s32.totalorder %s29, 0
      %p186 = por %p184, %p185
      %p187 = scmp.ne.s32.totalorder %s175, %s176
      %p188 = scmp.eq.s32.totalorder %s30, 1
      %p189 = por %p187, %p188
      %p191 = scmp.ne.s32.totalorder %s176, %s190
      %p192 = scmp.eq.s32.totalorder %s30, 0
      %p193 = por %p191, %p192
      %s195 = sadd.s32 %s194, 1
      %p198 = scmp.eq.s32.totalorder %s24, 1
      %p199 = scmp.ne.s32.totalorder %s194, %s196
      %p200 = scmp.eq.s32.totalorder %s24, 0
      %p201 = por %p199, %p200
      %p202 = scmp.ne.s32.totalorder %s194, %s196
      %p203 = scmp.eq.s32.totalorder %s29, 1
      %p204 = por %p202, %p203
      %p205 = scmp.ne.s32.totalorder %s196, %s197
      %p206 = scmp.eq.s32.totalorder %s29, 0
      %p207 = por %p205, %p206
      %p208 = scmp.ne.s32.totalorder %s196, %s197
      %p209 = scmp.eq.s32.totalorder %s30, 1
      %p210 = por %p208, %p209
      %p212 = scmp.ne.s32.totalorder %s197, %s211
      %p213 = scmp.eq.s32.totalorder %s30, 0
      %p214 = por %p212, %p213
      %s216 = sadd.s32 %s215, 1
      %p219 = scmp.eq.s32.totalorder %s24, 1
      %p220 = scmp.ne.s32.totalorder %s215, %s217
      %p221 = scmp.eq.s32.totalorder %s24, 0
      %p222 = por %p220, %p221
      %p223 = scmp.ne.s32.totalorder %s215, %s217
      %p224 = scmp.eq.s32.totalorder %s29, 1
      %p225 = por %p223, %p224
      %p226 = scmp.ne.s32.totalorder %s217, %s218
      %p227 = scmp.eq.s32.totalorder %s29, 0
      %p228 = por %p226, %p227
      %p229 = scmp.ne.s32.totalorder %s217, %s218
      %p230 = scmp.eq.s32.totalorder %s30, 1
      %p231 = por %p229, %p230
      %p233 = scmp.ne.s32.totalorder %s218, %s232
      %p234 = scmp.eq.s32.totalorder %s30, 0
      %p235 = por %p233, %p234
      %s237 = sadd.s32 %s236, 1
      %p240 = scmp.eq.s32.totalorder %s24, 1
      %p241 = scmp.ne.s32.totalorder %s236, %s238
      %p242 = scmp.eq.s32.totalorder %s24, 0
      %p243 = por %p241, %p242
      %p244 = scmp.ne.s32.totalorder %s236, %s238
      %p245 = scmp.eq.s32.totalorder %s29, 1
      %p246 = por %p244, %p245
      %p247 = scmp.ne.s32.totalorder %s238, %s239
      %p248 = scmp.eq.s32.totalorder %s29, 0
      %p249 = por %p247, %p248
      %p250 = scmp.ne.s32.totalorder %s238, %s239
      %p251 = scmp.eq.s32.totalorder %s30, 1
      %p252 = por %p250, %p251
      %p254 = scmp.ne.s32.totalorder %s239, %s253
      %p255 = scmp.eq.s32.totalorder %s30, 0
      %p256 = por %p254, %p255
      %s258 = sadd.s32 %s257, 1
      %p261 = scmp.eq.s32.totalorder %s24, 1
      %p262 = scmp.ne.s32.totalorder %s257, %s259
      %p263 = scmp.eq.s32.totalorder %s24, 0
      %p264 = por %p262, %p263
      %p265 = scmp.ne.s32.totalorder %s257, %s259
      %p266 = scmp.eq.s32.totalorder %s29, 1
      %p267 = por %p265, %p266
      %p268 = scmp.ne.s32.totalorder %s259, %s260
      %p269 = scmp.eq.s32.totalorder %s29, 0
      %p270 = por %p268, %p269
      %p271 = scmp.ne.s32.totalorder %s259, %s260
      %p272 = scmp.eq.s32.totalorder %s30, 1
      %p273 = por %p271, %p272
      %p275 = scmp.ne.s32.totalorder %s260, %s274
      %p276 = scmp.eq.s32.totalorder %s30, 0
      %p277 = por %p275, %p276
      %s279 = sadd.s32 %s278, 1
      %p282 = scmp.eq.s32.totalorder %s24, 1
      %p283 = scmp.ne.s32.totalorder %s278, %s280
      %p284 = scmp.eq.s32.totalorder %s24, 0
      %p285 = por %p283, %p284
      %p286 = scmp.ne.s32.totalorder %s278, %s280
      %p287 = scmp.eq.s32.totalorder %s29, 1
      %p288 = por %p286, %p287
      %p289 = scmp.ne.s32.totalorder %s280, %s281
      %p290 = scmp.eq.s32.totalorder %s29, 0
      %p291 = por %p289, %p290
      %p292 = scmp.ne.s32.totalorder %s280, %s281
      %p293 = scmp.eq.s32.totalorder %s30, 1
      %p294 = por %p292, %p293
      %p296 = scmp.ne.s32.totalorder %s281, %s295
      %p297 = scmp.eq.s32.totalorder %s30, 0
      %p298 = por %p296, %p297
      %s300 = sadd.s32 %s299, 1
      %p303 = scmp.eq.s32.totalorder %s24, 1
      %p304 = scmp.ne.s32.totalorder %s299, %s301
      %p305 = scmp.eq.s32.totalorder %s24, 0
      %p306 = por %p304, %p305
      %p307 = scmp.ne.s32.totalorder %s299, %s301
      %p308 = scmp.eq.s32.totalorder %s29, 1
      %p309 = por %p307, %p308
      %p310 = scmp.ne.s32.totalorder %s301, %s302
      %p311 = scmp.eq.s32.totalorder %s29, 0
      %p312 = por %p310, %p311
      %p313 = scmp.ne.s32.totalorder %s301, %s302
      %p314 = scmp.eq.s32.totalorder %s30, 1
      %p315 = por %p313, %p314
      %p317 = scmp.ne.s32.totalorder %s302, %s316
      %p318 = scmp.eq.s32.totalorder %s30, 0
      %p319 = por %p317, %p318
      %s321 = sadd.s32 %s320, 1
      %p324 = scmp.eq.s32.totalorder %s24, 1
      %p325 = scmp.ne.s32.totalorder %s320, %s322
      %p326 = scmp.eq.s32.totalorder %s24, 0
      %p327 = por %p325, %p326
      %p328 = scmp.ne.s32.totalorder %s320, %s322
      %p329 = scmp.eq.s32.totalorder %s29, 1
      %p330 = por %p328, %p329
      %p331 = scmp.ne.s32.totalorder %s322, %s323
      %p332 = scmp.eq.s32.totalorder %s29, 0
      %p333 = por %p331, %p332
      %p334 = scmp.ne.s32.totalorder %s322, %s323
      %p335 = scmp.eq.s32.totalorder %s30, 1
      %p336 = por %p334, %p335
      %p338 = scmp.ne.s32.totalorder %s323, %s337
      %p339 = scmp.eq.s32.totalorder %s30, 0
      %p340 = por %p338, %p339
      %s342 = sadd.s32 %s341, 1
      %p345 = scmp.eq.s32.totalorder %s24, 1
      %p346 = scmp.ne.s32.totalorder %s341, %s343
      %p347 = scmp.eq.s32.totalorder %s24, 0
      %p348 = por %p346, %p347
      %p349 = scmp.ne.s32.totalorder %s341, %s343
      %p350 = scmp.eq.s32.totalorder %s29, 1
      %p351 = por %p349, %p350
      %p352 = scmp.ne.s32.totalorder %s343, %s344
      %p353 = scmp.eq.s32.totalorder %s29, 0
      %p354 = por %p352, %p353
      %p355 = scmp.ne.s32.totalorder %s343, %s344
      %p356 = scmp.eq.s32.totalorder %s30, 1
      %p357 = por %p355, %p356
      %p359 = scmp.ne.s32.totalorder %s344, %s358
      %p360 = scmp.eq.s32.totalorder %s30, 0
      %p361 = por %p359, %p360
      %s362 = ssub.s32 %s24, %s31
      %p363 = scmp.eq.s32.totalorder %s362, 0
      %s365 = sadd.s32 %s364, 1
      %s366 = scalar_select %p363, %s364, %s365
      %p369 = pneg %p363
      %p370 = scmp.eq.s32.totalorder %s24, 1
      %p371 = por %p369, %p370
      %p372 = scmp.ne.s32.totalorder %s364, %s367
      %p373 = scmp.eq.s32.totalorder %s24, 0
      %p374 = por %p372, %p373
      %p375 = scmp.ne.s32.totalorder %s364, %s367
      %p376 = scmp.eq.s32.totalorder %s29, 1
      %p377 = por %p375, %p376
      %p378 = scmp.ne.s32.totalorder %s367, %s368
      %p379 = scmp.eq.s32.totalorder %s29, 0
      %p380 = por %p378, %p379
      %p381 = scmp.ne.s32.totalorder %s367, %s368
      %p382 = scmp.eq.s32.totalorder %s30, 1
      %p383 = por %p381, %p382
      %p385 = scmp.ne.s32.totalorder %s368, %s384
      %p386 = scmp.eq.s32.totalorder %s30, 0
      %p387 = por %p385, %p386
      %p388 = scmp.le.s32.totalorder 1, %s24
      %p389 = scmp.lt.s32.totalorder %s24, 3
      %p390 = pnand %p388, %p389
      %p391 = pneg %p390
      // Predicated region
      $region9: #{tpu_custom_call.1} parent=5 // pred_check
        _
      $region10: #{tpu_custom_call.1} parent=5 // pred_check_branch
        %393 = sbr.rel (%p390) target = $region12
      $region11: #{tpu_custom_call.1} parent=5 // pred_region
        %s394 = ssub.s32 %s24, 1
        // Predicated region
        $region13: #{tpu_custom_call.1} parent=11 // pred_check
          %p395 = pneg %p123
        $region14: #{tpu_custom_call.1} parent=11 // pred_check_branch
          %397 = sbr.rel (%p395) target = $region16
        $region15: #{tpu_custom_call.1} parent=11 // pred_region
          _
        $region16: #{tpu_custom_call.1} parent=11 // pred_fallthru
          _
        // Predicated region
        $region17: #{tpu_custom_call.1} parent=11 // pred_check
          %p398 = pneg %p144
        $region18: #{tpu_custom_call.1} parent=11 // pred_check_branch
          %400 = sbr.rel (%p398) target = $region20
        $region19: #{tpu_custom_call.1} parent=11 // pred_region
          _
        $region20: #{tpu_custom_call.1} parent=11 // pred_fallthru
          _
        // Predicated region
        $region21: #{tpu_custom_call.1} parent=11 // pred_check
          %p401 = pneg %p165
        $region22: #{tpu_custom_call.1} parent=11 // pred_check_branch
          %403 = sbr.rel (%p401) target = $region24
        $region23: #{tpu_custom_call.1} parent=11 // pred_region
          _
        $region24: #{tpu_custom_call.1} parent=11 // pred_fallthru
          _
        // Predicated region
        $region25: #{tpu_custom_call.1} parent=11 // pred_check
          %p404 = pneg %p186
        $region26: #{tpu_custom_call.1} parent=11 // pred_check_branch
          %406 = sbr.rel (%p404) target = $region28
        $region27: #{tpu_custom_call.1} parent=11 // pred_region
          _
        $region28: #{tpu_custom_call.1} parent=11 // pred_fallthru
          _
        // Predicated region
        $region29: #{tpu_custom_call.1} parent=11 // pred_check
          %p407 = pneg %p207
        $region30: #{tpu_custom_call.1} parent=11 // pred_check_branch
          %409 = sbr.rel (%p407) target = $region32
        $region31: #{tpu_custom_call.1} parent=11 // pred_region
          _
        $region32: #{tpu_custom_call.1} parent=11 // pred_fallthru
          _
        // Predicated region
        $region33: #{tpu_custom_call.1} parent=11 // pred_check
          %p410 = pneg %p228
        $region34: #{tpu_custom_call.1} parent=11 // pred_check_branch
          %412 = sbr.rel (%p410) target = $region36
        $region35: #{tpu_custom_call.1} parent=11 // pred_region
          _
        $region36: #{tpu_custom_call.1} parent=11 // pred_fallthru
          _
        // Predicated region
        $region37: #{tpu_custom_call.1} parent=11 // pred_check
          %p413 = pneg %p249
        $region38: #{tpu_custom_call.1} parent=11 // pred_check_branch
          %415 = sbr.rel (%p413) target = $region40
        $region39: #{tpu_custom_call.1} parent=11 // pred_region
          _
        $region40: #{tpu_custom_call.1} parent=11 // pred_fallthru
          _
        // Predicated region
        $region41: #{tpu_custom_call.1} parent=11 // pred_check
          %p416 = pneg %p270
        $region42: #{tpu_custom_call.1} parent=11 // pred_check_branch
          %418 = sbr.rel (%p416) target = $region44
        $region43: #{tpu_custom_call.1} parent=11 // pred_region
          _
        $region44: #{tpu_custom_call.1} parent=11 // pred_fallthru
          _
        // Predicated region
        $region45: #{tpu_custom_call.1} parent=11 // pred_check
          %p419 = pneg %p291
        $region46: #{tpu_custom_call.1} parent=11 // pred_check_branch
          %421 = sbr.rel (%p419) target = $region48
        $region47: #{tpu_custom_call.1} parent=11 // pred_region
          _
        $region48: #{tpu_custom_call.1} parent=11 // pred_fallthru
          _
        // Predicated region
        $region49: #{tpu_custom_call.1} parent=11 // pred_check
          %p422 = pneg %p312
        $region50: #{tpu_custom_call.1} parent=11 // pred_check_branch
          %424 = sbr.rel (%p422) target = $region52
        $region51: #{tpu_custom_call.1} parent=11 // pred_region
          _
        $region52: #{tpu_custom_call.1} parent=11 // pred_fallthru
          _
        // Predicated region
        $region53: #{tpu_custom_call.1} parent=11 // pred_check
          %p425 = pneg %p333
        $region54: #{tpu_custom_call.1} parent=11 // pred_check_branch
          %427 = sbr.rel (%p425) target = $region56
        $region55: #{tpu_custom_call.1} parent=11 // pred_region
          _
        $region56: #{tpu_custom_call.1} parent=11 // pred_fallthru
          _
        // Predicated region
        $region57: #{tpu_custom_call.1} parent=11 // pred_check
          %p428 = pneg %p354
        $region58: #{tpu_custom_call.1} parent=11 // pred_check_branch
          %430 = sbr.rel (%p428) target = $region60
        $region59: #{tpu_custom_call.1} parent=11 // pred_region
          _
        $region60: #{tpu_custom_call.1} parent=11 // pred_fallthru
          _
      $region12: #{tpu_custom_call.1} parent=5 // pred_fallthru
        _
      %p431 = scmp.lt.s32.totalorder %s24, 2
      // Predicated region
      $region61: #{tpu_custom_call.1} parent=5 // pred_check
        %p432 = pneg %p431
      $region62: #{tpu_custom_call.1} parent=5 // pred_check_branch
        %434 = sbr.rel (%p432) target = $region64
      $region63: #{tpu_custom_call.1} parent=5 // pred_region
        // Predicated region
        $region65: #{tpu_custom_call.1} parent=63 // pred_check
          %p435 = pneg %p44
        $region66: #{tpu_custom_call.1} parent=63 // pred_check_branch
          %437 = sbr.rel (%p435) target = $region68
        $region67: #{tpu_custom_call.1} parent=63 // pred_region
          %p438 = scmp.lt.s32.totalorder %s24, 1
          %s439 = scalar_select %p438, %s24, 1
          %s440 = smul.addr %s439, 2
          %s441 = smul.addr %s440, 4
          %s442 = scalar_lea.vmem %s0, %s441
        $region68: #{tpu_custom_call.1} parent=63 // pred_fallthru
          _
        // Predicated region
        $region69: #{tpu_custom_call.1} parent=63 // pred_check
          %p443 = pneg %p70
        $region70: #{tpu_custom_call.1} parent=63 // pred_check_branch
          %445 = sbr.rel (%p443) target = $region72
        $region71: #{tpu_custom_call.1} parent=63 // pred_region
          %p446 = scmp.lt.s32.totalorder %s24, 1
          %s447 = scalar_select %p446, %s24, 1
          %s448 = smul.addr %s447, 2
          %s449 = smul.addr %s448, 4
          %s450 = scalar_lea.vmem %s1, %s449
        $region72: #{tpu_custom_call.1} parent=63 // pred_fallthru
          _
        // Predicated region
        $region73: #{tpu_custom_call.1} parent=63 // pred_check
          %p451 = pneg %p96
        $region74: #{tpu_custom_call.1} parent=63 // pred_check_branch
          %453 = sbr.rel (%p451) target = $region76
        $region75: #{tpu_custom_call.1} parent=63 // pred_region
          %p454 = scmp.lt.s32.totalorder %s24, 1
          %s455 = scalar_select %p454, %s24, 1
          %s456 = smul.addr %s455, 2
          %s457 = smul.addr %s456, 4
          %s458 = scalar_lea.vmem %s2, %s457
        $region76: #{tpu_custom_call.1} parent=63 // pred_fallthru
          _
      $region64: #{tpu_custom_call.1} parent=5 // pred_fallthru
        _
      %p459 = scmp.le.s32.totalorder 1, %s24
      %p460 = scmp.lt.s32.totalorder %s24, 3
      %p461 = pnand %p459, %p460
      %p462 = pneg %p461
      // Predicated region
      $region77: #{tpu_custom_call.1} parent=5 // pred_check
        _
      $region78: #{tpu_custom_call.1} parent=5 // pred_check_branch
        %464 = sbr.rel (%p461) target = $region80
      $region79: #{tpu_custom_call.1} parent=5 // pred_region
        %s465 = ssub.s32 %s24, 1
        %p466 = scmp.lt.s32.totalorder %s29, 1
        %s467 = scalar_select %p466, %s29, 1
        %s468 = smul.addr %s467, 2
        %s469 = smul.addr %s468, 4
        %s470 = scalar_lea.vmem %s0, %s469
        %p471 = pneg %p50
        %p472 = pneg %p47
        %p473 = scmp.lt.s32.totalorder %s29, 1
        %s474 = scalar_select %p473, %s29, 1
        %s475 = smul.addr %s474, 2
        %s476 = smul.addr %s475, 4
        %s477 = scalar_lea.vmem %s1, %s476
        %p478 = pneg %p76
        %p479 = pneg %p73
        %p480 = scmp.lt.s32.totalorder %s29, 1
        %s481 = scalar_select %p480, %s29, 1
        %s482 = smul.addr %s481, 2
        %s483 = smul.addr %s482, 4
        %s484 = scalar_lea.vmem %s2, %s483
        %p485 = pneg %p102
        %p486 = pneg %p99
        %p487 = pneg %p123
        %p488 = pneg %p120
        %p489 = pneg %p144
        %p490 = pneg %p141
        %p491 = pneg %p165
        %p492 = pneg %p162
        %p493 = pneg %p186
        %p494 = pneg %p183
        %p495 = pneg %p207
        %p496 = pneg %p204
        %p497 = pneg %p228
        %p498 = pneg %p225
        %p499 = pneg %p249
        %p500 = pneg %p246
        %p501 = pneg %p270
        %p502 = pneg %p267
        %p503 = pneg %p291
        %p504 = pneg %p288
        %p505 = pneg %p312
        %p506 = pneg %p309
        %p507 = pneg %p333
        %p508 = pneg %p330
        %p509 = pneg %p354
        %p510 = pneg %p351
        %p511 = pneg %p380
        %p512 = pneg %p377
        %s513 = sand.u32 %s367, 1
        %s514 = scalar_lea.sflag [#allocation3], %s513
        %s515 = sand.u32 %s367, 1
        %s516 = smul.addr %s515, 8
        %s517 = scalar_lea.vmem [#allocation2], %s516
        %p518 = scmp.lt.s32.totalorder %s29, 1
        %s519 = scalar_select %p518, %s29, 1
        %s520 = smul.addr %s519, 2
        %s521 = smul.addr %s520, 4
        %s522 = scalar_lea.vmem %s0, %s521
        %p523 = scmp.lt.s32.totalorder %s29, 1
        %s524 = scalar_select %p523, %s29, 1
        %s525 = smul.addr %s524, 2
        %s526 = smul.addr %s525, 4
        %s527 = scalar_lea.vmem %s1, %s526
        %p528 = scmp.lt.s32.totalorder %s29, 1
        %s529 = scalar_select %p528, %s29, 1
        %s530 = smul.addr %s529, 2
        %s531 = smul.addr %s530, 4
        %s532 = scalar_lea.vmem %s2, %s531
        %v533 = vld [vmem:[%s6] sm:$0xff]
        %v534 = vld [vmem:[%s6 + $0x8] sm:$0xff]
        %v535 = vld [vmem:[%s6 + $0x10] sm:$0x1]
        %v536 = vld [vmem:[%s6 + $0x18] sm:$0x1]
        %v537 = vld [vmem:[%s522] sm:$0xff]
        %v538 = vld [vmem:[%s527] sm:$0xff]
        %v540 = vcombine.high %v537, %v537
        %542 = vrot.lane.b32.xlu0 %v537, 17
        %v543 = vpop.permute.xlu0 %542
        %544 = vrot.lane.b32.xlu0 %v540, 17
        %v545 = vpop.permute.xlu0 %544
        %v546 = vlaneseq
        %v547 = vand.u32 %v546, 127
        %vm548 = vcmp.lt.s32.totalorder %v547, 17
        %v549 = vsel %vm548, %v543, %v545
        %v550 = vsel %vm548, %v545, %v543
        %v551 = vlaneseq
        %v552 = vshrl.u32 %v551, 7
        %v553 = vsub.s32 0, %v552
        %v554 = vrot.slane %v533, %v553
        %v555 = vlaneseq
        %v556 = vshrl.u32 %v555, 7
        %v557 = vsub.s32 0, %v556
        %v558 = vrot.slane %v534, %v557
        %v559 = vmul.f32 %v550, %v554
        %v560 = vmul.f32 %v549, %v558
        %v562 = vcombine.high %v538, %v538
        %564 = vrot.lane.b32.xlu0 %v538, 17
        %v565 = vpop.permute.xlu0 %564
        %566 = vrot.lane.b32.xlu0 %v562, 17
        %v567 = vpop.permute.xlu0 %566
        %v568 = vsel %vm548, %v565, %v567
        %v569 = vsel %vm548, %v567, %v565
        %v570 = vmul.f32 %v569, %v554
        %v571 = vmul.f32 %v568, %v558
        %v572 = vld [vmem:[%s3] sm:$0xff]
        %v573 = vld [vmem:[%s4] sm:$0xff]
        %vm574 = vcmask 31744
        %v576 = vsel %vm574, %v573, 0
        %vm578 = vcmask 1043456
        %v580 = vsel %vm578, %v570, 0
        %v583 = vsel %vm578, %v571, 0
        %585 = vmatprep.subr.mxu0 %v583
        %586 = vmatpush1.msra.mxu0 %v580
        %587 = vmatprep.subr.mxu0 0.0
        %588 = vmatpush1.msra.mxu0 0.0
        %589 = vmatprep.subr.mxu0 0.0
        %590 = vmatpush1.msra.mxu0 0.0
        %591 = vmatprep.subr.mxu0 0.0
        %592 = vmatpush1.msra.mxu0 0.0
        %593 = vmatprep.subr.mxu0 0.0
        %594 = vmatpush1.msra.mxu0 0.0
        %595 = vmatprep.subr.mxu0 0.0
        %596 = vmatpush1.msra.mxu0 0.0
        %597 = vmatprep.subr.mxu0 0.0
        %598 = vmatpush1.msra.mxu0 0.0
        %599 = vmatprep.subr.mxu0 0.0
        %600 = vmatpush1.msra.mxu0 0.0
        %601 = vmatprep.subr.mxu0 0.0
        %602 = vmatpush1.msra.mxu0 0.0
        %603 = vmatprep.subr.mxu0 0.0
        %604 = vmatpush1.msra.mxu0 0.0
        %605 = vmatprep.subr.mxu0 0.0
        %606 = vmatpush1.msra.mxu0 0.0
        %607 = vmatprep.subr.mxu0 0.0
        %608 = vmatpush1.msra.mxu0 0.0
        %609 = vmatprep.subr.mxu0 0.0
        %610 = vmatpush1.msra.mxu0 0.0
        %611 = vmatprep.subr.mxu0 0.0
        %612 = vmatpush1.msra.mxu0 0.0
        %613 = vmatprep.subr.mxu0 0.0
        %614 = vmatpush1.msra.mxu0 0.0
        %615 = vmatprep.subr.mxu0 0.0
        %616 = vmatpush1.msra.mxu0 0.0
        %617 = vmatprep.subr.mxu0 0.0
        %618 = vmatpush1.msra.mxu0 0.0
        %619 = vmatprep.subr.mxu0 0.0
        %620 = vmatpush1.msra.mxu0 0.0
        %621 = vmatprep.subr.mxu0 0.0
        %622 = vmatpush1.msra.mxu0 0.0
        %623 = vmatprep.subr.mxu0 0.0
        %624 = vmatpush1.msra.mxu0 0.0
        %625 = vmatprep.subr.mxu0 0.0
        %626 = vmatpush1.msra.mxu0 0.0
        %627 = vmatprep.subr.mxu0 0.0
        %628 = vmatpush1.msra.mxu0 0.0
        %629 = vmatprep.subr.mxu0 0.0
        %630 = vmatpush1.msra.mxu0 0.0
        %631 = vmatprep.subr.mxu0 0.0
        %632 = vmatpush1.msra.mxu0 0.0
        %633 = vmatprep.subr.mxu0 0.0
        %634 = vmatpush1.msra.mxu0 0.0
        %635 = vmatprep.subr.mxu0 0.0
        %636 = vmatpush1.msra.mxu0 0.0
        %637 = vmatprep.subr.mxu0 0.0
        %638 = vmatpush1.msra.mxu0 0.0
        %639 = vmatprep.subr.mxu0 0.0
        %640 = vmatpush1.msra.mxu0 0.0
        %641 = vmatprep.subr.mxu0 0.0
        %642 = vmatpush1.msra.mxu0 0.0
        %643 = vmatprep.subr.mxu0 0.0
        %644 = vmatpush1.msra.mxu0 0.0
        %645 = vmatprep.subr.mxu0 0.0
        %646 = vmatpush1.msra.mxu0 0.0
        %647 = vmatprep.subr.mxu0 0.0
        %648 = vmatpush1.msra.mxu0 0.0
        %649 = vmatprep.mubr.f32.mxu0 0.0
        %650 = vmatmul.mubr.f32.gmra.mrb[0].mxu0 %v576
        %v651 = vpop.f32.mrb[0].mxu0
        %v652 = vadd.f32 0.0, %v651
        %v653 = vpop.f32.mrb[0].mxu0
        %v654 = vadd.f32 0.0, %v653
        %655 = vdwg.mxu0
        %v657 = vsel %vm574, %v572, 0
        %v660 = vsel %vm578, %v559, 0
        %v663 = vsel %vm578, %v560, 0
        %665 = vmatprep.subr.mxu0 %v663
        %666 = vmatpush1.msra.mxu0 %v660
        %667 = vmatprep.subr.mxu0 0.0
        %668 = vmatpush1.msra.mxu0 0.0
        %669 = vmatprep.subr.mxu0 0.0
        %670 = vmatpush1.msra.mxu0 0.0
        %671 = vmatprep.subr.mxu0 0.0
        %672 = vmatpush1.msra.mxu0 0.0
        %673 = vmatprep.subr.mxu0 0.0
        %674 = vmatpush1.msra.mxu0 0.0
        %675 = vmatprep.subr.mxu0 0.0
        %676 = vmatpush1.msra.mxu0 0.0
        %677 = vmatprep.subr.mxu0 0.0
        %678 = vmatpush1.msra.mxu0 0.0
        %679 = vmatprep.subr.mxu0 0.0
        %680 = vmatpush1.msra.mxu0 0.0
        %681 = vmatprep.subr.mxu0 0.0
        %682 = vmatpush1.msra.mxu0 0.0
        %683 = vmatprep.subr.mxu0 0.0
        %684 = vmatpush1.msra.mxu0 0.0
        %685 = vmatprep.subr.mxu0 0.0
        %686 = vmatpush1.msra.mxu0 0.0
        %687 = vmatprep.subr.mxu0 0.0
        %688 = vmatpush1.msra.mxu0 0.0
        %689 = vmatprep.subr.mxu0 0.0
        %690 = vmatpush1.msra.mxu0 0.0
        %691 = vmatprep.subr.mxu0 0.0
        %692 = vmatpush1.msra.mxu0 0.0
        %693 = vmatprep.subr.mxu0 0.0
        %694 = vmatpush1.msra.mxu0 0.0
        %695 = vmatprep.subr.mxu0 0.0
        %696 = vmatpush1.msra.mxu0 0.0
        %697 = vmatprep.subr.mxu0 0.0
        %698 = vmatpush1.msra.mxu0 0.0
        %699 = vmatprep.subr.mxu0 0.0
        %700 = vmatpush1.msra.mxu0 0.0
        %701 = vmatprep.subr.mxu0 0.0
        %702 = vmatpush1.msra.mxu0 0.0
        %703 = vmatprep.subr.mxu0 0.0
        %704 = vmatpush1.msra.mxu0 0.0
        %705 = vmatprep.subr.mxu0 0.0
        %706 = vmatpush1.msra.mxu0 0.0
        %707 = vmatprep.subr.mxu0 0.0
        %708 = vmatpush1.msra.mxu0 0.0
        %709 = vmatprep.subr.mxu0 0.0
        %710 = vmatpush1.msra.mxu0 0.0
        %711 = vmatprep.subr.mxu0 0.0
        %712 = vmatpush1.msra.mxu0 0.0
        %713 = vmatprep.subr.mxu0 0.0
        %714 = vmatpush1.msra.mxu0 0.0
        %715 = vmatprep.subr.mxu0 0.0
        %716 = vmatpush1.msra.mxu0 0.0
        %717 = vmatprep.subr.mxu0 0.0
        %718 = vmatpush1.msra.mxu0 0.0
        %719 = vmatprep.subr.mxu0 0.0
        %720 = vmatpush1.msra.mxu0 0.0
        %721 = vmatprep.subr.mxu0 0.0
        %722 = vmatpush1.msra.mxu0 0.0
        %723 = vmatprep.subr.mxu0 0.0
        %724 = vmatpush1.msra.mxu0 0.0
        %725 = vmatprep.subr.mxu0 0.0
        %726 = vmatpush1.msra.mxu0 0.0
        %727 = vmatprep.subr.mxu0 0.0
        %728 = vmatpush1.msra.mxu0 0.0
        %729 = vmatprep.mubr.f32.mxu0 0.0
        %730 = vmatmul.mubr.f32.gmra.mrb[0].mxu0 %v657
        %v731 = vpop.f32.mrb[0].mxu0
        %v732 = vadd.f32 %v652, %v731
        %v733 = vpop.f32.mrb[0].mxu0
        %v734 = vadd.f32 %v654, %v733
        %735 = vdwg.mxu0
        %736 = vrot.lane.b32.xlu0 %v537, 16
        %v737 = vpop.permute.xlu0 %736
        %738 = vrot.lane.b32.xlu0 %v540, 16
        %v739 = vpop.permute.xlu0 %738
        %vm740 = vcmp.lt.s32.totalorder %v547, 16
        %v741 = vsel %vm740, %v737, %v739
        %v742 = vsel %vm740, %v739, %v737
        %v743 = vlaneseq
        %v744 = vshrl.u32 %v743, 7
        %v745 = vsub.s32 1, %v744
        %v746 = vrot.slane %v533, %v745
        %v747 = vlaneseq
        %v748 = vshrl.u32 %v747, 7
        %v749 = vsub.s32 1, %v748
        %v750 = vrot.slane %v534, %v749
        %v751 = vmul.f32 %v742, %v746
        %v752 = vmul.f32 %v741, %v750
        %753 = vrot.lane.b32.xlu0 %v538, 16
        %v754 = vpop.permute.xlu0 %753
        %755 = vrot.lane.b32.xlu0 %v562, 16
        %v756 = vpop.permute.xlu0 %755
        %v757 = vsel %vm740, %v754, %v756
        %v758 = vsel %vm740, %v756, %v754
        %v759 = vmul.f32 %v758, %v746
        %v760 = vmul.f32 %v757, %v750
        %s761 = scalar_lea.vmem %s3, 8
        %v762 = vld [vmem:[%s761] sm:$0xff]
        %s763 = scalar_lea.vmem %s4, 8
        %v764 = vld [vmem:[%s763] sm:$0xff]
        %v766 = vsel %vm574, %v764, 0
        %v769 = vsel %vm578, %v759, 0
        %v772 = vsel %vm578, %v760, 0
        %774 = vmatprep.subr.mxu0 %v772
        %775 = vmatpush1.msra.mxu0 %v769
        %776 = vmatprep.subr.mxu0 0.0
        %777 = vmatpush1.msra.mxu0 0.0
        %778 = vmatprep.subr.mxu0 0.0
        %779 = vmatpush1.msra.mxu0 0.0
        %780 = vmatprep.subr.mxu0 0.0
        %781 = vmatpush1.msra.mxu0 0.0
        %782 = vmatprep.subr.mxu0 0.0
        %783 = vmatpush1.msra.mxu0 0.0
        %784 = vmatprep.subr.mxu0 0.0
        %785 = vmatpush1.msra.mxu0 0.0
        %786 = vmatprep.subr.mxu0 0.0
        %787 = vmatpush1.msra.mxu0 0.0
        %788 = vmatprep.subr.mxu0 0.0
        %789 = vmatpush1.msra.mxu0 0.0
        %790 = vmatprep.subr.mxu0 0.0
        %791 = vmatpush1.msra.mxu0 0.0
        %792 = vmatprep.subr.mxu0 0.0
        %793 = vmatpush1.msra.mxu0 0.0
        %794 = vmatprep.subr.mxu0 0.0
        %795 = vmatpush1.msra.mxu0 0.0
        %796 = vmatprep.subr.mxu0 0.0
        %797 = vmatpush1.msra.mxu0 0.0
        %798 = vmatprep.subr.mxu0 0.0
        %799 = vmatpush1.msra.mxu0 0.0
        %800 = vmatprep.subr.mxu0 0.0
        %801 = vmatpush1.msra.mxu0 0.0
        %802 = vmatprep.subr.mxu0 0.0
        %803 = vmatpush1.msra.mxu0 0.0
        %804 = vmatprep.subr.mxu0 0.0
        %805 = vmatpush1.msra.mxu0 0.0
        %806 = vmatprep.subr.mxu0 0.0
        %807 = vmatpush1.msra.mxu0 0.0
        %808 = vmatprep.subr.mxu0 0.0
        %809 = vmatpush1.msra.mxu0 0.0
        %810 = vmatprep.subr.mxu0 0.0
        %811 = vmatpush1.msra.mxu0 0.0
        %812 = vmatprep.subr.mxu0 0.0
        %813 = vmatpush1.msra.mxu0 0.0
        %814 = vmatprep.subr.mxu0 0.0
        %815 = vmatpush1.msra.mxu0 0.0
        %816 = vmatprep.subr.mxu0 0.0
        %817 = vmatpush1.msra.mxu0 0.0
        %818 = vmatprep.subr.mxu0 0.0
        %819 = vmatpush1.msra.mxu0 0.0
        %820 = vmatprep.subr.mxu0 0.0
        %821 = vmatpush1.msra.mxu0 0.0
        %822 = vmatprep.subr.mxu0 0.0
        %823 = vmatpush1.msra.mxu0 0.0
        %824 = vmatprep.subr.mxu0 0.0
        %825 = vmatpush1.msra.mxu0 0.0
        %826 = vmatprep.subr.mxu0 0.0
        %827 = vmatpush1.msra.mxu0 0.0
        %828 = vmatprep.subr.mxu0 0.0
        %829 = vmatpush1.msra.mxu0 0.0
        %830 = vmatprep.subr.mxu0 0.0
        %831 = vmatpush1.msra.mxu0 0.0
        %832 = vmatprep.subr.mxu0 0.0
        %833 = vmatpush1.msra.mxu0 0.0
        %834 = vmatprep.subr.mxu0 0.0
        %835 = vmatpush1.msra.mxu0 0.0
        %836 = vmatprep.subr.mxu0 0.0
        %837 = vmatpush1.msra.mxu0 0.0
        %838 = vmatprep.mubr.f32.mxu0 0.0
        %839 = vmatmul.mubr.f32.gmra.mrb[0].mxu0 %v766
        %v840 = vpop.f32.mrb[0].mxu0
        %v841 = vadd.f32 0.0, %v840
        %v842 = vpop.f32.mrb[0].mxu0
        %v843 = vadd.f32 0.0, %v842
        %844 = vdwg.mxu0
        %v846 = vsel %vm574, %v762, 0
        %v849 = vsel %vm578, %v751, 0
        %v852 = vsel %vm578, %v752, 0
        %854 = vmatprep.subr.mxu0 %v852
        %855 = vmatpush1.msra.mxu0 %v849
        %856 = vmatprep.subr.mxu0 0.0
        %857 = vmatpush1.msra.mxu0 0.0
        %858 = vmatprep.subr.mxu0 0.0
        %859 = vmatpush1.msra.mxu0 0.0
        %860 = vmatprep.subr.mxu0 0.0
        %861 = vmatpush1.msra.mxu0 0.0
        %862 = vmatprep.subr.mxu0 0.0
        %863 = vmatpush1.msra.mxu0 0.0
        %864 = vmatprep.subr.mxu0 0.0
        %865 = vmatpush1.msra.mxu0 0.0
        %866 = vmatprep.subr.mxu0 0.0
        %867 = vmatpush1.msra.mxu0 0.0
        %868 = vmatprep.subr.mxu0 0.0
        %869 = vmatpush1.msra.mxu0 0.0
        %870 = vmatprep.subr.mxu0 0.0
        %871 = vmatpush1.msra.mxu0 0.0
        %872 = vmatprep.subr.mxu0 0.0
        %873 = vmatpush1.msra.mxu0 0.0
        %874 = vmatprep.subr.mxu0 0.0
        %875 = vmatpush1.msra.mxu0 0.0
        %876 = vmatprep.subr.mxu0 0.0
        %877 = vmatpush1.msra.mxu0 0.0
        %878 = vmatprep.subr.mxu0 0.0
        %879 = vmatpush1.msra.mxu0 0.0
        %880 = vmatprep.subr.mxu0 0.0
        %881 = vmatpush1.msra.mxu0 0.0
        %882 = vmatprep.subr.mxu0 0.0
        %883 = vmatpush1.msra.mxu0 0.0
        %884 = vmatprep.subr.mxu0 0.0
        %885 = vmatpush1.msra.mxu0 0.0
        %886 = vmatprep.subr.mxu0 0.0
        %887 = vmatpush1.msra.mxu0 0.0
        %888 = vmatprep.subr.mxu0 0.0
        %889 = vmatpush1.msra.mxu0 0.0
        %890 = vmatprep.subr.mxu0 0.0
        %891 = vmatpush1.msra.mxu0 0.0
        %892 = vmatprep.subr.mxu0 0.0
        %893 = vmatpush1.msra.mxu0 0.0
        %894 = vmatprep.subr.mxu0 0.0
        %895 = vmatpush1.msra.mxu0 0.0
        %896 = vmatprep.subr.mxu0 0.0
        %897 = vmatpush1.msra.mxu0 0.0
        %898 = vmatprep.subr.mxu0 0.0
        %899 = vmatpush1.msra.mxu0 0.0
        %900 = vmatprep.subr.mxu0 0.0
        %901 = vmatpush1.msra.mxu0 0.0
        %902 = vmatprep.subr.mxu0 0.0
        %903 = vmatpush1.msra.mxu0 0.0
        %904 = vmatprep.subr.mxu0 0.0
        %905 = vmatpush1.msra.mxu0 0.0
        %906 = vmatprep.subr.mxu0 0.0
        %907 = vmatpush1.msra.mxu0 0.0
        %908 = vmatprep.subr.mxu0 0.0
        %909 = vmatpush1.msra.mxu0 0.0
        %910 = vmatprep.subr.mxu0 0.0
        %911 = vmatpush1.msra.mxu0 0.0
        %912 = vmatprep.subr.mxu0 0.0
        %913 = vmatpush1.msra.mxu0 0.0
        %914 = vmatprep.subr.mxu0 0.0
        %915 = vmatpush1.msra.mxu0 0.0
        %916 = vmatprep.subr.mxu0 0.0
        %917 = vmatpush1.msra.mxu0 0.0
        %918 = vmatprep.mubr.f32.mxu0 0.0
        %919 = vmatmul.mubr.f32.gmra.mrb[0].mxu0 %v846
        %v920 = vpop.f32.mrb[0].mxu0
        %v921 = vadd.f32 %v841, %v920
        %v922 = vpop.f32.mrb[0].mxu0
        %v923 = vadd.f32 %v843, %v922
        %924 = vdwg.mxu0
        %v925 = vadd.f32 %v732, %v921
        %v926 = vadd.f32 %v734, %v923
        %927 = vrot.lane.b32.xlu0 %v537, 15
        %v928 = vpop.permute.xlu0 %927
        %929 = vrot.lane.b32.xlu0 %v540, 15
        %v930 = vpop.permute.xlu0 %929
        %vm931 = vcmp.lt.s32.totalorder %v547, 15
        %v932 = vsel %vm931, %v928, %v930
        %v933 = vsel %vm931, %v930, %v928
        %v934 = vlaneseq
        %v935 = vshrl.u32 %v934, 7
        %v936 = vsub.s32 2, %v935
        %v937 = vrot.slane %v533, %v936
        %v938 = vlaneseq
        %v939 = vshrl.u32 %v938, 7
        %v940 = vsub.s32 2, %v939
        %v941 = vrot.slane %v534, %v940
        %v942 = vmul.f32 %v933, %v937
        %v943 = vmul.f32 %v932, %v941
        %944 = vrot.lane.b32.xlu0 %v538, 15
        %v945 = vpop.permute.xlu0 %944
        %946 = vrot.lane.b32.xlu0 %v562, 15
        %v947 = vpop.permute.xlu0 %946
        %v948 = vsel %vm931, %v945, %v947
        %v949 = vsel %vm931, %v947, %v945
        %v950 = vmul.f32 %v949, %v937
        %v951 = vmul.f32 %v948, %v941
        %s952 = scalar_lea.vmem %s3, 16
        %v953 = vld [vmem:[%s952] sm:$0xff]
        %s954 = scalar_lea.vmem %s4, 16
        %v955 = vld [vmem:[%s954] sm:$0xff]
        %v957 = vsel %vm574, %v955, 0
        %v960 = vsel %vm578, %v950, 0
        %v963 = vsel %vm578, %v951, 0
        %965 = vmatprep.subr.mxu0 %v963
        %966 = vmatpush1.msra.mxu0 %v960
        %967 = vmatprep.subr.mxu0 0.0
        %968 = vmatpush1.msra.mxu0 0.0
        %969 = vmatprep.subr.mxu0 0.0
        %970 = vmatpush1.msra.mxu0 0.0
        %971 = vmatprep.subr.mxu0 0.0
        %972 = vmatpush1.msra.mxu0 0.0
        %973 = vmatprep.subr.mxu0 0.0
        %974 = vmatpush1.msra.mxu0 0.0
        %975 = vmatprep.subr.mxu0 0.0
        %976 = vmatpush1.msra.mxu0 0.0
        %977 = vmatprep.subr.mxu0 0.0
        %978 = vmatpush1.msra.mxu0 0.0
        %979 = vmatprep.subr.mxu0 0.0
        %980 = vmatpush1.msra.mxu0 0.0
        %981 = vmatprep.subr.mxu0 0.0
        %982 = vmatpush1.msra.mxu0 0.0
        %983 = vmatprep.subr.mxu0 0.0
        %984 = vmatpush1.msra.mxu0 0.0
        %985 = vmatprep.subr.mxu0 0.0
        %986 = vmatpush1.msra.mxu0 0.0
        %987 = vmatprep.subr.mxu0 0.0
        %988 = vmatpush1.msra.mxu0 0.0
        %989 = vmatprep.subr.mxu0 0.0
        %990 = vmatpush1.msra.mxu0 0.0
        %991 = vmatprep.subr.mxu0 0.0
        %992 = vmatpush1.msra.mxu0 0.0
        %993 = vmatprep.subr.mxu0 0.0
        %994 = vmatpush1.msra.mxu0 0.0
        %995 = vmatprep.subr.mxu0 0.0
        %996 = vmatpush1.msra.mxu0 0.0
        %997 = vmatprep.subr.mxu0 0.0
        %998 = vmatpush1.msra.mxu0 0.0
        %999 = vmatprep.subr.mxu0 0.0
        %1000 = vmatpush1.msra.mxu0 0.0
        %1001 = vmatprep.subr.mxu0 0.0
        %1002 = vmatpush1.msra.mxu0 0.0
        %1003 = vmatprep.subr.mxu0 0.0
        %1004 = vmatpush1.msra.mxu0 0.0
        %1005 = vmatprep.subr.mxu0 0.0
        %1006 = vmatpush1.msra.mxu0 0.0
        %1007 = vmatprep.subr.mxu0 0.0
        %1008 = vmatpush1.msra.mxu0 0.0
        %1009 = vmatprep.subr.mxu0 0.0
        %1010 = vmatpush1.msra.mxu0 0.0
        %1011 = vmatprep.subr.mxu0 0.0
        %1012 = vmatpush1.msra.mxu0 0.0
        %1013 = vmatprep.subr.mxu0 0.0
        %1014 = vmatpush1.msra.mxu0 0.0
        %1015 = vmatprep.subr.mxu0 0.0
        %1016 = vmatpush1.msra.mxu0 0.0
        %1017 = vmatprep.subr.mxu0 0.0
        %1018 = vmatpush1.msra.mxu0 0.0
        %1019 = vmatprep.subr.mxu0 0.0
        %1020 = vmatpush1.msra.mxu0 0.0
        %1021 = vmatprep.subr.mxu0 0.0
        %1022 = vmatpush1.msra.mxu0 0.0
        %1023 = vmatprep.subr.mxu0 0.0
        %1024 = vmatpush1.msra.mxu0 0.0
        %1025 = vmatprep.subr.mxu0 0.0
        %1026 = vmatpush1.msra.mxu0 0.0
        %1027 = vmatprep.subr.mxu0 0.0
        %1028 = vmatpush1.msra.mxu0 0.0
        %1029 = vmatprep.mubr.f32.mxu0 0.0
        %1030 = vmatmul.mubr.f32.gmra.mrb[0].mxu0 %v957
        %v1031 = vpop.f32.mrb[0].mxu0
        %v1032 = vadd.f32 0.0, %v1031
        %v1033 = vpop.f32.mrb[0].mxu0
        %v1034 = vadd.f32 0.0, %v1033
        %1035 = vdwg.mxu0
        %v1037 = vsel %vm574, %v953, 0
        %v1040 = vsel %vm578, %v942, 0
        %v1043 = vsel %vm578, %v943, 0
        %1045 = vmatprep.subr.mxu0 %v1043
        %1046 = vmatpush1.msra.mxu0 %v1040
        %1047 = vmatprep.subr.mxu0 0.0
        %1048 = vmatpush1.msra.mxu0 0.0
        %1049 = vmatprep.subr.mxu0 0.0
        %1050 = vmatpush1.msra.mxu0 0.0
        %1051 = vmatprep.subr.mxu0 0.0
        %1052 = vmatpush1.msra.mxu0 0.0
        %1053 = vmatprep.subr.mxu0 0.0
        %1054 = vmatpush1.msra.mxu0 0.0
        %1055 = vmatprep.subr.mxu0 0.0
        %1056 = vmatpush1.msra.mxu0 0.0
        %1057 = vmatprep.subr.mxu0 0.0
        %1058 = vmatpush1.msra.mxu0 0.0
        %1059 = vmatprep.subr.mxu0 0.0
        %1060 = vmatpush1.msra.mxu0 0.0
        %1061 = vmatprep.subr.mxu0 0.0
        %1062 = vmatpush1.msra.mxu0 0.0
        %1063 = vmatprep.subr.mxu0 0.0
        %1064 = vmatpush1.msra.mxu0 0.0
        %1065 = vmatprep.subr.mxu0 0.0
        %1066 = vmatpush1.msra.mxu0 0.0
        %1067 = vmatprep.subr.mxu0 0.0
        %1068 = vmatpush1.msra.mxu0 0.0
        %1069 = vmatprep.subr.mxu0 0.0
        %1070 = vmatpush1.msra.mxu0 0.0
        %1071 = vmatprep.subr.mxu0 0.0
        %1072 = vmatpush1.msra.mxu0 0.0
        %1073 = vmatprep.subr.mxu0 0.0
        %1074 = vmatpush1.msra.mxu0 0.0
        %1075 = vmatprep.subr.mxu0 0.0
        %1076 = vmatpush1.msra.mxu0 0.0
        %1077 = vmatprep.subr.mxu0 0.0
        %1078 = vmatpush1.msra.mxu0 0.0
        %1079 = vmatprep.subr.mxu0 0.0
        %1080 = vmatpush1.msra.mxu0 0.0
        %1081 = vmatprep.subr.mxu0 0.0
        %1082 = vmatpush1.msra.mxu0 0.0
        %1083 = vmatprep.subr.mxu0 0.0
        %1084 = vmatpush1.msra.mxu0 0.0
        %1085 = vmatprep.subr.mxu0 0.0
        %1086 = vmatpush1.msra.mxu0 0.0
        %1087 = vmatprep.subr.mxu0 0.0
        %1088 = vmatpush1.msra.mxu0 0.0
        %1089 = vmatprep.subr.mxu0 0.0
        %1090 = vmatpush1.msra.mxu0 0.0
        %1091 = vmatprep.subr.mxu0 0.0
        %1092 = vmatpush1.msra.mxu0 0.0
        %1093 = vmatprep.subr.mxu0 0.0
        %1094 = vmatpush1.msra.mxu0 0.0
        %1095 = vmatprep.subr.mxu0 0.0
        %1096 = vmatpush1.msra.mxu0 0.0
        %1097 = vmatprep.subr.mxu0 0.0
        %1098 = vmatpush1.msra.mxu0 0.0
        %1099 = vmatprep.subr.mxu0 0.0
        %1100 = vmatpush1.msra.mxu0 0.0
        %1101 = vmatprep.subr.mxu0 0.0
        %1102 = vmatpush1.msra.mxu0 0.0
        %1103 = vmatprep.subr.mxu0 0.0
        %1104 = vmatpush1.msra.mxu0 0.0
        %1105 = vmatprep.subr.mxu0 0.0
        %1106 = vmatpush1.msra.mxu0 0.0
        %1107 = vmatprep.subr.mxu0 0.0
        %1108 = vmatpush1.msra.mxu0 0.0
        %1109 = vmatprep.mubr.f32.mxu0 0.0
        %1110 = vmatmul.mubr.f32.gmra.mrb[0].mxu0 %v1037
        %v1111 = vpop.f32.mrb[0].mxu0
        %v1112 = vadd.f32 %v1032, %v1111
        %v1113 = vpop.f32.mrb[0].mxu0
        %v1114 = vadd.f32 %v1034, %v1113
        %1115 = vdwg.mxu0
        %v1116 = vadd.f32 %v925, %v1112
        %v1117 = vadd.f32 %v926, %v1114
        %1118 = vrot.lane.b32.xlu0 %v537, 1
        %v1119 = vpop.permute.xlu0 %1118
        %1120 = vrot.lane.b32.xlu0 %v540, 1
        %v1121 = vpop.permute.xlu0 %1120
        %vm1122 = vcmp.lt.s32.totalorder %v547, 1
        %v1123 = vsel %vm1122, %v1119, %v1121
        %v1124 = vsel %vm1122, %v1121, %v1119
        %v1125 = vlaneseq
        %v1126 = vshrl.u32 %v1125, 7
        %v1127 = vsub.s32 3, %v1126
        %v1128 = vrot.slane %v533, %v1127
        %v1129 = vlaneseq
        %v1130 = vshrl.u32 %v1129, 7
        %v1131 = vsub.s32 3, %v1130
        %v1132 = vrot.slane %v534, %v1131
        %v1133 = vmul.f32 %v1124, %v1128
        %v1134 = vmul.f32 %v1123, %v1132
        %1135 = vrot.lane.b32.xlu0 %v538, 1
        %v1136 = vpop.permute.xlu0 %1135
        %1137 = vrot.lane.b32.xlu0 %v562, 1
        %v1138 = vpop.permute.xlu0 %1137
        %v1139 = vsel %vm1122, %v1136, %v1138
        %v1140 = vsel %vm1122, %v1138, %v1136
        %v1141 = vmul.f32 %v1140, %v1128
        %v1142 = vmul.f32 %v1139, %v1132
        %s1143 = scalar_lea.vmem %s3, 24
        %v1144 = vld [vmem:[%s1143] sm:$0xff]
        %s1145 = scalar_lea.vmem %s4, 24
        %v1146 = vld [vmem:[%s1145] sm:$0xff]
        %v1148 = vsel %vm574, %v1146, 0
        %v1151 = vsel %vm578, %v1141, 0
        %v1154 = vsel %vm578, %v1142, 0
        %1156 = vmatprep.subr.mxu0 %v1154
        %1157 = vmatpush1.msra.mxu0 %v1151
        %1158 = vmatprep.subr.mxu0 0.0
        %1159 = vmatpush1.msra.mxu0 0.0
        %1160 = vmatprep.subr.mxu0 0.0
        %1161 = vmatpush1.msra.mxu0 0.0
        %1162 = vmatprep.subr.mxu0 0.0
        %1163 = vmatpush1.msra.mxu0 0.0
        %1164 = vmatprep.subr.mxu0 0.0
        %1165 = vmatpush1.msra.mxu0 0.0
        %1166 = vmatprep.subr.mxu0 0.0
        %1167 = vmatpush1.msra.mxu0 0.0
        %1168 = vmatprep.subr.mxu0 0.0
        %1169 = vmatpush1.msra.mxu0 0.0
        %1170 = vmatprep.subr.mxu0 0.0
        %1171 = vmatpush1.msra.mxu0 0.0
        %1172 = vmatprep.subr.mxu0 0.0
        %1173 = vmatpush1.msra.mxu0 0.0
        %1174 = vmatprep.subr.mxu0 0.0
        %1175 = vmatpush1.msra.mxu0 0.0
        %1176 = vmatprep.subr.mxu0 0.0
        %1177 = vmatpush1.msra.mxu0 0.0
        %1178 = vmatprep.subr.mxu0 0.0
        %1179 = vmatpush1.msra.mxu0 0.0
        %1180 = vmatprep.subr.mxu0 0.0
        %1181 = vmatpush1.msra.mxu0 0.0
        %1182 = vmatprep.subr.mxu0 0.0
        %1183 = vmatpush1.msra.mxu0 0.0
        %1184 = vmatprep.subr.mxu0 0.0
        %1185 = vmatpush1.msra.mxu0 0.0
        %1186 = vmatprep.subr.mxu0 0.0
        %1187 = vmatpush1.msra.mxu0 0.0
        %1188 = vmatprep.subr.mxu0 0.0
        %1189 = vmatpush1.msra.mxu0 0.0
        %1190 = vmatprep.subr.mxu0 0.0
        %1191 = vmatpush1.msra.mxu0 0.0
        %1192 = vmatprep.subr.mxu0 0.0
        %1193 = vmatpush1.msra.mxu0 0.0
        %1194 = vmatprep.subr.mxu0 0.0
        %1195 = vmatpush1.msra.mxu0 0.0
        %1196 = vmatprep.subr.mxu0 0.0
        %1197 = vmatpush1.msra.mxu0 0.0
        %1198 = vmatprep.subr.mxu0 0.0
        %1199 = vmatpush1.msra.mxu0 0.0
        %1200 = vmatprep.subr.mxu0 0.0
        %1201 = vmatpush1.msra.mxu0 0.0
        %1202 = vmatprep.subr.mxu0 0.0
        %1203 = vmatpush1.msra.mxu0 0.0
        %1204 = vmatprep.subr.mxu0 0.0
        %1205 = vmatpush1.msra.mxu0 0.0
        %1206 = vmatprep.subr.mxu0 0.0
        %1207 = vmatpush1.msra.mxu0 0.0
        %1208 = vmatprep.subr.mxu0 0.0
        %1209 = vmatpush1.msra.mxu0 0.0
        %1210 = vmatprep.subr.mxu0 0.0
        %1211 = vmatpush1.msra.mxu0 0.0
        %1212 = vmatprep.subr.mxu0 0.0
        %1213 = vmatpush1.msra.mxu0 0.0
        %1214 = vmatprep.subr.mxu0 0.0
        %1215 = vmatpush1.msra.mxu0 0.0
        %1216 = vmatprep.subr.mxu0 0.0
        %1217 = vmatpush1.msra.mxu0 0.0
        %1218 = vmatprep.subr.mxu0 0.0
        %1219 = vmatpush1.msra.mxu0 0.0
        %1220 = vmatprep.mubr.f32.mxu0 0.0
        %1221 = vmatmul.mubr.f32.gmra.mrb[0].mxu0 %v1148
        %v1222 = vpop.f32.mrb[0].mxu0
        %v1223 = vadd.f32 0.0, %v1222
        %v1224 = vpop.f32.mrb[0].mxu0
        %v1225 = vadd.f32 0.0, %v1224
        %1226 = vdwg.mxu0
        %v1228 = vsel %vm574, %v1144, 0
        %v1231 = vsel %vm578, %v1133, 0
        %v1234 = vsel %vm578, %v1134, 0
        %1236 = vmatprep.subr.mxu0 %v1234
        %1237 = vmatpush1.msra.mxu0 %v1231
        %1238 = vmatprep.subr.mxu0 0.0
        %1239 = vmatpush1.msra.mxu0 0.0
        %1240 = vmatprep.subr.mxu0 0.0
        %1241 = vmatpush1.msra.mxu0 0.0
        %1242 = vmatprep.subr.mxu0 0.0
        %1243 = vmatpush1.msra.mxu0 0.0
        %1244 = vmatprep.subr.mxu0 0.0
        %1245 = vmatpush1.msra.mxu0 0.0
        %1246 = vmatprep.subr.mxu0 0.0
        %1247 = vmatpush1.msra.mxu0 0.0
        %1248 = vmatprep.subr.mxu0 0.0
        %1249 = vmatpush1.msra.mxu0 0.0
        %1250 = vmatprep.subr.mxu0 0.0
        %1251 = vmatpush1.msra.mxu0 0.0
        %1252 = vmatprep.subr.mxu0 0.0
        %1253 = vmatpush1.msra.mxu0 0.0
        %1254 = vmatprep.subr.mxu0 0.0
        %1255 = vmatpush1.msra.mxu0 0.0
        %1256 = vmatprep.subr.mxu0 0.0
        %1257 = vmatpush1.msra.mxu0 0.0
        %1258 = vmatprep.subr.mxu0 0.0
        %1259 = vmatpush1.msra.mxu0 0.0
        %1260 = vmatprep.subr.mxu0 0.0
        %1261 = vmatpush1.msra.mxu0 0.0
        %1262 = vmatprep.subr.mxu0 0.0
        %1263 = vmatpush1.msra.mxu0 0.0
        %1264 = vmatprep.subr.mxu0 0.0
        %1265 = vmatpush1.msra.mxu0 0.0
        %1266 = vmatprep.subr.mxu0 0.0
        %1267 = vmatpush1.msra.mxu0 0.0
        %1268 = vmatprep.subr.mxu0 0.0
        %1269 = vmatpush1.msra.mxu0 0.0
        %1270 = vmatprep.subr.mxu0 0.0
        %1271 = vmatpush1.msra.mxu0 0.0
        %1272 = vmatprep.subr.mxu0 0.0
        %1273 = vmatpush1.msra.mxu0 0.0
        %1274 = vmatprep.subr.mxu0 0.0
        %1275 = vmatpush1.msra.mxu0 0.0
        %1276 = vmatprep.subr.mxu0 0.0
        %1277 = vmatpush1.msra.mxu0 0.0
        %1278 = vmatprep.subr.mxu0 0.0
        %1279 = vmatpush1.msra.mxu0 0.0
        %1280 = vmatprep.subr.mxu0 0.0
        %1281 = vmatpush1.msra.mxu0 0.0
        %1282 = vmatprep.subr.mxu0 0.0
        %1283 = vmatpush1.msra.mxu0 0.0
        %1284 = vmatprep.subr.mxu0 0.0
        %1285 = vmatpush1.msra.mxu0 0.0
        %1286 = vmatprep.subr.mxu0 0.0
        %1287 = vmatpush1.msra.mxu0 0.0
        %1288 = vmatprep.subr.mxu0 0.0
        %1289 = vmatpush1.msra.mxu0 0.0
        %1290 = vmatprep.subr.mxu0 0.0
        %1291 = vmatpush1.msra.mxu0 0.0
        %1292 = vmatprep.subr.mxu0 0.0
        %1293 = vmatpush1.msra.mxu0 0.0
        %1294 = vmatprep.subr.mxu0 0.0
        %1295 = vmatpush1.msra.mxu0 0.0
        %1296 = vmatprep.subr.mxu0 0.0
        %1297 = vmatpush1.msra.mxu0 0.0
        %1298 = vmatprep.subr.mxu0 0.0
        %1299 = vmatpush1.msra.mxu0 0.0
        %1300 = vmatprep.mubr.f32.mxu0 0.0
        %1301 = vmatmul.mubr.f32.gmra.mrb[0].mxu0 %v1228
        %v1302 = vpop.f32.mrb[0].mxu0
        %v1303 = vadd.f32 %v1223, %v1302
        %v1304 = vpop.f32.mrb[0].mxu0
        %v1305 = vadd.f32 %v1225, %v1304
        %1306 = vdwg.mxu0
        %v1307 = vadd.f32 %v1116, %v1303
        %v1308 = vadd.f32 %v1117, %v1305
        %s1309 = scalar_lea.vmem %s3, 32
        %v1310 = vld [vmem:[%s1309] sm:$0xff]
        %s1311 = scalar_lea.vmem %s4, 32
        %v1312 = vld [vmem:[%s1311] sm:$0xff]
        %v1314 = vsel %vm574, %v1312, 0
        %v1316 = vsel %vm578, %v538, 0
        %v1318 = vsel %vm578, %v562, 0
        %1320 = vmatprep.subr.mxu0 %v1318
        %1321 = vmatpush1.msra.mxu0 %v1316
        %1322 = vmatprep.subr.mxu0 0.0
        %1323 = vmatpush1.msra.mxu0 0.0
        %1324 = vmatprep.subr.mxu0 0.0
        %1325 = vmatpush1.msra.mxu0 0.0
        %1326 = vmatprep.subr.mxu0 0.0
        %1327 = vmatpush1.msra.mxu0 0.0
        %1328 = vmatprep.subr.mxu0 0.0
        %1329 = vmatpush1.msra.mxu0 0.0
        %1330 = vmatprep.subr.mxu0 0.0
        %1331 = vmatpush1.msra.mxu0 0.0
        %1332 = vmatprep.subr.mxu0 0.0
        %1333 = vmatpush1.msra.mxu0 0.0
        %1334 = vmatprep.subr.mxu0 0.0
        %1335 = vmatpush1.msra.mxu0 0.0
        %1336 = vmatprep.subr.mxu0 0.0
        %1337 = vmatpush1.msra.mxu0 0.0
        %1338 = vmatprep.subr.mxu0 0.0
        %1339 = vmatpush1.msra.mxu0 0.0
        %1340 = vmatprep.subr.mxu0 0.0
        %1341 = vmatpush1.msra.mxu0 0.0
        %1342 = vmatprep.subr.mxu0 0.0
        %1343 = vmatpush1.msra.mxu0 0.0
        %1344 = vmatprep.subr.mxu0 0.0
        %1345 = vmatpush1.msra.mxu0 0.0
        %1346 = vmatprep.subr.mxu0 0.0
        %1347 = vmatpush1.msra.mxu0 0.0
        %1348 = vmatprep.subr.mxu0 0.0
        %1349 = vmatpush1.msra.mxu0 0.0
        %1350 = vmatprep.subr.mxu0 0.0
        %1351 = vmatpush1.msra.mxu0 0.0
        %1352 = vmatprep.subr.mxu0 0.0
        %1353 = vmatpush1.msra.mxu0 0.0
        %1354 = vmatprep.subr.mxu0 0.0
        %1355 = vmatpush1.msra.mxu0 0.0
        %1356 = vmatprep.subr.mxu0 0.0
        %1357 = vmatpush1.msra.mxu0 0.0
        %1358 = vmatprep.subr.mxu0 0.0
        %1359 = vmatpush1.msra.mxu0 0.0
        %1360 = vmatprep.subr.mxu0 0.0
        %1361 = vmatpush1.msra.mxu0 0.0
        %1362 = vmatprep.subr.mxu0 0.0
        %1363 = vmatpush1.msra.mxu0 0.0
        %1364 = vmatprep.subr.mxu0 0.0
        %1365 = vmatpush1.msra.mxu0 0.0
        %1366 = vmatprep.subr.mxu0 0.0
        %1367 = vmatpush1.msra.mxu0 0.0
        %1368 = vmatprep.subr.mxu0 0.0
        %1369 = vmatpush1.msra.mxu0 0.0
        %1370 = vmatprep.subr.mxu0 0.0
        %1371 = vmatpush1.msra.mxu0 0.0
        %1372 = vmatprep.subr.mxu0 0.0
        %1373 = vmatpush1.msra.mxu0 0.0
        %1374 = vmatprep.subr.mxu0 0.0
        %1375 = vmatpush1.msra.mxu0 0.0
        %1376 = vmatprep.subr.mxu0 0.0
        %1377 = vmatpush1.msra.mxu0 0.0
        %1378 = vmatprep.subr.mxu0 0.0
        %1379 = vmatpush1.msra.mxu0 0.0
        %1380 = vmatprep.subr.mxu0 0.0
        %1381 = vmatpush1.msra.mxu0 0.0
        %1382 = vmatprep.subr.mxu0 0.0
        %1383 = vmatpush1.msra.mxu0 0.0
        %1384 = vmatprep.mubr.f32.mxu0 0.0
        %1385 = vmatmul.mubr.f32.gmra.mrb[0].mxu0 %v1314
        %v1386 = vpop.f32.mrb[0].mxu0
        %v1387 = vadd.f32 0.0, %v1386
        %v1388 = vpop.f32.mrb[0].mxu0
        %v1389 = vadd.f32 0.0, %v1388
        %1390 = vdwg.mxu0
        %v1392 = vsel %vm574, %v1310, 0
        %v1394 = vsel %vm578, %v537, 0
        %v1396 = vsel %vm578, %v540, 0
        %1398 = vmatprep.subr.mxu0 %v1396
        %1399 = vmatpush1.msra.mxu0 %v1394
        %1400 = vmatprep.subr.mxu0 0.0
        %1401 = vmatpush1.msra.mxu0 0.0
        %1402 = vmatprep.subr.mxu0 0.0
        %1403 = vmatpush1.msra.mxu0 0.0
        %1404 = vmatprep.subr.mxu0 0.0
        %1405 = vmatpush1.msra.mxu0 0.0
        %1406 = vmatprep.subr.mxu0 0.0
        %1407 = vmatpush1.msra.mxu0 0.0
        %1408 = vmatprep.subr.mxu0 0.0
        %1409 = vmatpush1.msra.mxu0 0.0
        %1410 = vmatprep.subr.mxu0 0.0
        %1411 = vmatpush1.msra.mxu0 0.0
        %1412 = vmatprep.subr.mxu0 0.0
        %1413 = vmatpush1.msra.mxu0 0.0
        %1414 = vmatprep.subr.mxu0 0.0
        %1415 = vmatpush1.msra.mxu0 0.0
        %1416 = vmatprep.subr.mxu0 0.0
        %1417 = vmatpush1.msra.mxu0 0.0
        %1418 = vmatprep.subr.mxu0 0.0
        %1419 = vmatpush1.msra.mxu0 0.0
        %1420 = vmatprep.subr.mxu0 0.0
        %1421 = vmatpush1.msra.mxu0 0.0
        %1422 = vmatprep.subr.mxu0 0.0
        %1423 = vmatpush1.msra.mxu0 0.0
        %1424 = vmatprep.subr.mxu0 0.0
        %1425 = vmatpush1.msra.mxu0 0.0
        %1426 = vmatprep.subr.mxu0 0.0
        %1427 = vmatpush1.msra.mxu0 0.0
        %1428 = vmatprep.subr.mxu0 0.0
        %1429 = vmatpush1.msra.mxu0 0.0
        %1430 = vmatprep.subr.mxu0 0.0
        %1431 = vmatpush1.msra.mxu0 0.0
        %1432 = vmatprep.subr.mxu0 0.0
        %1433 = vmatpush1.msra.mxu0 0.0
        %1434 = vmatprep.subr.mxu0 0.0
        %1435 = vmatpush1.msra.mxu0 0.0
        %1436 = vmatprep.subr.mxu0 0.0
        %1437 = vmatpush1.msra.mxu0 0.0
        %1438 = vmatprep.subr.mxu0 0.0
        %1439 = vmatpush1.msra.mxu0 0.0
        %1440 = vmatprep.subr.mxu0 0.0
        %1441 = vmatpush1.msra.mxu0 0.0
        %1442 = vmatprep.subr.mxu0 0.0
        %1443 = vmatpush1.msra.mxu0 0.0
        %1444 = vmatprep.subr.mxu0 0.0
        %1445 = vmatpush1.msra.mxu0 0.0
        %1446 = vmatprep.subr.mxu0 0.0
        %1447 = vmatpush1.msra.mxu0 0.0
        %1448 = vmatprep.subr.mxu0 0.0
        %1449 = vmatpush1.msra.mxu0 0.0
        %1450 = vmatprep.subr.mxu0 0.0
        %1451 = vmatpush1.msra.mxu0 0.0
        %1452 = vmatprep.subr.mxu0 0.0
        %1453 = vmatpush1.msra.mxu0 0.0
        %1454 = vmatprep.subr.mxu0 0.0
        %1455 = vmatpush1.msra.mxu0 0.0
        %1456 = vmatprep.subr.mxu0 0.0
        %1457 = vmatpush1.msra.mxu0 0.0
        %1458 = vmatprep.subr.mxu0 0.0
        %1459 = vmatpush1.msra.mxu0 0.0
        %1460 = vmatprep.subr.mxu0 0.0
        %1461 = vmatpush1.msra.mxu0 0.0
        %1462 = vmatprep.mubr.f32.mxu0 0.0
        %1463 = vmatmul.mubr.f32.gmra.mrb[0].mxu0 %v1392
        %v1464 = vpop.f32.mrb[0].mxu0
        %v1465 = vadd.f32 %v1387, %v1464
        %v1466 = vpop.f32.mrb[0].mxu0
        %v1467 = vadd.f32 %v1389, %v1466
        %1468 = vdwg.mxu0
        %v1469 = vadd.f32 %v1307, %v1465
        %v1470 = vadd.f32 %v1308, %v1467
        %1471 = vrot.lane.b32.xlu0 %v537, 127
        %v1472 = vpop.permute.xlu0 %1471
        %1473 = vrot.lane.b32.xlu0 %v540, 127
        %v1474 = vpop.permute.xlu0 %1473
        %vm1475 = vcmp.lt.s32.totalorder %v547, 127
        %v1476 = vsel %vm1475, %v1472, %v1474
        %v1477 = vsel %vm1475, %v1474, %v1472
        %v1478 = vlaneseq
        %v1479 = vshrl.u32 %v1478, 7
        %v1480 = vsub.s32 5, %v1479
        %v1481 = vrot.slane %v533, %v1480
        %v1482 = vlaneseq
        %v1483 = vshrl.u32 %v1482, 7
        %v1484 = vsub.s32 5, %v1483
        %v1485 = vrot.slane %v534, %v1484
        %v1486 = vmul.f32 %v1476, %v1481
        %v1487 = vmul.f32 %v1477, %v1485
        %1488 = vrot.lane.b32.xlu0 %v538, 127
        %v1489 = vpop.permute.xlu0 %1488
        %1490 = vrot.lane.b32.xlu0 %v562, 127
        %v1491 = vpop.permute.xlu0 %1490
        %v1492 = vsel %vm1475, %v1489, %v1491
        %v1493 = vsel %vm1475, %v1491, %v1489
        %v1494 = vmul.f32 %v1492, %v1481
        %v1495 = vmul.f32 %v1493, %v1485
        %s1496 = scalar_lea.vmem %s3, 40
        %v1497 = vld [vmem:[%s1496] sm:$0xff]
        %s1498 = scalar_lea.vmem %s4, 40
        %v1499 = vld [vmem:[%s1498] sm:$0xff]
        %v1501 = vsel %vm574, %v1499, 0
        %v1504 = vsel %vm578, %v1494, 0
        %v1507 = vsel %vm578, %v1495, 0
        %1509 = vmatprep.subr.mxu0 %v1507
        %1510 = vmatpush1.msra.mxu0 %v1504
        %1511 = vmatprep.subr.mxu0 0.0
        %1512 = vmatpush1.msra.mxu0 0.0
        %1513 = vmatprep.subr.mxu0 0.0
        %1514 = vmatpush1.msra.mxu0 0.0
        %1515 = vmatprep.subr.mxu0 0.0
        %1516 = vmatpush1.msra.mxu0 0.0
        %1517 = vmatprep.subr.mxu0 0.0
        %1518 = vmatpush1.msra.mxu0 0.0
        %1519 = vmatprep.subr.mxu0 0.0
        %1520 = vmatpush1.msra.mxu0 0.0
        %1521 = vmatprep.subr.mxu0 0.0
        %1522 = vmatpush1.msra.mxu0 0.0
        %1523 = vmatprep.subr.mxu0 0.0
        %1524 = vmatpush1.msra.mxu0 0.0
        %1525 = vmatprep.subr.mxu0 0.0
        %1526 = vmatpush1.msra.mxu0 0.0
        %1527 = vmatprep.subr.mxu0 0.0
        %1528 = vmatpush1.msra.mxu0 0.0
        %1529 = vmatprep.subr.mxu0 0.0
        %1530 = vmatpush1.msra.mxu0 0.0
        %1531 = vmatprep.subr.mxu0 0.0
        %1532 = vmatpush1.msra.mxu0 0.0
        %1533 = vmatprep.subr.mxu0 0.0
        %1534 = vmatpush1.msra.mxu0 0.0
        %1535 = vmatprep.subr.mxu0 0.0
        %1536 = vmatpush1.msra.mxu0 0.0
        %1537 = vmatprep.subr.mxu0 0.0
        %1538 = vmatpush1.msra.mxu0 0.0
        %1539 = vmatprep.subr.mxu0 0.0
        %1540 = vmatpush1.msra.mxu0 0.0
        %1541 = vmatprep.subr.mxu0 0.0
        %1542 = vmatpush1.msra.mxu0 0.0
        %1543 = vmatprep.subr.mxu0 0.0
        %1544 = vmatpush1.msra.mxu0 0.0
        %1545 = vmatprep.subr.mxu0 0.0
        %1546 = vmatpush1.msra.mxu0 0.0
        %1547 = vmatprep.subr.mxu0 0.0
        %1548 = vmatpush1.msra.mxu0 0.0
        %1549 = vmatprep.subr.mxu0 0.0
        %1550 = vmatpush1.msra.mxu0 0.0
        %1551 = vmatprep.subr.mxu0 0.0
        %1552 = vmatpush1.msra.mxu0 0.0
        %1553 = vmatprep.subr.mxu0 0.0
        %1554 = vmatpush1.msra.mxu0 0.0
        %1555 = vmatprep.subr.mxu0 0.0
        %1556 = vmatpush1.msra.mxu0 0.0
        %1557 = vmatprep.subr.mxu0 0.0
        %1558 = vmatpush1.msra.mxu0 0.0
        %1559 = vmatprep.subr.mxu0 0.0
        %1560 = vmatpush1.msra.mxu0 0.0
        %1561 = vmatprep.subr.mxu0 0.0
        %1562 = vmatpush1.msra.mxu0 0.0
        %1563 = vmatprep.subr.mxu0 0.0
        %1564 = vmatpush1.msra.mxu0 0.0
        %1565 = vmatprep.subr.mxu0 0.0
        %1566 = vmatpush1.msra.mxu0 0.0
        %1567 = vmatprep.subr.mxu0 0.0
        %1568 = vmatpush1.msra.mxu0 0.0
        %1569 = vmatprep.subr.mxu0 0.0
        %1570 = vmatpush1.msra.mxu0 0.0
        %1571 = vmatprep.subr.mxu0 0.0
        %1572 = vmatpush1.msra.mxu0 0.0
        %1573 = vmatprep.mubr.f32.mxu0 0.0
        %1574 = vmatmul.mubr.f32.gmra.mrb[0].mxu0 %v1501
        %v1575 = vpop.f32.mrb[0].mxu0
        %v1576 = vadd.f32 0.0, %v1575
        %v1577 = vpop.f32.mrb[0].mxu0
        %v1578 = vadd.f32 0.0, %v1577
        %1579 = vdwg.mxu0
        %v1581 = vsel %vm574, %v1497, 0
        %v1584 = vsel %vm578, %v1486, 0
        %v1587 = vsel %vm578, %v1487, 0
        %1589 = vmatprep.subr.mxu0 %v1587
        %1590 = vmatpush1.msra.mxu0 %v1584
        %1591 = vmatprep.subr.mxu0 0.0
        %1592 = vmatpush1.msra.mxu0 0.0
        %1593 = vmatprep.subr.mxu0 0.0
        %1594 = vmatpush1.msra.mxu0 0.0
        %1595 = vmatprep.subr.mxu0 0.0
        %1596 = vmatpush1.msra.mxu0 0.0
        %1597 = vmatprep.subr.mxu0 0.0
        %1598 = vmatpush1.msra.mxu0 0.0
        %1599 = vmatprep.subr.mxu0 0.0
        %1600 = vmatpush1.msra.mxu0 0.0
        %1601 = vmatprep.subr.mxu0 0.0
        %1602 = vmatpush1.msra.mxu0 0.0
        %1603 = vmatprep.subr.mxu0 0.0
        %1604 = vmatpush1.msra.mxu0 0.0
        %1605 = vmatprep.subr.mxu0 0.0
        %1606 = vmatpush1.msra.mxu0 0.0
        %1607 = vmatprep.subr.mxu0 0.0
        %1608 = vmatpush1.msra.mxu0 0.0
        %1609 = vmatprep.subr.mxu0 0.0
        %1610 = vmatpush1.msra.mxu0 0.0
        %1611 = vmatprep.subr.mxu0 0.0
        %1612 = vmatpush1.msra.mxu0 0.0
        %1613 = vmatprep.subr.mxu0 0.0
        %1614 = vmatpush1.msra.mxu0 0.0
        %1615 = vmatprep.subr.mxu0 0.0
        %1616 = vmatpush1.msra.mxu0 0.0
        %1617 = vmatprep.subr.mxu0 0.0
        %1618 = vmatpush1.msra.mxu0 0.0
        %1619 = vmatprep.subr.mxu0 0.0
        %1620 = vmatpush1.msra.mxu0 0.0
        %1621 = vmatprep.subr.mxu0 0.0
        %1622 = vmatpush1.msra.mxu0 0.0
        %1623 = vmatprep.subr.mxu0 0.0
        %1624 = vmatpush1.msra.mxu0 0.0
        %1625 = vmatprep.subr.mxu0 0.0
        %1626 = vmatpush1.msra.mxu0 0.0
        %1627 = vmatprep.subr.mxu0 0.0
        %1628 = vmatpush1.msra.mxu0 0.0
        %1629 = vmatprep.subr.mxu0 0.0
        %1630 = vmatpush1.msra.mxu0 0.0
        %1631 = vmatprep.subr.mxu0 0.0
        %1632 = vmatpush1.msra.mxu0 0.0
        %1633 = vmatprep.subr.mxu0 0.0
        %1634 = vmatpush1.msra.mxu0 0.0
        %1635 = vmatprep.subr.mxu0 0.0
        %1636 = vmatpush1.msra.mxu0 0.0
        %1637 = vmatprep.subr.mxu0 0.0
        %1638 = vmatpush1.msra.mxu0 0.0
        %1639 = vmatprep.subr.mxu0 0.0
        %1640 = vmatpush1.msra.mxu0 0.0
        %1641 = vmatprep.subr.mxu0 0.0
        %1642 = vmatpush1.msra.mxu0 0.0
        %1643 = vmatprep.subr.mxu0 0.0
        %1644 = vmatpush1.msra.mxu0 0.0
        %1645 = vmatprep.subr.mxu0 0.0
        %1646 = vmatpush1.msra.mxu0 0.0
        %1647 = vmatprep.subr.mxu0 0.0
        %1648 = vmatpush1.msra.mxu0 0.0
        %1649 = vmatprep.subr.mxu0 0.0
        %1650 = vmatpush1.msra.mxu0 0.0
        %1651 = vmatprep.subr.mxu0 0.0
        %1652 = vmatpush1.msra.mxu0 0.0
        %1653 = vmatprep.mubr.f32.mxu0 0.0
        %1654 = vmatmul.mubr.f32.gmra.mrb[0].mxu0 %v1581
        %v1655 = vpop.f32.mrb[0].mxu0
        %v1656 = vadd.f32 %v1576, %v1655
        %v1657 = vpop.f32.mrb[0].mxu0
        %v1658 = vadd.f32 %v1578, %v1657
        %1659 = vdwg.mxu0
        %v1660 = vadd.f32 %v1469, %v1656
        %v1661 = vadd.f32 %v1470, %v1658
        %1662 = vrot.lane.b32.xlu0 %v537, 113
        %v1663 = vpop.permute.xlu0 %1662
        %1664 = vrot.lane.b32.xlu0 %v540, 113
        %v1665 = vpop.permute.xlu0 %1664
        %vm1666 = vcmp.lt.s32.totalorder %v547, 113
        %v1667 = vsel %vm1666, %v1663, %v1665
        %v1668 = vsel %vm1666, %v1665, %v1663
        %v1669 = vlaneseq
        %v1670 = vshrl.u32 %v1669, 7
        %v1671 = vsub.s32 6, %v1670
        %v1672 = vrot.slane %v533, %v1671
        %v1673 = vlaneseq
        %v1674 = vshrl.u32 %v1673, 7
        %v1675 = vsub.s32 6, %v1674
        %v1676 = vrot.slane %v534, %v1675
        %v1677 = vmul.f32 %v1667, %v1672
        %v1678 = vmul.f32 %v1668, %v1676
        %1679 = vrot.lane.b32.xlu0 %v538, 113
        %v1680 = vpop.permute.xlu0 %1679
        %1681 = vrot.lane.b32.xlu0 %v562, 113
        %v1682 = vpop.permute.xlu0 %1681
        %v1683 = vsel %vm1666, %v1680, %v1682
        %v1684 = vsel %vm1666, %v1682, %v1680
        %v1685 = vmul.f32 %v1683, %v1672
        %v1686 = vmul.f32 %v1684, %v1676
        %s1687 = scalar_lea.vmem %s3, 48
        %v1688 = vld [vmem:[%s1687] sm:$0xff]
        %s1689 = scalar_lea.vmem %s4, 48
        %v1690 = vld [vmem:[%s1689] sm:$0xff]
        %v1692 = vsel %vm574, %v1690, 0
        %v1695 = vsel %vm578, %v1685, 0
        %v1698 = vsel %vm578, %v1686, 0
        %1700 = vmatprep.subr.mxu0 %v1698
        %1701 = vmatpush1.msra.mxu0 %v1695
        %1702 = vmatprep.subr.mxu0 0.0
        %1703 = vmatpush1.msra.mxu0 0.0
        %1704 = vmatprep.subr.mxu0 0.0
        %1705 = vmatpush1.msra.mxu0 0.0
        %1706 = vmatprep.subr.mxu0 0.0
        %1707 = vmatpush1.msra.mxu0 0.0
        %1708 = vmatprep.subr.mxu0 0.0
        %1709 = vmatpush1.msra.mxu0 0.0
        %1710 = vmatprep.subr.mxu0 0.0
        %1711 = vmatpush1.msra.mxu0 0.0
        %1712 = vmatprep.subr.mxu0 0.0
        %1713 = vmatpush1.msra.mxu0 0.0
        %1714 = vmatprep.subr.mxu0 0.0
        %1715 = vmatpush1.msra.mxu0 0.0
        %1716 = vmatprep.subr.mxu0 0.0
        %1717 = vmatpush1.msra.mxu0 0.0
        %1718 = vmatprep.subr.mxu0 0.0
        %1719 = vmatpush1.msra.mxu0 0.0
        %1720 = vmatprep.subr.mxu0 0.0
        %1721 = vmatpush1.msra.mxu0 0.0
        %1722 = vmatprep.subr.mxu0 0.0
        %1723 = vmatpush1.msra.mxu0 0.0
        %1724 = vmatprep.subr.mxu0 0.0
        %1725 = vmatpush1.msra.mxu0 0.0
        %1726 = vmatprep.subr.mxu0 0.0
        %1727 = vmatpush1.msra.mxu0 0.0
        %1728 = vmatprep.subr.mxu0 0.0
        %1729 = vmatpush1.msra.mxu0 0.0
        %1730 = vmatprep.subr.mxu0 0.0
        %1731 = vmatpush1.msra.mxu0 0.0
        %1732 = vmatprep.subr.mxu0 0.0
        %1733 = vmatpush1.msra.mxu0 0.0
        %1734 = vmatprep.subr.mxu0 0.0
        %1735 = vmatpush1.msra.mxu0 0.0
        %1736 = vmatprep.subr.mxu0 0.0
        %1737 = vmatpush1.msra.mxu0 0.0
        %1738 = vmatprep.subr.mxu0 0.0
        %1739 = vmatpush1.msra.mxu0 0.0
        %1740 = vmatprep.subr.mxu0 0.0
        %1741 = vmatpush1.msra.mxu0 0.0
        %1742 = vmatprep.subr.mxu0 0.0
        %1743 = vmatpush1.msra.mxu0 0.0
        %1744 = vmatprep.subr.mxu0 0.0
        %1745 = vmatpush1.msra.mxu0 0.0
        %1746 = vmatprep.subr.mxu0 0.0
        %1747 = vmatpush1.msra.mxu0 0.0
        %1748 = vmatprep.subr.mxu0 0.0
        %1749 = vmatpush1.msra.mxu0 0.0
        %1750 = vmatprep.subr.mxu0 0.0
        %1751 = vmatpush1.msra.mxu0 0.0
        %1752 = vmatprep.subr.mxu0 0.0
        %1753 = vmatpush1.msra.mxu0 0.0
        %1754 = vmatprep.subr.mxu0 0.0
        %1755 = vmatpush1.msra.mxu0 0.0
        %1756 = vmatprep.subr.mxu0 0.0
        %1757 = vmatpush1.msra.mxu0 0.0
        %1758 = vmatprep.subr.mxu0 0.0
        %1759 = vmatpush1.msra.mxu0 0.0
        %1760 = vmatprep.subr.mxu0 0.0
        %1761 = vmatpush1.msra.mxu0 0.0
        %1762 = vmatprep.subr.mxu0 0.0
        %1763 = vmatpush1.msra.mxu0 0.0
        %1764 = vmatprep.mubr.f32.mxu0 0.0
        %1765 = vmatmul.mubr.f32.gmra.mrb[0].mxu0 %v1692
        %v1766 = vpop.f32.mrb[0].mxu0
        %v1767 = vadd.f32 0.0, %v1766
        %v1768 = vpop.f32.mrb[0].mxu0
        %v1769 = vadd.f32 0.0, %v1768
        %1770 = vdwg.mxu0
        %v1772 = vsel %vm574, %v1688, 0
        %v1775 = vsel %vm578, %v1677, 0
        %v1778 = vsel %vm578, %v1678, 0
        %1780 = vmatprep.subr.mxu0 %v1778
        %1781 = vmatpush1.msra.mxu0 %v1775
        %1782 = vmatprep.subr.mxu0 0.0
        %1783 = vmatpush1.msra.mxu0 0.0
        %1784 = vmatprep.subr.mxu0 0.0
        %1785 = vmatpush1.msra.mxu0 0.0
        %1786 = vmatprep.subr.mxu0 0.0
        %1787 = vmatpush1.msra.mxu0 0.0
        %1788 = vmatprep.subr.mxu0 0.0
        %1789 = vmatpush1.msra.mxu0 0.0
        %1790 = vmatprep.subr.mxu0 0.0
        %1791 = vmatpush1.msra.mxu0 0.0
        %1792 = vmatprep.subr.mxu0 0.0
        %1793 = vmatpush1.msra.mxu0 0.0
        %1794 = vmatprep.subr.mxu0 0.0
        %1795 = vmatpush1.msra.mxu0 0.0
        %1796 = vmatprep.subr.mxu0 0.0
        %1797 = vmatpush1.msra.mxu0 0.0
        %1798 = vmatprep.subr.mxu0 0.0
        %1799 = vmatpush1.msra.mxu0 0.0
        %1800 = vmatprep.subr.mxu0 0.0
        %1801 = vmatpush1.msra.mxu0 0.0
        %1802 = vmatprep.subr.mxu0 0.0
        %1803 = vmatpush1.msra.mxu0 0.0
        %1804 = vmatprep.subr.mxu0 0.0
        %1805 = vmatpush1.msra.mxu0 0.0
        %1806 = vmatprep.subr.mxu0 0.0
        %1807 = vmatpush1.msra.mxu0 0.0
        %1808 = vmatprep.subr.mxu0 0.0
        %1809 = vmatpush1.msra.mxu0 0.0
        %1810 = vmatprep.subr.mxu0 0.0
        %1811 = vmatpush1.msra.mxu0 0.0
        %1812 = vmatprep.subr.mxu0 0.0
        %1813 = vmatpush1.msra.mxu0 0.0
        %1814 = vmatprep.subr.mxu0 0.0
        %1815 = vmatpush1.msra.mxu0 0.0
        %1816 = vmatprep.subr.mxu0 0.0
        %1817 = vmatpush1.msra.mxu0 0.0
        %1818 = vmatprep.subr.mxu0 0.0
        %1819 = vmatpush1.msra.mxu0 0.0
        %1820 = vmatprep.subr.mxu0 0.0
        %1821 = vmatpush1.msra.mxu0 0.0
        %1822 = vmatprep.subr.mxu0 0.0
        %1823 = vmatpush1.msra.mxu0 0.0
        %1824 = vmatprep.subr.mxu0 0.0
        %1825 = vmatpush1.msra.mxu0 0.0
        %1826 = vmatprep.subr.mxu0 0.0
        %1827 = vmatpush1.msra.mxu0 0.0
        %1828 = vmatprep.subr.mxu0 0.0
        %1829 = vmatpush1.msra.mxu0 0.0
        %1830 = vmatprep.subr.mxu0 0.0
        %1831 = vmatpush1.msra.mxu0 0.0
        %1832 = vmatprep.subr.mxu0 0.0
        %1833 = vmatpush1.msra.mxu0 0.0
        %1834 = vmatprep.subr.mxu0 0.0
        %1835 = vmatpush1.msra.mxu0 0.0
        %1836 = vmatprep.subr.mxu0 0.0
        %1837 = vmatpush1.msra.mxu0 0.0
        %1838 = vmatprep.subr.mxu0 0.0
        %1839 = vmatpush1.msra.mxu0 0.0
        %1840 = vmatprep.subr.mxu0 0.0
        %1841 = vmatpush1.msra.mxu0 0.0
        %1842 = vmatprep.subr.mxu0 0.0
        %1843 = vmatpush1.msra.mxu0 0.0
        %1844 = vmatprep.mubr.f32.mxu0 0.0
        %1845 = vmatmul.mubr.f32.gmra.mrb[0].mxu0 %v1772
        %v1846 = vpop.f32.mrb[0].mxu0
        %v1847 = vadd.f32 %v1767, %v1846
        %v1848 = vpop.f32.mrb[0].mxu0
        %v1849 = vadd.f32 %v1769, %v1848
        %1850 = vdwg.mxu0
        %v1851 = vadd.f32 %v1660, %v1847
        %v1852 = vadd.f32 %v1661, %v1849
        %1853 = vrot.lane.b32.xlu0 %v537, 112
        %v1854 = vpop.permute.xlu0 %1853
        %1855 = vrot.lane.b32.xlu0 %v540, 112
        %v1856 = vpop.permute.xlu0 %1855
        %vm1857 = vcmp.lt.s32.totalorder %v547, 112
        %v1858 = vsel %vm1857, %v1854, %v1856
        %v1859 = vsel %vm1857, %v1856, %v1854
        %v1860 = vlaneseq
        %v1861 = vshrl.u32 %v1860, 7
        %v1862 = vsub.s32 7, %v1861
        %v1863 = vrot.slane %v533, %v1862
        %v1864 = vlaneseq
        %v1865 = vshrl.u32 %v1864, 7
        %v1866 = vsub.s32 7, %v1865
        %v1867 = vrot.slane %v534, %v1866
        %v1868 = vmul.f32 %v1858, %v1863
        %v1869 = vmul.f32 %v1859, %v1867
        %1870 = vrot.lane.b32.xlu0 %v538, 112
        %v1871 = vpop.permute.xlu0 %1870
        %1872 = vrot.lane.b32.xlu0 %v562, 112
        %v1873 = vpop.permute.xlu0 %1872
        %v1874 = vsel %vm1857, %v1871, %v1873
        %v1875 = vsel %vm1857, %v1873, %v1871
        %v1876 = vmul.f32 %v1874, %v1863
        %v1877 = vmul.f32 %v1875, %v1867
        %s1878 = scalar_lea.vmem %s3, 56
        %v1879 = vld [vmem:[%s1878] sm:$0xff]
        %s1880 = scalar_lea.vmem %s4, 56
        %v1881 = vld [vmem:[%s1880] sm:$0xff]
        %v1883 = vsel %vm574, %v1881, 0
        %v1886 = vsel %vm578, %v1876, 0
        %v1889 = vsel %vm578, %v1877, 0
        %1891 = vmatprep.subr.mxu0 %v1889
        %1892 = vmatpush1.msra.mxu0 %v1886
        %1893 = vmatprep.subr.mxu0 0.0
        %1894 = vmatpush1.msra.mxu0 0.0
        %1895 = vmatprep.subr.mxu0 0.0
        %1896 = vmatpush1.msra.mxu0 0.0
        %1897 = vmatprep.subr.mxu0 0.0
        %1898 = vmatpush1.msra.mxu0 0.0
        %1899 = vmatprep.subr.mxu0 0.0
        %1900 = vmatpush1.msra.mxu0 0.0
        %1901 = vmatprep.subr.mxu0 0.0
        %1902 = vmatpush1.msra.mxu0 0.0
        %1903 = vmatprep.subr.mxu0 0.0
        %1904 = vmatpush1.msra.mxu0 0.0
        %1905 = vmatprep.subr.mxu0 0.0
        %1906 = vmatpush1.msra.mxu0 0.0
        %1907 = vmatprep.subr.mxu0 0.0
        %1908 = vmatpush1.msra.mxu0 0.0
        %1909 = vmatprep.subr.mxu0 0.0
        %1910 = vmatpush1.msra.mxu0 0.0
        %1911 = vmatprep.subr.mxu0 0.0
        %1912 = vmatpush1.msra.mxu0 0.0
        %1913 = vmatprep.subr.mxu0 0.0
        %1914 = vmatpush1.msra.mxu0 0.0
        %1915 = vmatprep.subr.mxu0 0.0
        %1916 = vmatpush1.msra.mxu0 0.0
        %1917 = vmatprep.subr.mxu0 0.0
        %1918 = vmatpush1.msra.mxu0 0.0
        %1919 = vmatprep.subr.mxu0 0.0
        %1920 = vmatpush1.msra.mxu0 0.0
        %1921 = vmatprep.subr.mxu0 0.0
        %1922 = vmatpush1.msra.mxu0 0.0
        %1923 = vmatprep.subr.mxu0 0.0
        %1924 = vmatpush1.msra.mxu0 0.0
        %1925 = vmatprep.subr.mxu0 0.0
        %1926 = vmatpush1.msra.mxu0 0.0
        %1927 = vmatprep.subr.mxu0 0.0
        %1928 = vmatpush1.msra.mxu0 0.0
        %1929 = vmatprep.subr.mxu0 0.0
        %1930 = vmatpush1.msra.mxu0 0.0
        %1931 = vmatprep.subr.mxu0 0.0
        %1932 = vmatpush1.msra.mxu0 0.0
        %1933 = vmatprep.subr.mxu0 0.0
        %1934 = vmatpush1.msra.mxu0 0.0
        %1935 = vmatprep.subr.mxu0 0.0
        %1936 = vmatpush1.msra.mxu0 0.0
        %1937 = vmatprep.subr.mxu0 0.0
        %1938 = vmatpush1.msra.mxu0 0.0
        %1939 = vmatprep.subr.mxu0 0.0
        %1940 = vmatpush1.msra.mxu0 0.0
        %1941 = vmatprep.subr.mxu0 0.0
        %1942 = vmatpush1.msra.mxu0 0.0
        %1943 = vmatprep.subr.mxu0 0.0
        %1944 = vmatpush1.msra.mxu0 0.0
        %1945 = vmatprep.subr.mxu0 0.0
        %1946 = vmatpush1.msra.mxu0 0.0
        %1947 = vmatprep.subr.mxu0 0.0
        %1948 = vmatpush1.msra.mxu0 0.0
        %1949 = vmatprep.subr.mxu0 0.0
        %1950 = vmatpush1.msra.mxu0 0.0
        %1951 = vmatprep.subr.mxu0 0.0
        %1952 = vmatpush1.msra.mxu0 0.0
        %1953 = vmatprep.subr.mxu0 0.0
        %1954 = vmatpush1.msra.mxu0 0.0
        %1955 = vmatprep.mubr.f32.mxu0 0.0
        %1956 = vmatmul.mubr.f32.gmra.mrb[0].mxu0 %v1883
        %v1957 = vpop.f32.mrb[0].mxu0
        %v1958 = vadd.f32 0.0, %v1957
        %v1959 = vpop.f32.mrb[0].mxu0
        %v1960 = vadd.f32 0.0, %v1959
        %1961 = vdwg.mxu0
        %v1963 = vsel %vm574, %v1879, 0
        %v1966 = vsel %vm578, %v1868, 0
        %v1969 = vsel %vm578, %v1869, 0
        %1971 = vmatprep.subr.mxu0 %v1969
        %1972 = vmatpush1.msra.mxu0 %v1966
        %1973 = vmatprep.subr.mxu0 0.0
        %1974 = vmatpush1.msra.mxu0 0.0
        %1975 = vmatprep.subr.mxu0 0.0
        %1976 = vmatpush1.msra.mxu0 0.0
        %1977 = vmatprep.subr.mxu0 0.0
        %1978 = vmatpush1.msra.mxu0 0.0
        %1979 = vmatprep.subr.mxu0 0.0
        %1980 = vmatpush1.msra.mxu0 0.0
        %1981 = vmatprep.subr.mxu0 0.0
        %1982 = vmatpush1.msra.mxu0 0.0
        %1983 = vmatprep.subr.mxu0 0.0
        %1984 = vmatpush1.msra.mxu0 0.0
        %1985 = vmatprep.subr.mxu0 0.0
        %1986 = vmatpush1.msra.mxu0 0.0
        %1987 = vmatprep.subr.mxu0 0.0
        %1988 = vmatpush1.msra.mxu0 0.0
        %1989 = vmatprep.subr.mxu0 0.0
        %1990 = vmatpush1.msra.mxu0 0.0
        %1991 = vmatprep.subr.mxu0 0.0
        %1992 = vmatpush1.msra.mxu0 0.0
        %1993 = vmatprep.subr.mxu0 0.0
        %1994 = vmatpush1.msra.mxu0 0.0
        %1995 = vmatprep.subr.mxu0 0.0
        %1996 = vmatpush1.msra.mxu0 0.0
        %1997 = vmatprep.subr.mxu0 0.0
        %1998 = vmatpush1.msra.mxu0 0.0
        %1999 = vmatprep.subr.mxu0 0.0
        %2000 = vmatpush1.msra.mxu0 0.0
        %2001 = vmatprep.subr.mxu0 0.0
        %2002 = vmatpush1.msra.mxu0 0.0
        %2003 = vmatprep.subr.mxu0 0.0
        %2004 = vmatpush1.msra.mxu0 0.0
        %2005 = vmatprep.subr.mxu0 0.0
        %2006 = vmatpush1.msra.mxu0 0.0
        %2007 = vmatprep.subr.mxu0 0.0
        %2008 = vmatpush1.msra.mxu0 0.0
        %2009 = vmatprep.subr.mxu0 0.0
        %2010 = vmatpush1.msra.mxu0 0.0
        %2011 = vmatprep.subr.mxu0 0.0
        %2012 = vmatpush1.msra.mxu0 0.0
        %2013 = vmatprep.subr.mxu0 0.0
        %2014 = vmatpush1.msra.mxu0 0.0
        %2015 = vmatprep.subr.mxu0 0.0
        %2016 = vmatpush1.msra.mxu0 0.0
        %2017 = vmatprep.subr.mxu0 0.0
        %2018 = vmatpush1.msra.mxu0 0.0
        %2019 = vmatprep.subr.mxu0 0.0
        %2020 = vmatpush1.msra.mxu0 0.0
        %2021 = vmatprep.subr.mxu0 0.0
        %2022 = vmatpush1.msra.mxu0 0.0
        %2023 = vmatprep.subr.mxu0 0.0
        %2024 = vmatpush1.msra.mxu0 0.0
        %2025 = vmatprep.subr.mxu0 0.0
        %2026 = vmatpush1.msra.mxu0 0.0
        %2027 = vmatprep.subr.mxu0 0.0
        %2028 = vmatpush1.msra.mxu0 0.0
        %2029 = vmatprep.subr.mxu0 0.0
        %2030 = vmatpush1.msra.mxu0 0.0
        %2031 = vmatprep.subr.mxu0 0.0
        %2032 = vmatpush1.msra.mxu0 0.0
        %2033 = vmatprep.subr.mxu0 0.0
        %2034 = vmatpush1.msra.mxu0 0.0
        %2035 = vmatprep.mubr.f32.mxu0 0.0
        %2036 = vmatmul.mubr.f32.gmra.mrb[0].mxu0 %v1963
        %v2037 = vpop.f32.mrb[0].mxu0
        %v2038 = vadd.f32 %v1958, %v2037
        %v2039 = vpop.f32.mrb[0].mxu0
        %v2040 = vadd.f32 %v1960, %v2039
        %2041 = vdwg.mxu0
        %v2042 = vadd.f32 %v1851, %v2038
        %v2043 = vadd.f32 %v1852, %v2040
        %2044 = vrot.lane.b32.xlu0 %v537, 111
        %v2045 = vpop.permute.xlu0 %2044
        %2046 = vrot.lane.b32.xlu0 %v540, 111
        %v2047 = vpop.permute.xlu0 %2046
        %vm2048 = vcmp.lt.s32.totalorder %v547, 111
        %v2049 = vsel %vm2048, %v2045, %v2047
        %v2050 = vsel %vm2048, %v2047, %v2045
        %v2051 = vlaneseq
        %v2052 = vshrl.u32 %v2051, 7
        %v2053 = vsub.s32 0, %v2052
        %v2054 = vrot.slane %v535, %v2053
        %v2055 = vlaneseq
        %v2056 = vshrl.u32 %v2055, 7
        %v2057 = vsub.s32 0, %v2056
        %v2058 = vrot.slane %v536, %v2057
        %v2059 = vmul.f32 %v2049, %v2054
        %v2060 = vmul.f32 %v2050, %v2058
        %2061 = vrot.lane.b32.xlu0 %v538, 111
        %v2062 = vpop.permute.xlu0 %2061
        %2063 = vrot.lane.b32.xlu0 %v562, 111
        %v2064 = vpop.permute.xlu0 %2063
        %v2065 = vsel %vm2048, %v2062, %v2064
        %v2066 = vsel %vm2048, %v2064, %v2062
        %v2067 = vmul.f32 %v2065, %v2054
        %v2068 = vmul.f32 %v2066, %v2058
        %s2069 = scalar_lea.vmem %s3, 64
        %v2070 = vld [vmem:[%s2069] sm:$0xff]
        %s2071 = scalar_lea.vmem %s4, 64
        %v2072 = vld [vmem:[%s2071] sm:$0xff]
        %v2074 = vsel %vm574, %v2072, 0
        %v2077 = vsel %vm578, %v2067, 0
        %v2080 = vsel %vm578, %v2068, 0
        %2082 = vmatprep.subr.mxu0 %v2080
        %2083 = vmatpush1.msra.mxu0 %v2077
        %2084 = vmatprep.subr.mxu0 0.0
        %2085 = vmatpush1.msra.mxu0 0.0
        %2086 = vmatprep.subr.mxu0 0.0
        %2087 = vmatpush1.msra.mxu0 0.0
        %2088 = vmatprep.subr.mxu0 0.0
        %2089 = vmatpush1.msra.mxu0 0.0
        %2090 = vmatprep.subr.mxu0 0.0
        %2091 = vmatpush1.msra.mxu0 0.0
        %2092 = vmatprep.subr.mxu0 0.0
        %2093 = vmatpush1.msra.mxu0 0.0
        %2094 = vmatprep.subr.mxu0 0.0
        %2095 = vmatpush1.msra.mxu0 0.0
        %2096 = vmatprep.subr.mxu0 0.0
        %2097 = vmatpush1.msra.mxu0 0.0
        %2098 = vmatprep.subr.mxu0 0.0
        %2099 = vmatpush1.msra.mxu0 0.0
        %2100 = vmatprep.subr.mxu0 0.0
        %2101 = vmatpush1.msra.mxu0 0.0
        %2102 = vmatprep.subr.mxu0 0.0
        %2103 = vmatpush1.msra.mxu0 0.0
        %2104 = vmatprep.subr.mxu0 0.0
        %2105 = vmatpush1.msra.mxu0 0.0
        %2106 = vmatprep.subr.mxu0 0.0
        %2107 = vmatpush1.msra.mxu0 0.0
        %2108 = vmatprep.subr.mxu0 0.0
        %2109 = vmatpush1.msra.mxu0 0.0
        %2110 = vmatprep.subr.mxu0 0.0
        %2111 = vmatpush1.msra.mxu0 0.0
        %2112 = vmatprep.subr.mxu0 0.0
        %2113 = vmatpush1.msra.mxu0 0.0
        %2114 = vmatprep.subr.mxu0 0.0
        %2115 = vmatpush1.msra.mxu0 0.0
        %2116 = vmatprep.subr.mxu0 0.0
        %2117 = vmatpush1.msra.mxu0 0.0
        %2118 = vmatprep.subr.mxu0 0.0
        %2119 = vmatpush1.msra.mxu0 0.0
        %2120 = vmatprep.subr.mxu0 0.0
        %2121 = vmatpush1.msra.mxu0 0.0
        %2122 = vmatprep.subr.mxu0 0.0
        %2123 = vmatpush1.msra.mxu0 0.0
        %2124 = vmatprep.subr.mxu0 0.0
        %2125 = vmatpush1.msra.mxu0 0.0
        %2126 = vmatprep.subr.mxu0 0.0
        %2127 = vmatpush1.msra.mxu0 0.0
        %2128 = vmatprep.subr.mxu0 0.0
        %2129 = vmatpush1.msra.mxu0 0.0
        %2130 = vmatprep.subr.mxu0 0.0
        %2131 = vmatpush1.msra.mxu0 0.0
        %2132 = vmatprep.subr.mxu0 0.0
        %2133 = vmatpush1.msra.mxu0 0.0
        %2134 = vmatprep.subr.mxu0 0.0
        %2135 = vmatpush1.msra.mxu0 0.0
        %2136 = vmatprep.subr.mxu0 0.0
        %2137 = vmatpush1.msra.mxu0 0.0
        %2138 = vmatprep.subr.mxu0 0.0
        %2139 = vmatpush1.msra.mxu0 0.0
        %2140 = vmatprep.subr.mxu0 0.0
        %2141 = vmatpush1.msra.mxu0 0.0
        %2142 = vmatprep.subr.mxu0 0.0
        %2143 = vmatpush1.msra.mxu0 0.0
        %2144 = vmatprep.subr.mxu0 0.0
        %2145 = vmatpush1.msra.mxu0 0.0
        %2146 = vmatprep.mubr.f32.mxu0 0.0
        %2147 = vmatmul.mubr.f32.gmra.mrb[0].mxu0 %v2074
        %v2148 = vpop.f32.mrb[0].mxu0
        %v2149 = vadd.f32 0.0, %v2148
        %v2150 = vpop.f32.mrb[0].mxu0
        %v2151 = vadd.f32 0.0, %v2150
        %2152 = vdwg.mxu0
        %v2154 = vsel %vm574, %v2070, 0
        %v2157 = vsel %vm578, %v2059, 0
        %v2160 = vsel %vm578, %v2060, 0
        %2162 = vmatprep.subr.mxu0 %v2160
        %2163 = vmatpush1.msra.mxu0 %v2157
        %2164 = vmatprep.subr.mxu0 0.0
        %2165 = vmatpush1.msra.mxu0 0.0
        %2166 = vmatprep.subr.mxu0 0.0
        %2167 = vmatpush1.msra.mxu0 0.0
        %2168 = vmatprep.subr.mxu0 0.0
        %2169 = vmatpush1.msra.mxu0 0.0
        %2170 = vmatprep.subr.mxu0 0.0
        %2171 = vmatpush1.msra.mxu0 0.0
        %2172 = vmatprep.subr.mxu0 0.0
        %2173 = vmatpush1.msra.mxu0 0.0
        %2174 = vmatprep.subr.mxu0 0.0
        %2175 = vmatpush1.msra.mxu0 0.0
        %2176 = vmatprep.subr.mxu0 0.0
        %2177 = vmatpush1.msra.mxu0 0.0
        %2178 = vmatprep.subr.mxu0 0.0
        %2179 = vmatpush1.msra.mxu0 0.0
        %2180 = vmatprep.subr.mxu0 0.0
        %2181 = vmatpush1.msra.mxu0 0.0
        %2182 = vmatprep.subr.mxu0 0.0
        %2183 = vmatpush1.msra.mxu0 0.0
        %2184 = vmatprep.subr.mxu0 0.0
        %2185 = vmatpush1.msra.mxu0 0.0
        %2186 = vmatprep.subr.mxu0 0.0
        %2187 = vmatpush1.msra.mxu0 0.0
        %2188 = vmatprep.subr.mxu0 0.0
        %2189 = vmatpush1.msra.mxu0 0.0
        %2190 = vmatprep.subr.mxu0 0.0
        %2191 = vmatpush1.msra.mxu0 0.0
        %2192 = vmatprep.subr.mxu0 0.0
        %2193 = vmatpush1.msra.mxu0 0.0
        %2194 = vmatprep.subr.mxu0 0.0
        %2195 = vmatpush1.msra.mxu0 0.0
        %2196 = vmatprep.subr.mxu0 0.0
        %2197 = vmatpush1.msra.mxu0 0.0
        %2198 = vmatprep.subr.mxu0 0.0
        %2199 = vmatpush1.msra.mxu0 0.0
        %2200 = vmatprep.subr.mxu0 0.0
        %2201 = vmatpush1.msra.mxu0 0.0
        %2202 = vmatprep.subr.mxu0 0.0
        %2203 = vmatpush1.msra.mxu0 0.0
        %2204 = vmatprep.subr.mxu0 0.0
        %2205 = vmatpush1.msra.mxu0 0.0
        %2206 = vmatprep.subr.mxu0 0.0
        %2207 = vmatpush1.msra.mxu0 0.0
        %2208 = vmatprep.subr.mxu0 0.0
        %2209 = vmatpush1.msra.mxu0 0.0
        %2210 = vmatprep.subr.mxu0 0.0
        %2211 = vmatpush1.msra.mxu0 0.0
        %2212 = vmatprep.subr.mxu0 0.0
        %2213 = vmatpush1.msra.mxu0 0.0
        %2214 = vmatprep.subr.mxu0 0.0
        %2215 = vmatpush1.msra.mxu0 0.0
        %2216 = vmatprep.subr.mxu0 0.0
        %2217 = vmatpush1.msra.mxu0 0.0
        %2218 = vmatprep.subr.mxu0 0.0
        %2219 = vmatpush1.msra.mxu0 0.0
        %2220 = vmatprep.subr.mxu0 0.0
        %2221 = vmatpush1.msra.mxu0 0.0
        %2222 = vmatprep.subr.mxu0 0.0
        %2223 = vmatpush1.msra.mxu0 0.0
        %2224 = vmatprep.subr.mxu0 0.0
        %2225 = vmatpush1.msra.mxu0 0.0
        %2226 = vmatprep.mubr.f32.mxu0 0.0
        %2227 = vmatmul.mubr.f32.gmra.mrb[0].mxu0 %v2154
        %v2228 = vpop.f32.mrb[0].mxu0
        %v2229 = vadd.f32 %v2149, %v2228
        %v2230 = vpop.f32.mrb[0].mxu0
        %v2231 = vadd.f32 %v2151, %v2230
        %2232 = vdwg.mxu0
        %v2233 = vadd.f32 %v2042, %v2229
        %v2234 = vadd.f32 %v2043, %v2231
        %v2235 = vld [vmem:[%s7] sm:$0xff]
        %2237 = vset.pattern.permute.xlu0 0
        %2238 = vperm.xlu0 %2237, %v2235
        %v2239 = vpop.permute.xlu0 %2238
        %v2241 = vmul.f32 %v2233, %v2239
        %v2242 = vmul.f32 %v2234, %v2239
        %v2243 = vld [vmem:[%s8] sm:$0xff]
        %2245 = vset.pattern.permute.xlu0 0
        %2246 = vperm.xlu0 %2245, %v2243
        %v2247 = vpop.permute.xlu0 %2246
        %v2249 = vadd.f32 %v2241, %v2247
        %v2250 = vadd.f32 %v2242, %v2247
        %v2251 = vmax.f32 %v2249, 0.0
        %v2252 = vmax.f32 %v2250, 0.0
        %2253 = vrot.lane.b32.xlu0 %v2251, 17
        %v2254 = vpop.permute.xlu0 %2253
        %2255 = vrot.lane.b32.xlu0 %v2252, 17
        %v2256 = vpop.permute.xlu0 %2255
        %v2257 = vsel %vm548, %v2254, %v2256
        %v2258 = vsel %vm548, %v2256, %v2254
        %v2259 = vmul.f32 %v2258, %v554
        %v2260 = vmul.f32 %v2257, %v558
        %v2261 = vld [vmem:[%s5] sm:$0xf]
        %2262 = vrot.lane.b32.xlu0 %v2251, 16
        %v2263 = vpop.permute.xlu0 %2262
        %2264 = vrot.lane.b32.xlu0 %v2252, 16
        %v2265 = vpop.permute.xlu0 %2264
        %v2266 = vsel %vm740, %v2263, %v2265
        %v2267 = vsel %vm740, %v2265, %v2263
        %v2268 = vmul.f32 %v2267, %v746
        %v2269 = vmul.f32 %v2266, %v750
        %s2270 = scalar_lea.vmem %s5, 4
        %v2271 = vld [vmem:[%s2270] sm:$0xf]
        %vm2272 = vcmask 64512
        %v2274 = vsel %vm2272, %v2271, 0
        %2276 = vmatprep.subr.mxu0 %v2269
        %2277 = vmatpush1.msra.mxu0 %v2268
        %2278 = vmatprep.subr.mxu0 0.0
        %2279 = vmatpush1.msra.mxu0 0.0
        %2280 = vmatprep.subr.mxu0 0.0
        %2281 = vmatpush1.msra.mxu0 0.0
        %2282 = vmatprep.subr.mxu0 0.0
        %2283 = vmatpush1.msra.mxu0 0.0
        %2284 = vmatprep.subr.mxu0 0.0
        %2285 = vmatpush1.msra.mxu0 0.0
        %2286 = vmatprep.subr.mxu0 0.0
        %2287 = vmatpush1.msra.mxu0 0.0
        %2288 = vmatprep.subr.mxu0 0.0
        %2289 = vmatpush1.msra.mxu0 0.0
        %2290 = vmatprep.subr.mxu0 0.0
        %2291 = vmatpush1.msra.mxu0 0.0
        %2292 = vmatprep.subr.mxu0 0.0
        %2293 = vmatpush1.msra.mxu0 0.0
        %2294 = vmatprep.subr.mxu0 0.0
        %2295 = vmatpush1.msra.mxu0 0.0
        %2296 = vmatprep.subr.mxu0 0.0
        %2297 = vmatpush1.msra.mxu0 0.0
        %2298 = vmatprep.subr.mxu0 0.0
        %2299 = vmatpush1.msra.mxu0 0.0
        %2300 = vmatprep.subr.mxu0 0.0
        %2301 = vmatpush1.msra.mxu0 0.0
        %2302 = vmatprep.subr.mxu0 0.0
        %2303 = vmatpush1.msra.mxu0 0.0
        %2304 = vmatprep.subr.mxu0 0.0
        %2305 = vmatpush1.msra.mxu0 0.0
        %2306 = vmatprep.subr.mxu0 0.0
        %2307 = vmatpush1.msra.mxu0 0.0
        %2308 = vmatprep.subr.mxu0 0.0
        %2309 = vmatpush1.msra.mxu0 0.0
        %2310 = vmatprep.subr.mxu0 0.0
        %2311 = vmatpush1.msra.mxu0 0.0
        %2312 = vmatprep.subr.mxu0 0.0
        %2313 = vmatpush1.msra.mxu0 0.0
        %2314 = vmatprep.subr.mxu0 0.0
        %2315 = vmatpush1.msra.mxu0 0.0
        %2316 = vmatprep.subr.mxu0 0.0
        %2317 = vmatpush1.msra.mxu0 0.0
        %2318 = vmatprep.subr.mxu0 0.0
        %2319 = vmatpush1.msra.mxu0 0.0
        %2320 = vmatprep.subr.mxu0 0.0
        %2321 = vmatpush1.msra.mxu0 0.0
        %2322 = vmatprep.subr.mxu0 0.0
        %2323 = vmatpush1.msra.mxu0 0.0
        %2324 = vmatprep.subr.mxu0 0.0
        %2325 = vmatpush1.msra.mxu0 0.0
        %2326 = vmatprep.subr.mxu0 0.0
        %2327 = vmatpush1.msra.mxu0 0.0
        %2328 = vmatprep.subr.mxu0 0.0
        %2329 = vmatpush1.msra.mxu0 0.0
        %2330 = vmatprep.subr.mxu0 0.0
        %2331 = vmatpush1.msra.mxu0 0.0
        %2332 = vmatprep.subr.mxu0 0.0
        %2333 = vmatpush1.msra.mxu0 0.0
        %2334 = vmatprep.subr.mxu0 0.0
        %2335 = vmatpush1.msra.mxu0 0.0
        %2336 = vmatprep.subr.mxu0 0.0
        %2337 = vmatpush1.msra.mxu0 0.0
        %2338 = vmatprep.subr.mxu0 0.0
        %2339 = vmatpush1.msra.mxu0 0.0
        %2340 = vmatprep.mubr.f32.mxu0 0.0
        %2341 = vmatmul.mubr.f32.gmra.mrb[0].mxu0 %v2274
        %v2342 = vpop.f32.mrb[0].mxu0
        %v2343 = vadd.f32 0.0, %v2342
        %v2344 = vpop.f32.mrb[0].mxu0
        %v2345 = vadd.f32 0.0, %v2344
        %2346 = vdwg.mxu0
        %v2348 = vsel %vm2272, %v2261, 0
        %2350 = vmatprep.subr.mxu0 %v2260
        %2351 = vmatpush1.msra.mxu0 %v2259
        %2352 = vmatprep.subr.mxu0 0.0
        %2353 = vmatpush1.msra.mxu0 0.0
        %2354 = vmatprep.subr.mxu0 0.0
        %2355 = vmatpush1.msra.mxu0 0.0
        %2356 = vmatprep.subr.mxu0 0.0
        %2357 = vmatpush1.msra.mxu0 0.0
        %2358 = vmatprep.subr.mxu0 0.0
        %2359 = vmatpush1.msra.mxu0 0.0
        %2360 = vmatprep.subr.mxu0 0.0
        %2361 = vmatpush1.msra.mxu0 0.0
        %2362 = vmatprep.subr.mxu0 0.0
        %2363 = vmatpush1.msra.mxu0 0.0
        %2364 = vmatprep.subr.mxu0 0.0
        %2365 = vmatpush1.msra.mxu0 0.0
        %2366 = vmatprep.subr.mxu0 0.0
        %2367 = vmatpush1.msra.mxu0 0.0
        %2368 = vmatprep.subr.mxu0 0.0
        %2369 = vmatpush1.msra.mxu0 0.0
        %2370 = vmatprep.subr.mxu0 0.0
        %2371 = vmatpush1.msra.mxu0 0.0
        %2372 = vmatprep.subr.mxu0 0.0
        %2373 = vmatpush1.msra.mxu0 0.0
        %2374 = vmatprep.subr.mxu0 0.0
        %2375 = vmatpush1.msra.mxu0 0.0
        %2376 = vmatprep.subr.mxu0 0.0
        %2377 = vmatpush1.msra.mxu0 0.0
        %2378 = vmatprep.subr.mxu0 0.0
        %2379 = vmatpush1.msra.mxu0 0.0
        %2380 = vmatprep.subr.mxu0 0.0
        %2381 = vmatpush1.msra.mxu0 0.0
        %2382 = vmatprep.subr.mxu0 0.0
        %2383 = vmatpush1.msra.mxu0 0.0
        %2384 = vmatprep.subr.mxu0 0.0
        %2385 = vmatpush1.msra.mxu0 0.0
        %2386 = vmatprep.subr.mxu0 0.0
        %2387 = vmatpush1.msra.mxu0 0.0
        %2388 = vmatprep.subr.mxu0 0.0
        %2389 = vmatpush1.msra.mxu0 0.0
        %2390 = vmatprep.subr.mxu0 0.0
        %2391 = vmatpush1.msra.mxu0 0.0
        %2392 = vmatprep.subr.mxu0 0.0
        %2393 = vmatpush1.msra.mxu0 0.0
        %2394 = vmatprep.subr.mxu0 0.0
        %2395 = vmatpush1.msra.mxu0 0.0
        %2396 = vmatprep.subr.mxu0 0.0
        %2397 = vmatpush1.msra.mxu0 0.0
        %2398 = vmatprep.subr.mxu0 0.0
        %2399 = vmatpush1.msra.mxu0 0.0
        %2400 = vmatprep.subr.mxu0 0.0
        %2401 = vmatpush1.msra.mxu0 0.0
        %2402 = vmatprep.subr.mxu0 0.0
        %2403 = vmatpush1.msra.mxu0 0.0
        %2404 = vmatprep.subr.mxu0 0.0
        %2405 = vmatpush1.msra.mxu0 0.0
        %2406 = vmatprep.subr.mxu0 0.0
        %2407 = vmatpush1.msra.mxu0 0.0
        %2408 = vmatprep.subr.mxu0 0.0
        %2409 = vmatpush1.msra.mxu0 0.0
        %2410 = vmatprep.subr.mxu0 0.0
        %2411 = vmatpush1.msra.mxu0 0.0
        %2412 = vmatprep.subr.mxu0 0.0
        %2413 = vmatpush1.msra.mxu0 0.0
        %2414 = vmatprep.mubr.f32.mxu0 0.0
        %2415 = vmatmul.mubr.f32.gmra.mrb[0].mxu0 %v2348
        %v2416 = vpop.f32.mrb[0].mxu0
        %v2417 = vadd.f32 %v2343, %v2416
        %v2418 = vpop.f32.mrb[0].mxu0
        %v2419 = vadd.f32 %v2345, %v2418
        %2420 = vdwg.mxu0
        %2421 = vrot.lane.b32.xlu0 %v2251, 15
        %v2422 = vpop.permute.xlu0 %2421
        %2423 = vrot.lane.b32.xlu0 %v2252, 15
        %v2424 = vpop.permute.xlu0 %2423
        %v2425 = vsel %vm931, %v2422, %v2424
        %v2426 = vsel %vm931, %v2424, %v2422
        %v2427 = vmul.f32 %v2426, %v937
        %v2428 = vmul.f32 %v2425, %v941
        %s2429 = scalar_lea.vmem %s5, 8
        %v2430 = vld [vmem:[%s2429] sm:$0xf]
        %v2432 = vsel %vm2272, %v2430, 0
        %2434 = vmatprep.subr.mxu0 %v2428
        %2435 = vmatpush1.msra.mxu0 %v2427
        %2436 = vmatprep.subr.mxu0 0.0
        %2437 = vmatpush1.msra.mxu0 0.0
        %2438 = vmatprep.subr.mxu0 0.0
        %2439 = vmatpush1.msra.mxu0 0.0
        %2440 = vmatprep.subr.mxu0 0.0
        %2441 = vmatpush1.msra.mxu0 0.0
        %2442 = vmatprep.subr.mxu0 0.0
        %2443 = vmatpush1.msra.mxu0 0.0
        %2444 = vmatprep.subr.mxu0 0.0
        %2445 = vmatpush1.msra.mxu0 0.0
        %2446 = vmatprep.subr.mxu0 0.0
        %2447 = vmatpush1.msra.mxu0 0.0
        %2448 = vmatprep.subr.mxu0 0.0
        %2449 = vmatpush1.msra.mxu0 0.0
        %2450 = vmatprep.subr.mxu0 0.0
        %2451 = vmatpush1.msra.mxu0 0.0
        %2452 = vmatprep.subr.mxu0 0.0
        %2453 = vmatpush1.msra.mxu0 0.0
        %2454 = vmatprep.subr.mxu0 0.0
        %2455 = vmatpush1.msra.mxu0 0.0
        %2456 = vmatprep.subr.mxu0 0.0
        %2457 = vmatpush1.msra.mxu0 0.0
        %2458 = vmatprep.subr.mxu0 0.0
        %2459 = vmatpush1.msra.mxu0 0.0
        %2460 = vmatprep.subr.mxu0 0.0
        %2461 = vmatpush1.msra.mxu0 0.0
        %2462 = vmatprep.subr.mxu0 0.0
        %2463 = vmatpush1.msra.mxu0 0.0
        %2464 = vmatprep.subr.mxu0 0.0
        %2465 = vmatpush1.msra.mxu0 0.0
        %2466 = vmatprep.subr.mxu0 0.0
        %2467 = vmatpush1.msra.mxu0 0.0
        %2468 = vmatprep.subr.mxu0 0.0
        %2469 = vmatpush1.msra.mxu0 0.0
        %2470 = vmatprep.subr.mxu0 0.0
        %2471 = vmatpush1.msra.mxu0 0.0
        %2472 = vmatprep.subr.mxu0 0.0
        %2473 = vmatpush1.msra.mxu0 0.0
        %2474 = vmatprep.subr.mxu0 0.0
        %2475 = vmatpush1.msra.mxu0 0.0
        %2476 = vmatprep.subr.mxu0 0.0
        %2477 = vmatpush1.msra.mxu0 0.0
        %2478 = vmatprep.subr.mxu0 0.0
        %2479 = vmatpush1.msra.mxu0 0.0
        %2480 = vmatprep.subr.mxu0 0.0
        %2481 = vmatpush1.msra.mxu0 0.0
        %2482 = vmatprep.subr.mxu0 0.0
        %2483 = vmatpush1.msra.mxu0 0.0
        %2484 = vmatprep.subr.mxu0 0.0
        %2485 = vmatpush1.msra.mxu0 0.0
        %2486 = vmatprep.subr.mxu0 0.0
        %2487 = vmatpush1.msra.mxu0 0.0
        %2488 = vmatprep.subr.mxu0 0.0
        %2489 = vmatpush1.msra.mxu0 0.0
        %2490 = vmatprep.subr.mxu0 0.0
        %2491 = vmatpush1.msra.mxu0 0.0
        %2492 = vmatprep.subr.mxu0 0.0
        %2493 = vmatpush1.msra.mxu0 0.0
        %2494 = vmatprep.subr.mxu0 0.0
        %2495 = vmatpush1.msra.mxu0 0.0
        %2496 = vmatprep.subr.mxu0 0.0
        %2497 = vmatpush1.msra.mxu0 0.0
        %2498 = vmatprep.mubr.f32.mxu0 0.0
        %2499 = vmatmul.mubr.f32.gmra.mrb[0].mxu0 %v2432
        %v2500 = vpop.f32.mrb[0].mxu0
        %v2501 = vadd.f32 0.0, %v2500
        %v2502 = vpop.f32.mrb[0].mxu0
        %v2503 = vadd.f32 0.0, %v2502
        %2504 = vdwg.mxu0
        %v2505 = vadd.f32 %v2417, %v2501
        %v2506 = vadd.f32 %v2419, %v2503
        %2507 = vrot.lane.b32.xlu0 %v2251, 1
        %v2508 = vpop.permute.xlu0 %2507
        %2509 = vrot.lane.b32.xlu0 %v2252, 1
        %v2510 = vpop.permute.xlu0 %2509
        %v2511 = vsel %vm1122, %v2508, %v2510
        %v2512 = vsel %vm1122, %v2510, %v2508
        %v2513 = vmul.f32 %v2512, %v1128
        %v2514 = vmul.f32 %v2511, %v1132
        %s2515 = scalar_lea.vmem %s5, 12
        %v2516 = vld [vmem:[%s2515] sm:$0xf]
        %v2518 = vsel %vm2272, %v2516, 0
        %2520 = vmatprep.subr.mxu0 %v2514
        %2521 = vmatpush1.msra.mxu0 %v2513
        %2522 = vmatprep.subr.mxu0 0.0
        %2523 = vmatpush1.msra.mxu0 0.0
        %2524 = vmatprep.subr.mxu0 0.0
        %2525 = vmatpush1.msra.mxu0 0.0
        %2526 = vmatprep.subr.mxu0 0.0
        %2527 = vmatpush1.msra.mxu0 0.0
        %2528 = vmatprep.subr.mxu0 0.0
        %2529 = vmatpush1.msra.mxu0 0.0
        %2530 = vmatprep.subr.mxu0 0.0
        %2531 = vmatpush1.msra.mxu0 0.0
        %2532 = vmatprep.subr.mxu0 0.0
        %2533 = vmatpush1.msra.mxu0 0.0
        %2534 = vmatprep.subr.mxu0 0.0
        %2535 = vmatpush1.msra.mxu0 0.0
        %2536 = vmatprep.subr.mxu0 0.0
        %2537 = vmatpush1.msra.mxu0 0.0
        %2538 = vmatprep.subr.mxu0 0.0
        %2539 = vmatpush1.msra.mxu0 0.0
        %2540 = vmatprep.subr.mxu0 0.0
        %2541 = vmatpush1.msra.mxu0 0.0
        %2542 = vmatprep.subr.mxu0 0.0
        %2543 = vmatpush1.msra.mxu0 0.0
        %2544 = vmatprep.subr.mxu0 0.0
        %2545 = vmatpush1.msra.mxu0 0.0
        %2546 = vmatprep.subr.mxu0 0.0
        %2547 = vmatpush1.msra.mxu0 0.0
        %2548 = vmatprep.subr.mxu0 0.0
        %2549 = vmatpush1.msra.mxu0 0.0
        %2550 = vmatprep.subr.mxu0 0.0
        %2551 = vmatpush1.msra.mxu0 0.0
        %2552 = vmatprep.subr.mxu0 0.0
        %2553 = vmatpush1.msra.mxu0 0.0
        %2554 = vmatprep.subr.mxu0 0.0
        %2555 = vmatpush1.msra.mxu0 0.0
        %2556 = vmatprep.subr.mxu0 0.0
        %2557 = vmatpush1.msra.mxu0 0.0
        %2558 = vmatprep.subr.mxu0 0.0
        %2559 = vmatpush1.msra.mxu0 0.0
        %2560 = vmatprep.subr.mxu0 0.0
        %2561 = vmatpush1.msra.mxu0 0.0
        %2562 = vmatprep.subr.mxu0 0.0
        %2563 = vmatpush1.msra.mxu0 0.0
        %2564 = vmatprep.subr.mxu0 0.0
        %2565 = vmatpush1.msra.mxu0 0.0
        %2566 = vmatprep.subr.mxu0 0.0
        %2567 = vmatpush1.msra.mxu0 0.0
        %2568 = vmatprep.subr.mxu0 0.0
        %2569 = vmatpush1.msra.mxu0 0.0
        %2570 = vmatprep.subr.mxu0 0.0
        %2571 = vmatpush1.msra.mxu0 0.0
        %2572 = vmatprep.subr.mxu0 0.0
        %2573 = vmatpush1.msra.mxu0 0.0
        %2574 = vmatprep.subr.mxu0 0.0
        %2575 = vmatpush1.msra.mxu0 0.0
        %2576 = vmatprep.subr.mxu0 0.0
        %2577 = vmatpush1.msra.mxu0 0.0
        %2578 = vmatprep.subr.mxu0 0.0
        %2579 = vmatpush1.msra.mxu0 0.0
        %2580 = vmatprep.subr.mxu0 0.0
        %2581 = vmatpush1.msra.mxu0 0.0
        %2582 = vmatprep.subr.mxu0 0.0
        %2583 = vmatpush1.msra.mxu0 0.0
        %2584 = vmatprep.mubr.f32.mxu0 0.0
        %2585 = vmatmul.mubr.f32.gmra.mrb[0].mxu0 %v2518
        %v2586 = vpop.f32.mrb[0].mxu0
        %v2587 = vadd.f32 0.0, %v2586
        %v2588 = vpop.f32.mrb[0].mxu0
        %v2589 = vadd.f32 0.0, %v2588
        %2590 = vdwg.mxu0
        %v2591 = vadd.f32 %v2505, %v2587
        %v2592 = vadd.f32 %v2506, %v2589
        %s2593 = scalar_lea.vmem %s5, 16
        %v2594 = vld [vmem:[%s2593] sm:$0xf]
        %v2596 = vsel %vm2272, %v2594, 0
        %2598 = vmatprep.subr.mxu0 %v2252
        %2599 = vmatpush1.msra.mxu0 %v2251
        %2600 = vmatprep.subr.mxu0 0.0
        %2601 = vmatpush1.msra.mxu0 0.0
        %2602 = vmatprep.subr.mxu0 0.0
        %2603 = vmatpush1.msra.mxu0 0.0
        %2604 = vmatprep.subr.mxu0 0.0
        %2605 = vmatpush1.msra.mxu0 0.0
        %2606 = vmatprep.subr.mxu0 0.0
        %2607 = vmatpush1.msra.mxu0 0.0
        %2608 = vmatprep.subr.mxu0 0.0
        %2609 = vmatpush1.msra.mxu0 0.0
        %2610 = vmatprep.subr.mxu0 0.0
        %2611 = vmatpush1.msra.mxu0 0.0
        %2612 = vmatprep.subr.mxu0 0.0
        %2613 = vmatpush1.msra.mxu0 0.0
        %2614 = vmatprep.subr.mxu0 0.0
        %2615 = vmatpush1.msra.mxu0 0.0
        %2616 = vmatprep.subr.mxu0 0.0
        %2617 = vmatpush1.msra.mxu0 0.0
        %2618 = vmatprep.subr.mxu0 0.0
        %2619 = vmatpush1.msra.mxu0 0.0
        %2620 = vmatprep.subr.mxu0 0.0
        %2621 = vmatpush1.msra.mxu0 0.0
        %2622 = vmatprep.subr.mxu0 0.0
        %2623 = vmatpush1.msra.mxu0 0.0
        %2624 = vmatprep.subr.mxu0 0.0
        %2625 = vmatpush1.msra.mxu0 0.0
        %2626 = vmatprep.subr.mxu0 0.0
        %2627 = vmatpush1.msra.mxu0 0.0
        %2628 = vmatprep.subr.mxu0 0.0
        %2629 = vmatpush1.msra.mxu0 0.0
        %2630 = vmatprep.subr.mxu0 0.0
        %2631 = vmatpush1.msra.mxu0 0.0
        %2632 = vmatprep.subr.mxu0 0.0
        %2633 = vmatpush1.msra.mxu0 0.0
        %2634 = vmatprep.subr.mxu0 0.0
        %2635 = vmatpush1.msra.mxu0 0.0
        %2636 = vmatprep.subr.mxu0 0.0
        %2637 = vmatpush1.msra.mxu0 0.0
        %2638 = vmatprep.subr.mxu0 0.0
        %2639 = vmatpush1.msra.mxu0 0.0
        %2640 = vmatprep.subr.mxu0 0.0
        %2641 = vmatpush1.msra.mxu0 0.0
        %2642 = vmatprep.subr.mxu0 0.0
        %2643 = vmatpush1.msra.mxu0 0.0
        %2644 = vmatprep.subr.mxu0 0.0
        %2645 = vmatpush1.msra.mxu0 0.0
        %2646 = vmatprep.subr.mxu0 0.0
        %2647 = vmatpush1.msra.mxu0 0.0
        %2648 = vmatprep.subr.mxu0 0.0
        %2649 = vmatpush1.msra.mxu0 0.0
        %2650 = vmatprep.subr.mxu0 0.0
        %2651 = vmatpush1.msra.mxu0 0.0
        %2652 = vmatprep.subr.mxu0 0.0
        %2653 = vmatpush1.msra.mxu0 0.0
        %2654 = vmatprep.subr.mxu0 0.0
        %2655 = vmatpush1.msra.mxu0 0.0
        %2656 = vmatprep.subr.mxu0 0.0
        %2657 = vmatpush1.msra.mxu0 0.0
        %2658 = vmatprep.subr.mxu0 0.0
        %2659 = vmatpush1.msra.mxu0 0.0
        %2660 = vmatprep.subr.mxu0 0.0
        %2661 = vmatpush1.msra.mxu0 0.0
        %2662 = vmatprep.mubr.f32.mxu0 0.0
        %2663 = vmatmul.mubr.f32.gmra.mrb[0].mxu0 %v2596
        %v2664 = vpop.f32.mrb[0].mxu0
        %v2665 = vadd.f32 0.0, %v2664
        %v2666 = vpop.f32.mrb[0].mxu0
        %v2667 = vadd.f32 0.0, %v2666
        %2668 = vdwg.mxu0
        %v2669 = vadd.f32 %v2591, %v2665
        %v2670 = vadd.f32 %v2592, %v2667
        %2671 = vrot.lane.b32.xlu0 %v2251, 127
        %v2672 = vpop.permute.xlu0 %2671
        %2673 = vrot.lane.b32.xlu0 %v2252, 127
        %v2674 = vpop.permute.xlu0 %2673
        %v2675 = vsel %vm1475, %v2672, %v2674
        %v2676 = vsel %vm1475, %v2674, %v2672
        %v2677 = vmul.f32 %v2675, %v1481
        %v2678 = vmul.f32 %v2676, %v1485
        %s2679 = scalar_lea.vmem %s5, 20
        %v2680 = vld [vmem:[%s2679] sm:$0xf]
        %v2682 = vsel %vm2272, %v2680, 0
        %2684 = vmatprep.subr.mxu0 %v2678
        %2685 = vmatpush1.msra.mxu0 %v2677
        %2686 = vmatprep.subr.mxu0 0.0
        %2687 = vmatpush1.msra.mxu0 0.0
        %2688 = vmatprep.subr.mxu0 0.0
        %2689 = vmatpush1.msra.mxu0 0.0
        %2690 = vmatprep.subr.mxu0 0.0
        %2691 = vmatpush1.msra.mxu0 0.0
        %2692 = vmatprep.subr.mxu0 0.0
        %2693 = vmatpush1.msra.mxu0 0.0
        %2694 = vmatprep.subr.mxu0 0.0
        %2695 = vmatpush1.msra.mxu0 0.0
        %2696 = vmatprep.subr.mxu0 0.0
        %2697 = vmatpush1.msra.mxu0 0.0
        %2698 = vmatprep.subr.mxu0 0.0
        %2699 = vmatpush1.msra.mxu0 0.0
        %2700 = vmatprep.subr.mxu0 0.0
        %2701 = vmatpush1.msra.mxu0 0.0
        %2702 = vmatprep.subr.mxu0 0.0
        %2703 = vmatpush1.msra.mxu0 0.0
        %2704 = vmatprep.subr.mxu0 0.0
        %2705 = vmatpush1.msra.mxu0 0.0
        %2706 = vmatprep.subr.mxu0 0.0
        %2707 = vmatpush1.msra.mxu0 0.0
        %2708 = vmatprep.subr.mxu0 0.0
        %2709 = vmatpush1.msra.mxu0 0.0
        %2710 = vmatprep.subr.mxu0 0.0
        %2711 = vmatpush1.msra.mxu0 0.0
        %2712 = vmatprep.subr.mxu0 0.0
        %2713 = vmatpush1.msra.mxu0 0.0
        %2714 = vmatprep.subr.mxu0 0.0
        %2715 = vmatpush1.msra.mxu0 0.0
        %2716 = vmatprep.subr.mxu0 0.0
        %2717 = vmatpush1.msra.mxu0 0.0
        %2718 = vmatprep.subr.mxu0 0.0
        %2719 = vmatpush1.msra.mxu0 0.0
        %2720 = vmatprep.subr.mxu0 0.0
        %2721 = vmatpush1.msra.mxu0 0.0
        %2722 = vmatprep.subr.mxu0 0.0
        %2723 = vmatpush1.msra.mxu0 0.0
        %2724 = vmatprep.subr.mxu0 0.0
        %2725 = vmatpush1.msra.mxu0 0.0
        %2726 = vmatprep.subr.mxu0 0.0
        %2727 = vmatpush1.msra.mxu0 0.0
        %2728 = vmatprep.subr.mxu0 0.0
        %2729 = vmatpush1.msra.mxu0 0.0
        %2730 = vmatprep.subr.mxu0 0.0
        %2731 = vmatpush1.msra.mxu0 0.0
        %2732 = vmatprep.subr.mxu0 0.0
        %2733 = vmatpush1.msra.mxu0 0.0
        %2734 = vmatprep.subr.mxu0 0.0
        %2735 = vmatpush1.msra.mxu0 0.0
        %2736 = vmatprep.subr.mxu0 0.0
        %2737 = vmatpush1.msra.mxu0 0.0
        %2738 = vmatprep.subr.mxu0 0.0
        %2739 = vmatpush1.msra.mxu0 0.0
        %2740 = vmatprep.subr.mxu0 0.0
        %2741 = vmatpush1.msra.mxu0 0.0
        %2742 = vmatprep.subr.mxu0 0.0
        %2743 = vmatpush1.msra.mxu0 0.0
        %2744 = vmatprep.subr.mxu0 0.0
        %2745 = vmatpush1.msra.mxu0 0.0
        %2746 = vmatprep.subr.mxu0 0.0
        %2747 = vmatpush1.msra.mxu0 0.0
        %2748 = vmatprep.mubr.f32.mxu0 0.0
        %2749 = vmatmul.mubr.f32.gmra.mrb[0].mxu0 %v2682
        %v2750 = vpop.f32.mrb[0].mxu0
        %v2751 = vadd.f32 0.0, %v2750
        %v2752 = vpop.f32.mrb[0].mxu0
        %v2753 = vadd.f32 0.0, %v2752
        %2754 = vdwg.mxu0
        %v2755 = vadd.f32 %v2669, %v2751
        %v2756 = vadd.f32 %v2670, %v2753
        %2757 = vrot.lane.b32.xlu0 %v2251, 113
        %v2758 = vpop.permute.xlu0 %2757
        %2759 = vrot.lane.b32.xlu0 %v2252, 113
        %v2760 = vpop.permute.xlu0 %2759
        %v2761 = vsel %vm1666, %v2758, %v2760
        %v2762 = vsel %vm1666, %v2760, %v2758
        %v2763 = vmul.f32 %v2761, %v1672
        %v2764 = vmul.f32 %v2762, %v1676
        %s2765 = scalar_lea.vmem %s5, 24
        %v2766 = vld [vmem:[%s2765] sm:$0xf]
        %v2768 = vsel %vm2272, %v2766, 0
        %2770 = vmatprep.subr.mxu0 %v2764
        %2771 = vmatpush1.msra.mxu0 %v2763
        %2772 = vmatprep.subr.mxu0 0.0
        %2773 = vmatpush1.msra.mxu0 0.0
        %2774 = vmatprep.subr.mxu0 0.0
        %2775 = vmatpush1.msra.mxu0 0.0
        %2776 = vmatprep.subr.mxu0 0.0
        %2777 = vmatpush1.msra.mxu0 0.0
        %2778 = vmatprep.subr.mxu0 0.0
        %2779 = vmatpush1.msra.mxu0 0.0
        %2780 = vmatprep.subr.mxu0 0.0
        %2781 = vmatpush1.msra.mxu0 0.0
        %2782 = vmatprep.subr.mxu0 0.0
        %2783 = vmatpush1.msra.mxu0 0.0
        %2784 = vmatprep.subr.mxu0 0.0
        %2785 = vmatpush1.msra.mxu0 0.0
        %2786 = vmatprep.subr.mxu0 0.0
        %2787 = vmatpush1.msra.mxu0 0.0
        %2788 = vmatprep.subr.mxu0 0.0
        %2789 = vmatpush1.msra.mxu0 0.0
        %2790 = vmatprep.subr.mxu0 0.0
        %2791 = vmatpush1.msra.mxu0 0.0
        %2792 = vmatprep.subr.mxu0 0.0
        %2793 = vmatpush1.msra.mxu0 0.0
        %2794 = vmatprep.subr.mxu0 0.0
        %2795 = vmatpush1.msra.mxu0 0.0
        %2796 = vmatprep.subr.mxu0 0.0
        %2797 = vmatpush1.msra.mxu0 0.0
        %2798 = vmatprep.subr.mxu0 0.0
        %2799 = vmatpush1.msra.mxu0 0.0
        %2800 = vmatprep.subr.mxu0 0.0
        %2801 = vmatpush1.msra.mxu0 0.0
        %2802 = vmatprep.subr.mxu0 0.0
        %2803 = vmatpush1.msra.mxu0 0.0
        %2804 = vmatprep.subr.mxu0 0.0
        %2805 = vmatpush1.msra.mxu0 0.0
        %2806 = vmatprep.subr.mxu0 0.0
        %2807 = vmatpush1.msra.mxu0 0.0
        %2808 = vmatprep.subr.mxu0 0.0
        %2809 = vmatpush1.msra.mxu0 0.0
        %2810 = vmatprep.subr.mxu0 0.0
        %2811 = vmatpush1.msra.mxu0 0.0
        %2812 = vmatprep.subr.mxu0 0.0
        %2813 = vmatpush1.msra.mxu0 0.0
        %2814 = vmatprep.subr.mxu0 0.0
        %2815 = vmatpush1.msra.mxu0 0.0
        %2816 = vmatprep.subr.mxu0 0.0
        %2817 = vmatpush1.msra.mxu0 0.0
        %2818 = vmatprep.subr.mxu0 0.0
        %2819 = vmatpush1.msra.mxu0 0.0
        %2820 = vmatprep.subr.mxu0 0.0
        %2821 = vmatpush1.msra.mxu0 0.0
        %2822 = vmatprep.subr.mxu0 0.0
        %2823 = vmatpush1.msra.mxu0 0.0
        %2824 = vmatprep.subr.mxu0 0.0
        %2825 = vmatpush1.msra.mxu0 0.0
        %2826 = vmatprep.subr.mxu0 0.0
        %2827 = vmatpush1.msra.mxu0 0.0
        %2828 = vmatprep.subr.mxu0 0.0
        %2829 = vmatpush1.msra.mxu0 0.0
        %2830 = vmatprep.subr.mxu0 0.0
        %2831 = vmatpush1.msra.mxu0 0.0
        %2832 = vmatprep.subr.mxu0 0.0
        %2833 = vmatpush1.msra.mxu0 0.0
        %2834 = vmatprep.mubr.f32.mxu0 0.0
        %2835 = vmatmul.mubr.f32.gmra.mrb[0].mxu0 %v2768
        %v2836 = vpop.f32.mrb[0].mxu0
        %v2837 = vadd.f32 0.0, %v2836
        %v2838 = vpop.f32.mrb[0].mxu0
        %v2839 = vadd.f32 0.0, %v2838
        %2840 = vdwg.mxu0
        %v2841 = vadd.f32 %v2755, %v2837
        %v2842 = vadd.f32 %v2756, %v2839
        %2843 = vrot.lane.b32.xlu0 %v2251, 112
        %v2844 = vpop.permute.xlu0 %2843
        %2845 = vrot.lane.b32.xlu0 %v2252, 112
        %v2846 = vpop.permute.xlu0 %2845
        %v2847 = vsel %vm1857, %v2844, %v2846
        %v2848 = vsel %vm1857, %v2846, %v2844
        %v2849 = vmul.f32 %v2847, %v1863
        %v2850 = vmul.f32 %v2848, %v1867
        %s2851 = scalar_lea.vmem %s5, 28
        %v2852 = vld [vmem:[%s2851] sm:$0xf]
        %v2854 = vsel %vm2272, %v2852, 0
        %2856 = vmatprep.subr.mxu0 %v2850
        %2857 = vmatpush1.msra.mxu0 %v2849
        %2858 = vmatprep.subr.mxu0 0.0
        %2859 = vmatpush1.msra.mxu0 0.0
        %2860 = vmatprep.subr.mxu0 0.0
        %2861 = vmatpush1.msra.mxu0 0.0
        %2862 = vmatprep.subr.mxu0 0.0
        %2863 = vmatpush1.msra.mxu0 0.0
        %2864 = vmatprep.subr.mxu0 0.0
        %2865 = vmatpush1.msra.mxu0 0.0
        %2866 = vmatprep.subr.mxu0 0.0
        %2867 = vmatpush1.msra.mxu0 0.0
        %2868 = vmatprep.subr.mxu0 0.0
        %2869 = vmatpush1.msra.mxu0 0.0
        %2870 = vmatprep.subr.mxu0 0.0
        %2871 = vmatpush1.msra.mxu0 0.0
        %2872 = vmatprep.subr.mxu0 0.0
        %2873 = vmatpush1.msra.mxu0 0.0
        %2874 = vmatprep.subr.mxu0 0.0
        %2875 = vmatpush1.msra.mxu0 0.0
        %2876 = vmatprep.subr.mxu0 0.0
        %2877 = vmatpush1.msra.mxu0 0.0
        %2878 = vmatprep.subr.mxu0 0.0
        %2879 = vmatpush1.msra.mxu0 0.0
        %2880 = vmatprep.subr.mxu0 0.0
        %2881 = vmatpush1.msra.mxu0 0.0
        %2882 = vmatprep.subr.mxu0 0.0
        %2883 = vmatpush1.msra.mxu0 0.0
        %2884 = vmatprep.subr.mxu0 0.0
        %2885 = vmatpush1.msra.mxu0 0.0
        %2886 = vmatprep.subr.mxu0 0.0
        %2887 = vmatpush1.msra.mxu0 0.0
        %2888 = vmatprep.subr.mxu0 0.0
        %2889 = vmatpush1.msra.mxu0 0.0
        %2890 = vmatprep.subr.mxu0 0.0
        %2891 = vmatpush1.msra.mxu0 0.0
        %2892 = vmatprep.subr.mxu0 0.0
        %2893 = vmatpush1.msra.mxu0 0.0
        %2894 = vmatprep.subr.mxu0 0.0
        %2895 = vmatpush1.msra.mxu0 0.0
        %2896 = vmatprep.subr.mxu0 0.0
        %2897 = vmatpush1.msra.mxu0 0.0
        %2898 = vmatprep.subr.mxu0 0.0
        %2899 = vmatpush1.msra.mxu0 0.0
        %2900 = vmatprep.subr.mxu0 0.0
        %2901 = vmatpush1.msra.mxu0 0.0
        %2902 = vmatprep.subr.mxu0 0.0
        %2903 = vmatpush1.msra.mxu0 0.0
        %2904 = vmatprep.subr.mxu0 0.0
        %2905 = vmatpush1.msra.mxu0 0.0
        %2906 = vmatprep.subr.mxu0 0.0
        %2907 = vmatpush1.msra.mxu0 0.0
        %2908 = vmatprep.subr.mxu0 0.0
        %2909 = vmatpush1.msra.mxu0 0.0
        %2910 = vmatprep.subr.mxu0 0.0
        %2911 = vmatpush1.msra.mxu0 0.0
        %2912 = vmatprep.subr.mxu0 0.0
        %2913 = vmatpush1.msra.mxu0 0.0
        %2914 = vmatprep.subr.mxu0 0.0
        %2915 = vmatpush1.msra.mxu0 0.0
        %2916 = vmatprep.subr.mxu0 0.0
        %2917 = vmatpush1.msra.mxu0 0.0
        %2918 = vmatprep.subr.mxu0 0.0
        %2919 = vmatpush1.msra.mxu0 0.0
        %2920 = vmatprep.mubr.f32.mxu0 0.0
        %2921 = vmatmul.mubr.f32.gmra.mrb[0].mxu0 %v2854
        %v2922 = vpop.f32.mrb[0].mxu0
        %v2923 = vadd.f32 0.0, %v2922
        %v2924 = vpop.f32.mrb[0].mxu0
        %v2925 = vadd.f32 0.0, %v2924
        %2926 = vdwg.mxu0
        %v2927 = vadd.f32 %v2841, %v2923
        %v2928 = vadd.f32 %v2842, %v2925
        %2929 = vrot.lane.b32.xlu0 %v2251, 111
        %v2930 = vpop.permute.xlu0 %2929
        %2931 = vrot.lane.b32.xlu0 %v2252, 111
        %v2932 = vpop.permute.xlu0 %2931
        %v2933 = vsel %vm2048, %v2930, %v2932
        %v2934 = vsel %vm2048, %v2932, %v2930
        %v2935 = vmul.f32 %v2933, %v2054
        %v2936 = vmul.f32 %v2934, %v2058
        %s2937 = scalar_lea.vmem %s5, 32
        %v2938 = vld [vmem:[%s2937] sm:$0xf]
        %v2940 = vsel %vm2272, %v2938, 0
        %2942 = vmatprep.subr.mxu0 %v2936
        %2943 = vmatpush1.msra.mxu0 %v2935
        %2944 = vmatprep.subr.mxu0 0.0
        %2945 = vmatpush1.msra.mxu0 0.0
        %2946 = vmatprep.subr.mxu0 0.0
        %2947 = vmatpush1.msra.mxu0 0.0
        %2948 = vmatprep.subr.mxu0 0.0
        %2949 = vmatpush1.msra.mxu0 0.0
        %2950 = vmatprep.subr.mxu0 0.0
        %2951 = vmatpush1.msra.mxu0 0.0
        %2952 = vmatprep.subr.mxu0 0.0
        %2953 = vmatpush1.msra.mxu0 0.0
        %2954 = vmatprep.subr.mxu0 0.0
        %2955 = vmatpush1.msra.mxu0 0.0
        %2956 = vmatprep.subr.mxu0 0.0
        %2957 = vmatpush1.msra.mxu0 0.0
        %2958 = vmatprep.subr.mxu0 0.0
        %2959 = vmatpush1.msra.mxu0 0.0
        %2960 = vmatprep.subr.mxu0 0.0
        %2961 = vmatpush1.msra.mxu0 0.0
        %2962 = vmatprep.subr.mxu0 0.0
        %2963 = vmatpush1.msra.mxu0 0.0
        %2964 = vmatprep.subr.mxu0 0.0
        %2965 = vmatpush1.msra.mxu0 0.0
        %2966 = vmatprep.subr.mxu0 0.0
        %2967 = vmatpush1.msra.mxu0 0.0
        %2968 = vmatprep.subr.mxu0 0.0
        %2969 = vmatpush1.msra.mxu0 0.0
        %2970 = vmatprep.subr.mxu0 0.0
        %2971 = vmatpush1.msra.mxu0 0.0
        %2972 = vmatprep.subr.mxu0 0.0
        %2973 = vmatpush1.msra.mxu0 0.0
        %2974 = vmatprep.subr.mxu0 0.0
        %2975 = vmatpush1.msra.mxu0 0.0
        %2976 = vmatprep.subr.mxu0 0.0
        %2977 = vmatpush1.msra.mxu0 0.0
        %2978 = vmatprep.subr.mxu0 0.0
        %2979 = vmatpush1.msra.mxu0 0.0
        %2980 = vmatprep.subr.mxu0 0.0
        %2981 = vmatpush1.msra.mxu0 0.0
        %2982 = vmatprep.subr.mxu0 0.0
        %2983 = vmatpush1.msra.mxu0 0.0
        %2984 = vmatprep.subr.mxu0 0.0
        %2985 = vmatpush1.msra.mxu0 0.0
        %2986 = vmatprep.subr.mxu0 0.0
        %2987 = vmatpush1.msra.mxu0 0.0
        %2988 = vmatprep.subr.mxu0 0.0
        %2989 = vmatpush1.msra.mxu0 0.0
        %2990 = vmatprep.subr.mxu0 0.0
        %2991 = vmatpush1.msra.mxu0 0.0
        %2992 = vmatprep.subr.mxu0 0.0
        %2993 = vmatpush1.msra.mxu0 0.0
        %2994 = vmatprep.subr.mxu0 0.0
        %2995 = vmatpush1.msra.mxu0 0.0
        %2996 = vmatprep.subr.mxu0 0.0
        %2997 = vmatpush1.msra.mxu0 0.0
        %2998 = vmatprep.subr.mxu0 0.0
        %2999 = vmatpush1.msra.mxu0 0.0
        %3000 = vmatprep.subr.mxu0 0.0
        %3001 = vmatpush1.msra.mxu0 0.0
        %3002 = vmatprep.subr.mxu0 0.0
        %3003 = vmatpush1.msra.mxu0 0.0
        %3004 = vmatprep.subr.mxu0 0.0
        %3005 = vmatpush1.msra.mxu0 0.0
        %3006 = vmatprep.mubr.f32.mxu0 0.0
        %3007 = vmatmul.mubr.f32.gmra.mrb[0].mxu0 %v2940
        %v3008 = vpop.f32.mrb[0].mxu0
        %v3009 = vadd.f32 0.0, %v3008
        %v3010 = vpop.f32.mrb[0].mxu0
        %v3011 = vadd.f32 0.0, %v3010
        %3012 = vdwg.mxu0
        %v3013 = vadd.f32 %v2927, %v3009
        %v3014 = vadd.f32 %v2928, %v3011
        %v3015 = vld [vmem:[%s9] sm:$0xf]
        %3017 = vset.pattern.permute.xlu0 0
        %3018 = vperm.xlu0 %3017, %v3015
        %v3019 = vpop.permute.xlu0 %3018
        %v3021 = vadd.f32 %v3013, %v3019
        %v3022 = vadd.f32 %v3014, %v3019
        %v3023 = vld [vmem:[%s10] sm:$0x1]
        %v3025 = vsel %vm574, %v3023, 0
        %v3028 = vsel %vm578, %v3021, 0
        %v3031 = vsel %vm578, %v3022, 0
        %3033 = vmatprep.subr.mxu0 %v3031
        %3034 = vmatpush1.msra.mxu0 %v3028
        %3035 = vmatprep.subr.mxu0 0.0
        %3036 = vmatpush1.msra.mxu0 0.0
        %3037 = vmatprep.subr.mxu0 0.0
        %3038 = vmatpush1.msra.mxu0 0.0
        %3039 = vmatprep.subr.mxu0 0.0
        %3040 = vmatpush1.msra.mxu0 0.0
        %3041 = vmatprep.subr.mxu0 0.0
        %3042 = vmatpush1.msra.mxu0 0.0
        %3043 = vmatprep.subr.mxu0 0.0
        %3044 = vmatpush1.msra.mxu0 0.0
        %3045 = vmatprep.subr.mxu0 0.0
        %3046 = vmatpush1.msra.mxu0 0.0
        %3047 = vmatprep.subr.mxu0 0.0
        %3048 = vmatpush1.msra.mxu0 0.0
        %3049 = vmatprep.subr.mxu0 0.0
        %3050 = vmatpush1.msra.mxu0 0.0
        %3051 = vmatprep.subr.mxu0 0.0
        %3052 = vmatpush1.msra.mxu0 0.0
        %3053 = vmatprep.subr.mxu0 0.0
        %3054 = vmatpush1.msra.mxu0 0.0
        %3055 = vmatprep.subr.mxu0 0.0
        %3056 = vmatpush1.msra.mxu0 0.0
        %3057 = vmatprep.subr.mxu0 0.0
        %3058 = vmatpush1.msra.mxu0 0.0
        %3059 = vmatprep.subr.mxu0 0.0
        %3060 = vmatpush1.msra.mxu0 0.0
        %3061 = vmatprep.subr.mxu0 0.0
        %3062 = vmatpush1.msra.mxu0 0.0
        %3063 = vmatprep.subr.mxu0 0.0
        %3064 = vmatpush1.msra.mxu0 0.0
        %3065 = vmatprep.subr.mxu0 0.0
        %3066 = vmatpush1.msra.mxu0 0.0
        %3067 = vmatprep.subr.mxu0 0.0
        %3068 = vmatpush1.msra.mxu0 0.0
        %3069 = vmatprep.subr.mxu0 0.0
        %3070 = vmatpush1.msra.mxu0 0.0
        %3071 = vmatprep.subr.mxu0 0.0
        %3072 = vmatpush1.msra.mxu0 0.0
        %3073 = vmatprep.subr.mxu0 0.0
        %3074 = vmatpush1.msra.mxu0 0.0
        %3075 = vmatprep.subr.mxu0 0.0
        %3076 = vmatpush1.msra.mxu0 0.0
        %3077 = vmatprep.subr.mxu0 0.0
        %3078 = vmatpush1.msra.mxu0 0.0
        %3079 = vmatprep.subr.mxu0 0.0
        %3080 = vmatpush1.msra.mxu0 0.0
        %3081 = vmatprep.subr.mxu0 0.0
        %3082 = vmatpush1.msra.mxu0 0.0
        %3083 = vmatprep.subr.mxu0 0.0
        %3084 = vmatpush1.msra.mxu0 0.0
        %3085 = vmatprep.subr.mxu0 0.0
        %3086 = vmatpush1.msra.mxu0 0.0
        %3087 = vmatprep.subr.mxu0 0.0
        %3088 = vmatpush1.msra.mxu0 0.0
        %3089 = vmatprep.subr.mxu0 0.0
        %3090 = vmatpush1.msra.mxu0 0.0
        %3091 = vmatprep.subr.mxu0 0.0
        %3092 = vmatpush1.msra.mxu0 0.0
        %3093 = vmatprep.subr.mxu0 0.0
        %3094 = vmatpush1.msra.mxu0 0.0
        %3095 = vmatprep.subr.mxu0 0.0
        %3096 = vmatpush1.msra.mxu0 0.0
        %3097 = vmatprep.mubr.f32.mxu0 0.0
        %3098 = vmatmul.mubr.f32.gmra.mrb[0].mxu0 %v3025
        %v3099 = vpop.f32.mrb[0].mxu0
        %v3100 = vadd.f32 0.0, %v3099
        %v3101 = vpop.f32.mrb[0].mxu0
        %v3102 = vadd.f32 0.0, %v3101
        %3103 = vdwg.mxu0
        %vm3104 = vcmask 1040384
        %v3105 = vsel %vm3104, %v3100, -inf
        %v3106 = vsel %vm3104, %v3102, -inf
        %v3107 = vmax.f32 %v3105, %v3106
        %3108 = vmax.xlane.f32.xlu0 %v3107
        %v3109 = vpop.xlane.xlu0 %3108
        %v3110 = vsub.f32 %v3100, %v3109
        %v3111 = vsub.f32 %v3102, %v3109
        %v3112 = vmul.f32 %v3110, 1.442695
        %v3113 = vpow.pop %v3112
        %v3114 = vmul.f32 %v3111, 1.442695
        %v3115 = vpow.pop %v3114
        %v3116 = vsel %vm3104, %v3113, 0.0
        %v3117 = vsel %vm3104, %v3115, 0.0
        %v3118 = vadd.f32 %v3116, %v3117
        %3119 = vadd.xlane.f32.xlu0 %v3118
        %v3120 = vpop.xlane.xlu0 %3119
        %v3121 = vlaneseq
        %v3122 = vshrl.u32 %v3121, 7
        %v3123 = vsub.s32 0, %v3122
        %v3124 = vrot.slane %v3113, %v3123
        %v3125 = vlaneseq
        %v3126 = vshrl.u32 %v3125, 7
        %v3127 = vsub.s32 0, %v3126
        %v3128 = vrot.slane %v3115, %v3127
        %v3129 = vmul.f32 %v3021, %v3124
        %v3130 = vmul.f32 %v3022, %v3128
        %v3131 = vsel %vm578, %v3129, 0.0
        %v3132 = vsel %vm578, %v3130, 0.0
        %v3133 = vadd.f32 %v3131, %v3132
        %3134 = vadd.xlane.f32.xlu0 %v3133
        %v3135 = vpop.xlane.xlu0 %3134
        %v3136 = vrcp.pop %v3120
        %v3137 = vmul.f32 1.0, %v3136
        %v3138 = vlaneseq
        %v3139 = vshrl.u32 %v3138, 7
        %v3140 = vsub.s32 0, %v3139
        %v3141 = vrot.slane %v3137, %v3140
        %v3142 = vmul.f32 %v3135, %v3141
        %v3143 = vld [vmem:[%s11] sm:$0xf]
        %v3145 = vsel %vm574, %v3143, 0
        %v3148 = vsel %vm578, %v3142, 0
        %3150 = vmatprep.subr.mxu0 0.0
        %3151 = vmatpush1.msra.mxu0 %v3148
        %3152 = vmatprep.subr.mxu0 0.0
        %3153 = vmatpush1.msra.mxu0 0.0
        %3154 = vmatprep.subr.mxu0 0.0
        %3155 = vmatpush1.msra.mxu0 0.0
        %3156 = vmatprep.subr.mxu0 0.0
        %3157 = vmatpush1.msra.mxu0 0.0
        %3158 = vmatprep.subr.mxu0 0.0
        %3159 = vmatpush1.msra.mxu0 0.0
        %3160 = vmatprep.subr.mxu0 0.0
        %3161 = vmatpush1.msra.mxu0 0.0
        %3162 = vmatprep.subr.mxu0 0.0
        %3163 = vmatpush1.msra.mxu0 0.0
        %3164 = vmatprep.subr.mxu0 0.0
        %3165 = vmatpush1.msra.mxu0 0.0
        %3166 = vmatprep.subr.mxu0 0.0
        %3167 = vmatpush1.msra.mxu0 0.0
        %3168 = vmatprep.subr.mxu0 0.0
        %3169 = vmatpush1.msra.mxu0 0.0
        %3170 = vmatprep.subr.mxu0 0.0
        %3171 = vmatpush1.msra.mxu0 0.0
        %3172 = vmatprep.subr.mxu0 0.0
        %3173 = vmatpush1.msra.mxu0 0.0
        %3174 = vmatprep.subr.mxu0 0.0
        %3175 = vmatpush1.msra.mxu0 0.0
        %3176 = vmatprep.subr.mxu0 0.0
        %3177 = vmatpush1.msra.mxu0 0.0
        %3178 = vmatprep.subr.mxu0 0.0
        %3179 = vmatpush1.msra.mxu0 0.0
        %3180 = vmatprep.subr.mxu0 0.0
        %3181 = vmatpush1.msra.mxu0 0.0
        %3182 = vmatprep.subr.mxu0 0.0
        %3183 = vmatpush1.msra.mxu0 0.0
        %3184 = vmatprep.subr.mxu0 0.0
        %3185 = vmatpush1.msra.mxu0 0.0
        %3186 = vmatprep.subr.mxu0 0.0
        %3187 = vmatpush1.msra.mxu0 0.0
        %3188 = vmatprep.subr.mxu0 0.0
        %3189 = vmatpush1.msra.mxu0 0.0
        %3190 = vmatprep.subr.mxu0 0.0
        %3191 = vmatpush1.msra.mxu0 0.0
        %3192 = vmatprep.subr.mxu0 0.0
        %3193 = vmatpush1.msra.mxu0 0.0
        %3194 = vmatprep.subr.mxu0 0.0
        %3195 = vmatpush1.msra.mxu0 0.0
        %3196 = vmatprep.subr.mxu0 0.0
        %3197 = vmatpush1.msra.mxu0 0.0
        %3198 = vmatprep.subr.mxu0 0.0
        %3199 = vmatpush1.msra.mxu0 0.0
        %3200 = vmatprep.subr.mxu0 0.0
        %3201 = vmatpush1.msra.mxu0 0.0
        %3202 = vmatprep.subr.mxu0 0.0
        %3203 = vmatpush1.msra.mxu0 0.0
        %3204 = vmatprep.subr.mxu0 0.0
        %3205 = vmatpush1.msra.mxu0 0.0
        %3206 = vmatprep.subr.mxu0 0.0
        %3207 = vmatpush1.msra.mxu0 0.0
        %3208 = vmatprep.subr.mxu0 0.0
        %3209 = vmatpush1.msra.mxu0 0.0
        %3210 = vmatprep.subr.mxu0 0.0
        %3211 = vmatpush1.msra.mxu0 0.0
        %3212 = vmatprep.subr.mxu0 0.0
        %3213 = vmatpush1.msra.mxu0 0.0
        %3214 = vmatprep.mubr.f32.mxu0 0.0
        %3215 = vmatmul.mubr.f32.gmra.mrb[0].mxu0 %v3145
        %v3216 = vpop.f32.mrb[0].mxu0
        %v3217 = vadd.f32 0.0, %v3216
        %v3218 = vpop.f32.mrb[0].mxu0
        %3219 = vdwg.mxu0
        %vm3220 = vcmask 3072
        %v3221 = vsel %vm3220, %v3217, 0.0
        %v3222 = vrot.slane %v3221, 4
        %v3223 = vadd.f32 %v3221, %v3222
        %v3224 = vrot.slane %v3223, 2
        %v3225 = vadd.f32 %v3223, %v3224
        %v3226 = vrot.slane %v3225, 1
        %v3227 = vadd.f32 %v3225, %v3226
        %v3228 = vrcp.pop 4.0
        %v3229 = vmul.f32 %v3227, %v3228
        %v3230 = vsub.f32 %v3217, %v3229
        %v3231 = vmul.f32 %v3230, %v3230
        %v3232 = vsel %vm3220, %v3231, 0.0
        %v3233 = vrot.slane %v3232, 4
        %v3234 = vadd.f32 %v3232, %v3233
        %v3235 = vrot.slane %v3234, 2
        %v3236 = vadd.f32 %v3234, %v3235
        %v3237 = vrot.slane %v3236, 1
        %v3238 = vadd.f32 %v3236, %v3237
        %v3239 = vmul.f32 %v3238, %v3228
        %v3240 = vadd.f32 %v3239, 1e-05
        %v3241 = vrsqrt.pop %v3240
        %v3242 = vmul.f32 %v3240, %v3241
        %vm3243 = vcmp.eq.f32.partialorder %v3240, inf
        %v3244 = vsel %vm3243, %v3240, %v3242
        %vm3245 = vcmp.eq.f32.partialorder %v3240, 0.0
        %v3246 = vand.u32 %v3240, 2147483648
        %v3247 = vsel %vm3245, %v3246, %v3244
        %v3248 = vrcp.pop %v3247
        %v3249 = vmul.f32 1.0, %v3248
        %v3250 = vmul.f32 %v3230, %v3249
        %v3251 = vld [vmem:[%s12] sm:$0xf]
        %v3252 = vmul.f32 %v3250, %v3251
        %v3253 = vld [vmem:[%s13] sm:$0xf]
        %v3254 = vadd.f32 %v3252, %v3253
        %v3255 = vmax.f32 %v3254, 0.0
        %v3256 = vld [vmem:[%s14] sm:$0xf]
        %v3258 = vsel %vm574, %v3256, 0
        %v3261 = vsel %vm578, %v3255, 0
        %3263 = vmatprep.subr.mxu0 0.0
        %3264 = vmatpush1.msra.mxu0 %v3261
        %3265 = vmatprep.subr.mxu0 0.0
        %3266 = vmatpush1.msra.mxu0 0.0
        %3267 = vmatprep.subr.mxu0 0.0
        %3268 = vmatpush1.msra.mxu0 0.0
        %3269 = vmatprep.subr.mxu0 0.0
        %3270 = vmatpush1.msra.mxu0 0.0
        %3271 = vmatprep.subr.mxu0 0.0
        %3272 = vmatpush1.msra.mxu0 0.0
        %3273 = vmatprep.subr.mxu0 0.0
        %3274 = vmatpush1.msra.mxu0 0.0
        %3275 = vmatprep.subr.mxu0 0.0
        %3276 = vmatpush1.msra.mxu0 0.0
        %3277 = vmatprep.subr.mxu0 0.0
        %3278 = vmatpush1.msra.mxu0 0.0
        %3279 = vmatprep.subr.mxu0 0.0
        %3280 = vmatpush1.msra.mxu0 0.0
        %3281 = vmatprep.subr.mxu0 0.0
        %3282 = vmatpush1.msra.mxu0 0.0
        %3283 = vmatprep.subr.mxu0 0.0
        %3284 = vmatpush1.msra.mxu0 0.0
        %3285 = vmatprep.subr.mxu0 0.0
        %3286 = vmatpush1.msra.mxu0 0.0
        %3287 = vmatprep.subr.mxu0 0.0
        %3288 = vmatpush1.msra.mxu0 0.0
        %3289 = vmatprep.subr.mxu0 0.0
        %3290 = vmatpush1.msra.mxu0 0.0
        %3291 = vmatprep.subr.mxu0 0.0
        %3292 = vmatpush1.msra.mxu0 0.0
        %3293 = vmatprep.subr.mxu0 0.0
        %3294 = vmatpush1.msra.mxu0 0.0
        %3295 = vmatprep.subr.mxu0 0.0
        %3296 = vmatpush1.msra.mxu0 0.0
        %3297 = vmatprep.subr.mxu0 0.0
        %3298 = vmatpush1.msra.mxu0 0.0
        %3299 = vmatprep.subr.mxu0 0.0
        %3300 = vmatpush1.msra.mxu0 0.0
        %3301 = vmatprep.subr.mxu0 0.0
        %3302 = vmatpush1.msra.mxu0 0.0
        %3303 = vmatprep.subr.mxu0 0.0
        %3304 = vmatpush1.msra.mxu0 0.0
        %3305 = vmatprep.subr.mxu0 0.0
        %3306 = vmatpush1.msra.mxu0 0.0
        %3307 = vmatprep.subr.mxu0 0.0
        %3308 = vmatpush1.msra.mxu0 0.0
        %3309 = vmatprep.subr.mxu0 0.0
        %3310 = vmatpush1.msra.mxu0 0.0
        %3311 = vmatprep.subr.mxu0 0.0
        %3312 = vmatpush1.msra.mxu0 0.0
        %3313 = vmatprep.subr.mxu0 0.0
        %3314 = vmatpush1.msra.mxu0 0.0
        %3315 = vmatprep.subr.mxu0 0.0
        %3316 = vmatpush1.msra.mxu0 0.0
        %3317 = vmatprep.subr.mxu0 0.0
        %3318 = vmatpush1.msra.mxu0 0.0
        %3319 = vmatprep.subr.mxu0 0.0
        %3320 = vmatpush1.msra.mxu0 0.0
        %3321 = vmatprep.subr.mxu0 0.0
        %3322 = vmatpush1.msra.mxu0 0.0
        %3323 = vmatprep.subr.mxu0 0.0
        %3324 = vmatpush1.msra.mxu0 0.0
        %3325 = vmatprep.subr.mxu0 0.0
        %3326 = vmatpush1.msra.mxu0 0.0
        %3327 = vmatprep.mubr.f32.mxu0 0.0
        %3328 = vmatmul.mubr.f32.gmra.mrb[0].mxu0 %v3258
        %v3329 = vpop.f32.mrb[0].mxu0
        %v3330 = vadd.f32 0.0, %v3329
        %v3331 = vpop.f32.mrb[0].mxu0
        %3332 = vdwg.mxu0
        %v3333 = vxor.u32 %v3330, 2147483648
        %v3334 = vmul.f32 %v3333, 1.442695
        %v3335 = vpow.pop %v3334
        %v3336 = vadd.f32 %v3335, 1.0
        %v3337 = vrcp.pop %v3336
        %v3338 = vmul.f32 1.0, %v3337
        %v3339 = vld [vmem:[%s532] sm:$0xff]
        %3341 = vset.pattern.permute.xlu0 0
        %3342 = vperm.xlu0 %3341, %v3338
        %v3343 = vpop.permute.xlu0 %3342
        %v3345 = vmul.f32 %v3021, %v3343
        %v3346 = vmul.f32 %v3022, %v3343
        %v3347 = vxor.u32 %v3345, 2147483648
        %v3348 = vxor.u32 %v3346, 2147483648
        %v3349 = vmul.f32 %v3347, 1.442695
        %v3350 = vpow.pop %v3349
        %v3351 = vmul.f32 %v3348, 1.442695
        %v3352 = vpow.pop %v3351
        %v3353 = vadd.f32 %v3350, 1.0
        %v3354 = vadd.f32 %v3352, 1.0
        %v3355 = vrcp.pop %v3353
        %v3356 = vmul.f32 1.0, %v3355
        %v3357 = vrcp.pop %v3354
        %v3358 = vmul.f32 1.0, %v3357
        %v3361 = vcombine.low %v3356, %v3358
        %v3363 = vmul.f32 %v3339, %v3361
        %v3364 = vxor.u32 %v3363, 2147483648
        %v3365 = vmul.f32 %v3364, 1.442695
        %v3366 = vpow.pop %v3365
        %v3367 = vadd.f32 %v3366, 1.0
        %v3368 = vrcp.pop %v3367
        %v3369 = vmul.f32 1.0, %v3368
        %3370 = vst [vmem:[%s517] sm:$0xff] %v3369
        %s3371 = sand.u32 %s367, 1
        %s3372 = scalar_lea.sflag [#allocation3], %s3371
        %s3373 = sand.u32 %s367, 1
        %s3374 = smul.addr %s3373, 8
        %s3375 = scalar_lea.vmem [#allocation2], %s3374
        // Predicated region
        $region81: #{tpu_custom_call.1} parent=79 // pred_check
          %p3376 = pneg %p377
        $region82: #{tpu_custom_call.1} parent=79 // pred_check_branch
          %3378 = sbr.rel (%p3376) target = $region84
        $region83: #{tpu_custom_call.1} parent=79 // pred_region
          %s3380 = ssub.s32 128, 128
          %3381 = vsyncadd %s3372, %s3380
          %s3382 = smul.addr %s29, 2
          %s3383 = smul.addr %s3382, 64
          %s3384 = scalar_lea.hbm %s15, %s3383
          %s3386 = sshll.u32 %s3375, 4
          %s3387 = int_to_ptr.vmem [resolvable:$true] %s3386
          %3389 = dma.vmem_to_hbm [thread:$0]  %s3387, 128, %s3384, %s3372
        $region84: #{tpu_custom_call.1} parent=79 // pred_fallthru
          _
      $region80: #{tpu_custom_call.1} parent=5 // pred_fallthru
        _
      %p3390 = scmp.le.s32.totalorder 2, %s24
      // Predicated region
      $region85: #{tpu_custom_call.1} parent=5 // pred_check
        %p3391 = pneg %p3390
      $region86: #{tpu_custom_call.1} parent=5 // pred_check_branch
        %3393 = sbr.rel (%p3391) target = $region88
      $region87: #{tpu_custom_call.1} parent=5 // pred_region
        %s3394 = ssub.s32 %s24, 2
        // Predicated region
        $region89: #{tpu_custom_call.1} parent=87 // pred_check
          %p3395 = pneg %p383
        $region90: #{tpu_custom_call.1} parent=87 // pred_check_branch
          %3397 = sbr.rel (%p3395) target = $region92
        $region91: #{tpu_custom_call.1} parent=87 // pred_region
          %s3398 = sand.u32 %s368, 1
          %s3399 = scalar_lea.sflag [#allocation3], %s3398
          %s3400 = sand.u32 %s368, 1
          %s3401 = smul.addr %s3400, 8
          %s3402 = scalar_lea.vmem [#allocation2], %s3401
          %3403 = dma.done %s3399, 128
        $region92: #{tpu_custom_call.1} parent=87 // pred_fallthru
          _
      $region88: #{tpu_custom_call.1} parent=5 // pred_fallthru
        _
    $region6: #{tpu_custom_call.1} parent=1 // loop_footer
      %s28 = sadd.s32 1, %s24
    $region7: #{tpu_custom_call.1} parent=1 // loop_footer_branch
      %23 = sbr.rel target = $region3
    $region8: #{tpu_custom_call.1} parent=1 // loop_exit
      _
    %3404 = vsyncpa [#allocation3], 1
    %s3405 = scalar_lea.sflag [#allocation3], 1
    %3406 = vsyncpa %s3405, 1

</llo_original>
